<compile_context>
chip_gen: v7x
topology: tpu7x:2x2x1
jax: 0.10.0
libtpu: 0.0.40
codegen_flags: <defaults>
</compile_context>

<pallas_src>
import functools

import jax
import jax.numpy as jnp
from jax import lax
from jax.experimental import pallas as pl
from jax.experimental.pallas import tpu as pltpu


# ------------------------------ in-kernel math ------------------------------


def _layernorm(x, g, b, eps=1e-5):
    """LayerNorm over last dim (torch semantics, eps inside rsqrt). f32 math."""
    mu = jnp.mean(x, axis=-1, keepdims=True)
    xc = x - mu
    var = jnp.mean(xc * xc, axis=-1, keepdims=True)
    return xc * lax.rsqrt(var + eps) * g + b


def _mha(q, k, v, wo_ref, nhead):
    """Multi-head softmax attention on (L,E)/(S,E) slabs with the output
    projection fused into the per-head loop (accumulated (L,dh)x(dh,E)
    matmuls -> no lane-offset concatenate of head outputs).  The 1/sqrt(dh)
    scale is pre-folded into q.  Returns (L,E) f32; output bias NOT added."""
    L, E = q.shape
    dh = E // nhead
    out = jnp.zeros((L, E), jnp.float32)
    for h in range(nhead):
        sl = slice(h * dh, (h + 1) * dh)
        qh = q[:, sl].astype(jnp.bfloat16)
        kh = k[:, sl].astype(jnp.bfloat16)
        vh = v[:, sl].astype(jnp.bfloat16)
        # contract head-dim directly: avoids materializing k^T (frees XLU slot)
        s = lax.dot_general(qh, kh, (((1,), (1,)), ((), ())),
                            preferred_element_type=jnp.float32)          # (L, S)
        s = s - jnp.max(s, axis=-1, keepdims=True)
        p = jnp.exp(s)
        p = p * pl.reciprocal(jnp.sum(p, axis=-1, keepdims=True), approx=True)
        oh = jnp.dot(p.astype(jnp.bfloat16), vh,
                     preferred_element_type=jnp.float32)                 # (L, dh)
        out = out + jnp.dot(oh.astype(jnp.bfloat16), wo_ref[h],
                            preferred_element_type=jnp.float32)          # (L, E)
    return out


def _encoder_layer_kernel(embed_ref, latent_ref,
                          sa_wqkv_ref, sa_bqkv_ref, sa_wo_ref, sa_bo_ref,
                          ln0_g_ref, ln0_b_ref,
                          ca_wq_ref, ca_bq_ref, ca_wkv_ref, ca_bkv_ref,
                          ca_wo_ref, ca_bo_ref,
                          ln1_g_ref, ln1_b_ref,
                          w1_ref, b1_ref, w2_ref, b2_ref,
                          ln2_g_ref, ln2_b_ref,
                          out_ref, *, nhead):
    E = latent_ref.shape[-1]
    x = latent_ref[0].astype(jnp.float32)   # (L, E)  latent for this batch elt
    e = embed_ref[0].astype(jnp.float32)    # (L, E)  embed  for this batch elt

    # ---------------- self-attention + residual + norm0 ----------------
    qkv = jnp.dot(x.astype(jnp.bfloat16), sa_wqkv_ref[...],
                  preferred_element_type=jnp.float32) + sa_bqkv_ref[...]  # (L,3E)
    o = _mha(qkv[:, :E], qkv[:, E:2 * E], qkv[:, 2 * E:],
             sa_wo_ref, nhead) + sa_bo_ref[...]
    x = _layernorm(x + o, ln0_g_ref[...], ln0_b_ref[...])

    # -------- cross-attention (q=embed, k/v=latent) + residual + norm1 --------
    q = jnp.dot(e.astype(jnp.bfloat16), ca_wq_ref[...],
                preferred_element_type=jnp.float32) + ca_bq_ref[...]      # (L,E)
    kv = jnp.dot(x.astype(jnp.bfloat16), ca_wkv_ref[...],
                 preferred_element_type=jnp.float32) + ca_bkv_ref[...]    # (L,2E)
    o = _mha(q, kv[:, :E], kv[:, E:], ca_wo_ref, nhead) + ca_bo_ref[...]
    x = _layernorm(x + o, ln1_g_ref[...], ln1_b_ref[...])

    # ---------------- feed-forward (relu) + residual + norm2 ----------------
    h = jnp.dot(x.astype(jnp.bfloat16), w1_ref[...],
                preferred_element_type=jnp.float32) + b1_ref[...]         # (L,F)
    h = jnp.maximum(h, 0.0)
    f = jnp.dot(h.astype(jnp.bfloat16), w2_ref[...],
                preferred_element_type=jnp.float32) + b2_ref[...]         # (L,E)
    x = _layernorm(x + f, ln2_g_ref[...], ln2_b_ref[...])

    out_ref[0] = x.astype(out_ref.dtype)


# ------------------------------ host wrapper --------------------------------


def encoder_layer_forward(embed, latent, params, *, nhead):
    """EncoderLayer.forward(embed, latent) — insertCausalSelfAttn=False path.
    embed/latent: (L, N, E) sequence-first (PyTorch MHA default layout)."""
    L, N, E = latent.shape
    dh = E // nhead
    F = params["b1"].shape[-1]

    # batch-first so the grid can shard batch across TensorCores (v7x megacore)
    embed_b = jnp.transpose(embed, (1, 0, 2))    # (N, L, E)
    latent_b = jnp.transpose(latent, (1, 0, 2))  # (N, L, E)

    weight_args = (
        params["sa_wqkv_T"], params["sa_bqkv"], params["sa_wo_h"], params["sa_bo"],
        params["ln0_g"], params["ln0_b"],
        params["ca_wq_T"], params["ca_bq"], params["ca_wkv_T"], params["ca_bkv"],
        params["ca_wo_h"], params["ca_bo"],
        params["ln1_g"], params["ln1_b"],
        params["w1_T"], params["b1"], params["w2_T"], params["b2"],
        params["ln2_g"], params["ln2_b"],
    )

    act_spec = pl.BlockSpec((1, L, E), lambda n: (n, 0, 0))

    def _const_spec(a):
        nd = a.ndim
        return pl.BlockSpec(a.shape, lambda n, _nd=nd: (0,) * _nd)

    w_specs = [_const_spec(a) for a in weight_args]

    # advisory cost estimate (per batch element)
    flops_b = (2 * L * E * (3 * E) + 2 * L * E * E            # self qkv + out proj
               + 2 * nhead * L * L * dh * 2                   # self attn scores + pv
               + 2 * L * E * E + 2 * L * E * (2 * E)          # cross q + kv proj
               + 2 * L * E * E + 2 * nhead * L * L * dh * 2   # cross out proj + attn
               + 2 * L * E * F + 2 * L * F * E)               # ffn
    bytes_accessed = (embed_b.size * embed_b.dtype.itemsize
                      + latent_b.size * latent_b.dtype.itemsize
                      + sum(int(a.size) * a.dtype.itemsize for a in weight_args)
                      + N * L * E * 4)

    out_b = pl.pallas_call(
        functools.partial(_encoder_layer_kernel, nhead=nhead),
        out_shape=jax.ShapeDtypeStruct((N, L, E), latent.dtype),
        grid=(N,),
        in_specs=[act_spec, act_spec] + w_specs,
        out_specs=act_spec,
        compiler_params=pltpu.CompilerParams(
            dimension_semantics=("parallel",),
            vmem_limit_bytes=32 * 1024 * 1024,
        ),
        cost_estimate=pl.CostEstimate(
            flops=int(N * flops_b),
            transcendentals=int(2 * N * nhead * L * L),
            bytes_accessed=int(bytes_accessed),
        ),
    )(embed_b, latent_b, *weight_args)

    return jnp.transpose(out_b, (1, 0, 2))      # back to (L, N, E)


# ------------------------------- param prep ---------------------------------


def prep_params(raw, nhead):
    """One-time transform of PyTorch-layout params (w: (out,in), b: (out,)) into
    kernel layout: pre-transposed (in,out) bf16 weights, stacked QKV / KV,
    attention output projection split per-head to (nhead, dh, E), attention
    scale folded into the Q projection, 2-D f32 biases / LN params."""
    E = raw["norm0_g"].shape[0]
    assert E % nhead == 0, "d_model must be divisible by nhead"
    dh = E // nhead
    scale = 1.0 / float(dh) ** 0.5

    def wT(w):                               # (out,in) -> (in,out), bf16 for MXU
        return jnp.asarray(w, jnp.float32).T.astype(jnp.bfloat16)

    def wo_heads(w):                         # (out,in) -> (nhead, dh, out)
        return wT(w).reshape(nhead, dh, E)

    def row(b):
        return jnp.asarray(b, jnp.float32).reshape(1, -1)

    sa, ca = raw["self_attn"], raw["cross_attn"]
    return dict(
        sa_wqkv_T=jnp.concatenate([wT(sa["wq"] * scale), wT(sa["wk"]), wT(sa["wv"])], axis=1),
        sa_bqkv=jnp.concatenate([row(sa["bq"] * scale), row(sa["bk"]), row(sa["bv"])], axis=1),
        sa_wo_h=wo_heads(sa["wo"]), sa_bo=row(sa["bo"]),
        ln0_g=row(raw["norm0_g"]), ln0_b=row(raw["norm0_b"]),
        ca_wq_T=wT(ca["wq"] * scale), ca_bq=row(ca["bq"] * scale),
        ca_wkv_T=jnp.concatenate([wT(ca["wk"]), wT(ca["wv"])], axis=1),
        ca_bkv=jnp.concatenate([row(ca["bk"]), row(ca["bv"])], axis=1),
        ca_wo_h=wo_heads(ca["wo"]), ca_bo=row(ca["bo"]),
        ln1_g=row(raw["norm1_g"]), ln1_b=row(raw["norm1_b"]),
        w1_T=wT(raw["linear1_w"]), b1=row(raw["linear1_b"]),
        w2_T=wT(raw["linear2_w"]), b2=row(raw["linear2_b"]),
        ln2_g=row(raw["norm2_g"]), ln2_b=row(raw["norm2_b"]),
    )


def init_raw_params(key, d_model, nhead, dim_feedforward):
    ks = iter(jax.random.split(key, 16))

    def w(k, dout, din):
        return jax.random.normal(k, (dout, din), jnp.float32) * 0.05

    def attn(k0):
        k = jax.random.split(k0, 8)
        return dict(
            wq=w(k[0], d_model, d_model), bq=jax.random.normal(k[1], (d_model,)) * 0.02,
            wk=w(k[2], d_model, d_model), bk=jax.random.normal(k[3], (d_model,)) * 0.02,
            wv=w(k[4], d_model, d_model), bv=jax.random.normal(k[5], (d_model,)) * 0.02,
            wo=w(k[6], d_model, d_model), bo=jax.random.normal(k[7], (d_model,)) * 0.02,
        )

    return dict(
        self_attn=attn(next(ks)),
        cross_attn=attn(next(ks)),
        linear1_w=w(next(ks), dim_feedforward, d_model),
        linear1_b=jax.random.normal(next(ks), (dim_feedforward,)) * 0.02,
        linear2_w=w(next(ks), d_model, dim_feedforward),
        linear2_b=jax.random.normal(next(ks), (d_model,)) * 0.02,
        norm0_g=jnp.ones((d_model,), jnp.float32), norm0_b=jnp.zeros((d_model,), jnp.float32),
        norm1_g=jnp.ones((d_model,), jnp.float32), norm1_b=jnp.zeros((d_model,), jnp.float32),
        norm2_g=jnp.ones((d_model,), jnp.float32), norm2_b=jnp.zeros((d_model,), jnp.float32),
    )


# ----------------------------------- main ------------------------------------


if __name__ == "__main__":
    d_model, nhead, dim_feedforward = 32, 4, 64
    L, N = 8, 2  # seq length, batch (sequence-first layout at the interface)

    key = jax.random.PRNGKey(0)
    k_embed, k_latent, k_params = jax.random.split(key, 3)
    embed = jax.random.normal(k_embed, (L, N, d_model), jnp.float32)
    latent = jax.random.normal(k_latent, (L, N, d_model), jnp.float32)

    raw = init_raw_params(k_params, d_model, nhead, dim_feedforward)
    params = prep_params(raw, nhead)   # one-time: transpose, stack, fold scale, bf16

    fwd = jax.jit(encoder_layer_forward, static_argnames=("nhead",))
    out = fwd(embed, latent, params, nhead=nhead)
    out = jax.block_until_ready(out)

    assert out.shape == (L, N, d_model), out.shape
    assert bool(jnp.all(jnp.isfinite(out)))
    print("KERNEL_OK")
</pallas_src>

<mosaic_0001>
module attributes {stable_mosaic.version = 11 : i64} {
  func.func @_encoder_layer_kernel(%arg0: i32, %arg1: memref<1x8x32xf32, #tpu.memory_space<vmem>>, %arg2: memref<1x8x32xf32, #tpu.memory_space<vmem>>, %arg3: memref<32x96xbf16, #tpu.memory_space<vmem>>, %arg4: memref<1x96xf32, #tpu.memory_space<vmem>>, %arg5: memref<4x8x32xbf16, #tpu.memory_space<vmem>>, %arg6: memref<1x32xf32, #tpu.memory_space<vmem>>, %arg7: memref<1x32xf32, #tpu.memory_space<vmem>>, %arg8: memref<1x32xf32, #tpu.memory_space<vmem>>, %arg9: memref<32x32xbf16, #tpu.memory_space<vmem>>, %arg10: memref<1x32xf32, #tpu.memory_space<vmem>>, %arg11: memref<32x64xbf16, #tpu.memory_space<vmem>>, %arg12: memref<1x64xf32, #tpu.memory_space<vmem>>, %arg13: memref<4x8x32xbf16, #tpu.memory_space<vmem>>, %arg14: memref<1x32xf32, #tpu.memory_space<vmem>>, %arg15: memref<1x32xf32, #tpu.memory_space<vmem>>, %arg16: memref<1x32xf32, #tpu.memory_space<vmem>>, %arg17: memref<32x64xbf16, #tpu.memory_space<vmem>>, %arg18: memref<1x64xf32, #tpu.memory_space<vmem>>, %arg19: memref<64x32xbf16, #tpu.memory_space<vmem>>, %arg20: memref<1x32xf32, #tpu.memory_space<vmem>>, %arg21: memref<1x32xf32, #tpu.memory_space<vmem>>, %arg22: memref<1x32xf32, #tpu.memory_space<vmem>>, %arg23: memref<1x8x32xf32, #tpu.memory_space<vmem>>) attributes {dimension_semantics = [#tpu.dimension_semantics<parallel>], iteration_bounds = array<i64: 2>, scalar_prefetch = 0 : i64, scratch_operands = 0 : i64, tpu.core_type = #tpu.core_type<tc>, window_params = [{transform_indices = @transform_0, window_bounds = array<i64: 1, 8, 32>}, {transform_indices = @transform_1, window_bounds = array<i64: 1, 8, 32>}, {pipeline_mode = #tpu.pipeline_mode<synchronous>, transform_indices = @transform_2, window_bounds = array<i64: 32, 96>}, {pipeline_mode = #tpu.pipeline_mode<synchronous>, transform_indices = @transform_3, window_bounds = array<i64: 1, 96>}, {pipeline_mode = #tpu.pipeline_mode<synchronous>, transform_indices = @transform_4, window_bounds = array<i64: 4, 8, 32>}, {pipeline_mode = #tpu.pipeline_mode<synchronous>, transform_indices = @transform_5, window_bounds = array<i64: 1, 32>}, {pipeline_mode = #tpu.pipeline_mode<synchronous>, transform_indices = @transform_6, window_bounds = array<i64: 1, 32>}, {pipeline_mode = #tpu.pipeline_mode<synchronous>, transform_indices = @transform_7, window_bounds = array<i64: 1, 32>}, {pipeline_mode = #tpu.pipeline_mode<synchronous>, transform_indices = @transform_8, window_bounds = array<i64: 32, 32>}, {pipeline_mode = #tpu.pipeline_mode<synchronous>, transform_indices = @transform_9, window_bounds = array<i64: 1, 32>}, {pipeline_mode = #tpu.pipeline_mode<synchronous>, transform_indices = @transform_10, window_bounds = array<i64: 32, 64>}, {pipeline_mode = #tpu.pipeline_mode<synchronous>, transform_indices = @transform_11, window_bounds = array<i64: 1, 64>}, {pipeline_mode = #tpu.pipeline_mode<synchronous>, transform_indices = @transform_12, window_bounds = array<i64: 4, 8, 32>}, {pipeline_mode = #tpu.pipeline_mode<synchronous>, transform_indices = @transform_13, window_bounds = array<i64: 1, 32>}, {pipeline_mode = #tpu.pipeline_mode<synchronous>, transform_indices = @transform_14, window_bounds = array<i64: 1, 32>}, {pipeline_mode = #tpu.pipeline_mode<synchronous>, transform_indices = @transform_15, window_bounds = array<i64: 1, 32>}, {pipeline_mode = #tpu.pipeline_mode<synchronous>, transform_indices = @transform_16, window_bounds = array<i64: 32, 64>}, {pipeline_mode = #tpu.pipeline_mode<synchronous>, transform_indices = @transform_17, window_bounds = array<i64: 1, 64>}, {pipeline_mode = #tpu.pipeline_mode<synchronous>, transform_indices = @transform_18, window_bounds = array<i64: 64, 32>}, {pipeline_mode = #tpu.pipeline_mode<synchronous>, transform_indices = @transform_19, window_bounds = array<i64: 1, 32>}, {pipeline_mode = #tpu.pipeline_mode<synchronous>, transform_indices = @transform_20, window_bounds = array<i64: 1, 32>}, {pipeline_mode = #tpu.pipeline_mode<synchronous>, transform_indices = @transform_21, window_bounds = array<i64: 1, 32>}, {transform_indices = @transform_22, window_bounds = array<i64: 1, 8, 32>}]} {
    %c0 = arith.constant 0 : index
    %c0_0 = arith.constant 0 : index
    %c0_1 = arith.constant 0 : index
    %0 = vector.load %arg2[%c0, %c0_0, %c0_1] : memref<1x8x32xf32, #tpu.memory_space<vmem>>, vector<1x8x32xf32>
    %1 = vector.shape_cast %0 : vector<1x8x32xf32> to vector<8x32xf32>
    %c0_2 = arith.constant 0 : index
    %c0_3 = arith.constant 0 : index
    %c0_4 = arith.constant 0 : index
    %2 = vector.load %arg1[%c0_2, %c0_3, %c0_4] : memref<1x8x32xf32, #tpu.memory_space<vmem>>, vector<1x8x32xf32>
    %3 = vector.shape_cast %2 : vector<1x8x32xf32> to vector<8x32xf32>
    %4 = arith.truncf %1 : vector<8x32xf32> to vector<8x32xbf16>
    %c0_5 = arith.constant 0 : index
    %c0_6 = arith.constant 0 : index
    %5 = vector.load %arg3[%c0_5, %c0_6] : memref<32x96xbf16, #tpu.memory_space<vmem>>, vector<32x96xbf16>
    %cst = arith.constant dense<0.000000e+00> : vector<8x96xf32>
    %6 = tpu.matmul %4, %5, %cst {dimension_numbers = #tpu.dot_dimension_numbers<[1], [0], [0], [1], [0, 0, 1, 1], [], []>} : vector<8x32xbf16>, vector<32x96xbf16>, vector<8x96xf32> -> vector<8x96xf32>
    %c0_7 = arith.constant 0 : index
    %c0_8 = arith.constant 0 : index
    %7 = vector.load %arg4[%c0_7, %c0_8] : memref<1x96xf32, #tpu.memory_space<vmem>>, vector<1x96xf32>
    %8 = vector.broadcast %7 : vector<1x96xf32> to vector<8x96xf32>
    %9 = arith.addf %6, %8 : vector<8x96xf32>
    %10 = vector.extract_strided_slice %9 {offsets = [0, 0], sizes = [8, 32], strides = [1, 1]} : vector<8x96xf32> to vector<8x32xf32>
    %11 = vector.extract_strided_slice %9 {offsets = [0, 32], sizes = [8, 32], strides = [1, 1]} : vector<8x96xf32> to vector<8x32xf32>
    %12 = vector.extract_strided_slice %9 {offsets = [0, 64], sizes = [8, 32], strides = [1, 1]} : vector<8x96xf32> to vector<8x32xf32>
    %cst_9 = arith.constant 0.000000e+00 : f32
    %13 = vector.broadcast %cst_9 : f32 to vector<8x32xf32>
    %14 = vector.extract_strided_slice %10 {offsets = [0, 0], sizes = [8, 8], strides = [1, 1]} : vector<8x32xf32> to vector<8x8xf32>
    %15 = arith.truncf %14 : vector<8x8xf32> to vector<8x8xbf16>
    %16 = vector.extract_strided_slice %11 {offsets = [0, 0], sizes = [8, 8], strides = [1, 1]} : vector<8x32xf32> to vector<8x8xf32>
    %17 = arith.truncf %16 : vector<8x8xf32> to vector<8x8xbf16>
    %18 = vector.extract_strided_slice %12 {offsets = [0, 0], sizes = [8, 8], strides = [1, 1]} : vector<8x32xf32> to vector<8x8xf32>
    %19 = arith.truncf %18 : vector<8x8xf32> to vector<8x8xbf16>
    %cst_10 = arith.constant dense<0.000000e+00> : vector<8x8xf32>
    %20 = tpu.matmul %15, %17, %cst_10 {dimension_numbers = #tpu.dot_dimension_numbers<[1], [1], [0], [0], [0, 0, 1, 0], [], []>} : vector<8x8xbf16>, vector<8x8xbf16>, vector<8x8xf32> -> vector<8x8xf32>
    %cst_11 = arith.constant dense<0xFF800000> : vector<8xf32>
    %21 = vector.multi_reduction <maximumf>, %20, %cst_11 [1] : vector<8x8xf32> to vector<8xf32>
    %22 = vector.shape_cast %21 : vector<8xf32> to vector<8x1xf32>
    %23 = vector.broadcast %22 : vector<8x1xf32> to vector<8x8xf32>
    %24 = arith.subf %20, %23 : vector<8x8xf32>
    %25 = math.exp %24 : vector<8x8xf32>
    %cst_12 = arith.constant dense<0.000000e+00> : vector<8xf32>
    %26 = vector.multi_reduction <add>, %25, %cst_12 [1] : vector<8x8xf32> to vector<8xf32>
    %27 = vector.shape_cast %26 : vector<8xf32> to vector<8x1xf32>
    %28 = tpu.reciprocal %27 {approx = true} : vector<8x1xf32> -> vector<8x1xf32>
    %29 = vector.broadcast %28 : vector<8x1xf32> to vector<8x8xf32>
    %30 = arith.mulf %25, %29 : vector<8x8xf32>
    %31 = arith.truncf %30 : vector<8x8xf32> to vector<8x8xbf16>
    %cst_13 = arith.constant dense<0.000000e+00> : vector<8x8xf32>
    %32 = tpu.matmul %31, %19, %cst_13 {dimension_numbers = #tpu.dot_dimension_numbers<[1], [0], [0], [1], [0, 0, 1, 1], [], []>} : vector<8x8xbf16>, vector<8x8xbf16>, vector<8x8xf32> -> vector<8x8xf32>
    %33 = arith.truncf %32 : vector<8x8xf32> to vector<8x8xbf16>
    %c0_14 = arith.constant 0 : index
    %c0_15 = arith.constant 0 : index
    %c0_16 = arith.constant 0 : index
    %34 = vector.load %arg5[%c0_14, %c0_15, %c0_16] : memref<4x8x32xbf16, #tpu.memory_space<vmem>>, vector<1x8x32xbf16>
    %35 = vector.shape_cast %34 : vector<1x8x32xbf16> to vector<8x32xbf16>
    %cst_17 = arith.constant dense<0.000000e+00> : vector<8x32xf32>
    %36 = tpu.matmul %33, %35, %cst_17 {dimension_numbers = #tpu.dot_dimension_numbers<[1], [0], [0], [1], [0, 0, 1, 1], [], []>} : vector<8x8xbf16>, vector<8x32xbf16>, vector<8x32xf32> -> vector<8x32xf32>
    %37 = arith.addf %13, %36 : vector<8x32xf32>
    %38 = vector.extract_strided_slice %10 {offsets = [0, 8], sizes = [8, 8], strides = [1, 1]} : vector<8x32xf32> to vector<8x8xf32>
    %39 = arith.truncf %38 : vector<8x8xf32> to vector<8x8xbf16>
    %40 = vector.extract_strided_slice %11 {offsets = [0, 8], sizes = [8, 8], strides = [1, 1]} : vector<8x32xf32> to vector<8x8xf32>
    %41 = arith.truncf %40 : vector<8x8xf32> to vector<8x8xbf16>
    %42 = vector.extract_strided_slice %12 {offsets = [0, 8], sizes = [8, 8], strides = [1, 1]} : vector<8x32xf32> to vector<8x8xf32>
    %43 = arith.truncf %42 : vector<8x8xf32> to vector<8x8xbf16>
    %cst_18 = arith.constant dense<0.000000e+00> : vector<8x8xf32>
    %44 = tpu.matmul %39, %41, %cst_18 {dimension_numbers = #tpu.dot_dimension_numbers<[1], [1], [0], [0], [0, 0, 1, 0], [], []>} : vector<8x8xbf16>, vector<8x8xbf16>, vector<8x8xf32> -> vector<8x8xf32>
    %cst_19 = arith.constant dense<0xFF800000> : vector<8xf32>
    %45 = vector.multi_reduction <maximumf>, %44, %cst_19 [1] : vector<8x8xf32> to vector<8xf32>
    %46 = vector.shape_cast %45 : vector<8xf32> to vector<8x1xf32>
    %47 = vector.broadcast %46 : vector<8x1xf32> to vector<8x8xf32>
    %48 = arith.subf %44, %47 : vector<8x8xf32>
    %49 = math.exp %48 : vector<8x8xf32>
    %cst_20 = arith.constant dense<0.000000e+00> : vector<8xf32>
    %50 = vector.multi_reduction <add>, %49, %cst_20 [1] : vector<8x8xf32> to vector<8xf32>
    %51 = vector.shape_cast %50 : vector<8xf32> to vector<8x1xf32>
    %52 = tpu.reciprocal %51 {approx = true} : vector<8x1xf32> -> vector<8x1xf32>
    %53 = vector.broadcast %52 : vector<8x1xf32> to vector<8x8xf32>
    %54 = arith.mulf %49, %53 : vector<8x8xf32>
    %55 = arith.truncf %54 : vector<8x8xf32> to vector<8x8xbf16>
    %cst_21 = arith.constant dense<0.000000e+00> : vector<8x8xf32>
    %56 = tpu.matmul %55, %43, %cst_21 {dimension_numbers = #tpu.dot_dimension_numbers<[1], [0], [0], [1], [0, 0, 1, 1], [], []>} : vector<8x8xbf16>, vector<8x8xbf16>, vector<8x8xf32> -> vector<8x8xf32>
    %57 = arith.truncf %56 : vector<8x8xf32> to vector<8x8xbf16>
    %c1 = arith.constant 1 : index
    %c0_22 = arith.constant 0 : index
    %c0_23 = arith.constant 0 : index
    %58 = vector.load %arg5[%c1, %c0_22, %c0_23] : memref<4x8x32xbf16, #tpu.memory_space<vmem>>, vector<1x8x32xbf16>
    %59 = vector.shape_cast %58 : vector<1x8x32xbf16> to vector<8x32xbf16>
    %cst_24 = arith.constant dense<0.000000e+00> : vector<8x32xf32>
    %60 = tpu.matmul %57, %59, %cst_24 {dimension_numbers = #tpu.dot_dimension_numbers<[1], [0], [0], [1], [0, 0, 1, 1], [], []>} : vector<8x8xbf16>, vector<8x32xbf16>, vector<8x32xf32> -> vector<8x32xf32>
    %61 = arith.addf %37, %60 : vector<8x32xf32>
    %62 = vector.extract_strided_slice %10 {offsets = [0, 16], sizes = [8, 8], strides = [1, 1]} : vector<8x32xf32> to vector<8x8xf32>
    %63 = arith.truncf %62 : vector<8x8xf32> to vector<8x8xbf16>
    %64 = vector.extract_strided_slice %11 {offsets = [0, 16], sizes = [8, 8], strides = [1, 1]} : vector<8x32xf32> to vector<8x8xf32>
    %65 = arith.truncf %64 : vector<8x8xf32> to vector<8x8xbf16>
    %66 = vector.extract_strided_slice %12 {offsets = [0, 16], sizes = [8, 8], strides = [1, 1]} : vector<8x32xf32> to vector<8x8xf32>
    %67 = arith.truncf %66 : vector<8x8xf32> to vector<8x8xbf16>
    %cst_25 = arith.constant dense<0.000000e+00> : vector<8x8xf32>
    %68 = tpu.matmul %63, %65, %cst_25 {dimension_numbers = #tpu.dot_dimension_numbers<[1], [1], [0], [0], [0, 0, 1, 0], [], []>} : vector<8x8xbf16>, vector<8x8xbf16>, vector<8x8xf32> -> vector<8x8xf32>
    %cst_26 = arith.constant dense<0xFF800000> : vector<8xf32>
    %69 = vector.multi_reduction <maximumf>, %68, %cst_26 [1] : vector<8x8xf32> to vector<8xf32>
    %70 = vector.shape_cast %69 : vector<8xf32> to vector<8x1xf32>
    %71 = vector.broadcast %70 : vector<8x1xf32> to vector<8x8xf32>
    %72 = arith.subf %68, %71 : vector<8x8xf32>
    %73 = math.exp %72 : vector<8x8xf32>
    %cst_27 = arith.constant dense<0.000000e+00> : vector<8xf32>
    %74 = vector.multi_reduction <add>, %73, %cst_27 [1] : vector<8x8xf32> to vector<8xf32>
    %75 = vector.shape_cast %74 : vector<8xf32> to vector<8x1xf32>
    %76 = tpu.reciprocal %75 {approx = true} : vector<8x1xf32> -> vector<8x1xf32>
    %77 = vector.broadcast %76 : vector<8x1xf32> to vector<8x8xf32>
    %78 = arith.mulf %73, %77 : vector<8x8xf32>
    %79 = arith.truncf %78 : vector<8x8xf32> to vector<8x8xbf16>
    %cst_28 = arith.constant dense<0.000000e+00> : vector<8x8xf32>
    %80 = tpu.matmul %79, %67, %cst_28 {dimension_numbers = #tpu.dot_dimension_numbers<[1], [0], [0], [1], [0, 0, 1, 1], [], []>} : vector<8x8xbf16>, vector<8x8xbf16>, vector<8x8xf32> -> vector<8x8xf32>
    %81 = arith.truncf %80 : vector<8x8xf32> to vector<8x8xbf16>
    %c2 = arith.constant 2 : index
    %c0_29 = arith.constant 0 : index
    %c0_30 = arith.constant 0 : index
    %82 = vector.load %arg5[%c2, %c0_29, %c0_30] : memref<4x8x32xbf16, #tpu.memory_space<vmem>>, vector<1x8x32xbf16>
    %83 = vector.shape_cast %82 : vector<1x8x32xbf16> to vector<8x32xbf16>
    %cst_31 = arith.constant dense<0.000000e+00> : vector<8x32xf32>
    %84 = tpu.matmul %81, %83, %cst_31 {dimension_numbers = #tpu.dot_dimension_numbers<[1], [0], [0], [1], [0, 0, 1, 1], [], []>} : vector<8x8xbf16>, vector<8x32xbf16>, vector<8x32xf32> -> vector<8x32xf32>
    %85 = arith.addf %61, %84 : vector<8x32xf32>
    %86 = vector.extract_strided_slice %10 {offsets = [0, 24], sizes = [8, 8], strides = [1, 1]} : vector<8x32xf32> to vector<8x8xf32>
    %87 = arith.truncf %86 : vector<8x8xf32> to vector<8x8xbf16>
    %88 = vector.extract_strided_slice %11 {offsets = [0, 24], sizes = [8, 8], strides = [1, 1]} : vector<8x32xf32> to vector<8x8xf32>
    %89 = arith.truncf %88 : vector<8x8xf32> to vector<8x8xbf16>
    %90 = vector.extract_strided_slice %12 {offsets = [0, 24], sizes = [8, 8], strides = [1, 1]} : vector<8x32xf32> to vector<8x8xf32>
    %91 = arith.truncf %90 : vector<8x8xf32> to vector<8x8xbf16>
    %cst_32 = arith.constant dense<0.000000e+00> : vector<8x8xf32>
    %92 = tpu.matmul %87, %89, %cst_32 {dimension_numbers = #tpu.dot_dimension_numbers<[1], [1], [0], [0], [0, 0, 1, 0], [], []>} : vector<8x8xbf16>, vector<8x8xbf16>, vector<8x8xf32> -> vector<8x8xf32>
    %cst_33 = arith.constant dense<0xFF800000> : vector<8xf32>
    %93 = vector.multi_reduction <maximumf>, %92, %cst_33 [1] : vector<8x8xf32> to vector<8xf32>
    %94 = vector.shape_cast %93 : vector<8xf32> to vector<8x1xf32>
    %95 = vector.broadcast %94 : vector<8x1xf32> to vector<8x8xf32>
    %96 = arith.subf %92, %95 : vector<8x8xf32>
    %97 = math.exp %96 : vector<8x8xf32>
    %cst_34 = arith.constant dense<0.000000e+00> : vector<8xf32>
    %98 = vector.multi_reduction <add>, %97, %cst_34 [1] : vector<8x8xf32> to vector<8xf32>
    %99 = vector.shape_cast %98 : vector<8xf32> to vector<8x1xf32>
    %100 = tpu.reciprocal %99 {approx = true} : vector<8x1xf32> -> vector<8x1xf32>
    %101 = vector.broadcast %100 : vector<8x1xf32> to vector<8x8xf32>
    %102 = arith.mulf %97, %101 : vector<8x8xf32>
    %103 = arith.truncf %102 : vector<8x8xf32> to vector<8x8xbf16>
    %cst_35 = arith.constant dense<0.000000e+00> : vector<8x8xf32>
    %104 = tpu.matmul %103, %91, %cst_35 {dimension_numbers = #tpu.dot_dimension_numbers<[1], [0], [0], [1], [0, 0, 1, 1], [], []>} : vector<8x8xbf16>, vector<8x8xbf16>, vector<8x8xf32> -> vector<8x8xf32>
    %105 = arith.truncf %104 : vector<8x8xf32> to vector<8x8xbf16>
    %c3 = arith.constant 3 : index
    %c0_36 = arith.constant 0 : index
    %c0_37 = arith.constant 0 : index
    %106 = vector.load %arg5[%c3, %c0_36, %c0_37] : memref<4x8x32xbf16, #tpu.memory_space<vmem>>, vector<1x8x32xbf16>
    %107 = vector.shape_cast %106 : vector<1x8x32xbf16> to vector<8x32xbf16>
    %cst_38 = arith.constant dense<0.000000e+00> : vector<8x32xf32>
    %108 = tpu.matmul %105, %107, %cst_38 {dimension_numbers = #tpu.dot_dimension_numbers<[1], [0], [0], [1], [0, 0, 1, 1], [], []>} : vector<8x8xbf16>, vector<8x32xbf16>, vector<8x32xf32> -> vector<8x32xf32>
    %109 = arith.addf %85, %108 : vector<8x32xf32>
    %c0_39 = arith.constant 0 : index
    %c0_40 = arith.constant 0 : index
    %110 = vector.load %arg6[%c0_39, %c0_40] : memref<1x32xf32, #tpu.memory_space<vmem>>, vector<1x32xf32>
    %111 = vector.broadcast %110 : vector<1x32xf32> to vector<8x32xf32>
    %112 = arith.addf %109, %111 : vector<8x32xf32>
    %113 = arith.addf %1, %112 : vector<8x32xf32>
    %c0_41 = arith.constant 0 : index
    %c0_42 = arith.constant 0 : index
    %114 = vector.load %arg7[%c0_41, %c0_42] : memref<1x32xf32, #tpu.memory_space<vmem>>, vector<1x32xf32>
    %c0_43 = arith.constant 0 : index
    %c0_44 = arith.constant 0 : index
    %115 = vector.load %arg8[%c0_43, %c0_44] : memref<1x32xf32, #tpu.memory_space<vmem>>, vector<1x32xf32>
    %cst_45 = arith.constant dense<0.000000e+00> : vector<8xf32>
    %116 = vector.multi_reduction <add>, %113, %cst_45 [1] : vector<8x32xf32> to vector<8xf32>
    %117 = vector.shape_cast %116 : vector<8xf32> to vector<8x1xf32>
    %cst_46 = arith.constant 3.200000e+01 : f32
    %118 = vector.broadcast %cst_46 : f32 to vector<8x1xf32>
    %119 = arith.divf %117, %118 : vector<8x1xf32>
    %120 = vector.broadcast %119 : vector<8x1xf32> to vector<8x32xf32>
    %121 = arith.subf %113, %120 : vector<8x32xf32>
    %122 = arith.mulf %121, %121 : vector<8x32xf32>
    %cst_47 = arith.constant dense<0.000000e+00> : vector<8xf32>
    %123 = vector.multi_reduction <add>, %122, %cst_47 [1] : vector<8x32xf32> to vector<8xf32>
    %124 = vector.shape_cast %123 : vector<8xf32> to vector<8x1xf32>
    %cst_48 = arith.constant 3.200000e+01 : f32
    %125 = vector.broadcast %cst_48 : f32 to vector<8x1xf32>
    %126 = arith.divf %124, %125 : vector<8x1xf32>
    %cst_49 = arith.constant 9.99999974E-6 : f32
    %127 = vector.broadcast %cst_49 : f32 to vector<8x1xf32>
    %128 = arith.addf %126, %127 : vector<8x1xf32>
    %129 = math.rsqrt %128 : vector<8x1xf32>
    %130 = vector.broadcast %129 : vector<8x1xf32> to vector<8x32xf32>
    %131 = arith.mulf %121, %130 : vector<8x32xf32>
    %132 = vector.broadcast %114 : vector<1x32xf32> to vector<8x32xf32>
    %133 = arith.mulf %131, %132 : vector<8x32xf32>
    %134 = vector.broadcast %115 : vector<1x32xf32> to vector<8x32xf32>
    %135 = arith.addf %133, %134 : vector<8x32xf32>
    %136 = arith.truncf %3 : vector<8x32xf32> to vector<8x32xbf16>
    %c0_50 = arith.constant 0 : index
    %c0_51 = arith.constant 0 : index
    %137 = vector.load %arg9[%c0_50, %c0_51] : memref<32x32xbf16, #tpu.memory_space<vmem>>, vector<32x32xbf16>
    %cst_52 = arith.constant dense<0.000000e+00> : vector<8x32xf32>
    %138 = tpu.matmul %136, %137, %cst_52 {dimension_numbers = #tpu.dot_dimension_numbers<[1], [0], [0], [1], [0, 0, 1, 1], [], []>} : vector<8x32xbf16>, vector<32x32xbf16>, vector<8x32xf32> -> vector<8x32xf32>
    %c0_53 = arith.constant 0 : index
    %c0_54 = arith.constant 0 : index
    %139 = vector.load %arg10[%c0_53, %c0_54] : memref<1x32xf32, #tpu.memory_space<vmem>>, vector<1x32xf32>
    %140 = vector.broadcast %139 : vector<1x32xf32> to vector<8x32xf32>
    %141 = arith.addf %138, %140 : vector<8x32xf32>
    %142 = arith.truncf %135 : vector<8x32xf32> to vector<8x32xbf16>
    %c0_55 = arith.constant 0 : index
    %c0_56 = arith.constant 0 : index
    %143 = vector.load %arg11[%c0_55, %c0_56] : memref<32x64xbf16, #tpu.memory_space<vmem>>, vector<32x64xbf16>
    %cst_57 = arith.constant dense<0.000000e+00> : vector<8x64xf32>
    %144 = tpu.matmul %142, %143, %cst_57 {dimension_numbers = #tpu.dot_dimension_numbers<[1], [0], [0], [1], [0, 0, 1, 1], [], []>} : vector<8x32xbf16>, vector<32x64xbf16>, vector<8x64xf32> -> vector<8x64xf32>
    %c0_58 = arith.constant 0 : index
    %c0_59 = arith.constant 0 : index
    %145 = vector.load %arg12[%c0_58, %c0_59] : memref<1x64xf32, #tpu.memory_space<vmem>>, vector<1x64xf32>
    %146 = vector.broadcast %145 : vector<1x64xf32> to vector<8x64xf32>
    %147 = arith.addf %144, %146 : vector<8x64xf32>
    %148 = vector.extract_strided_slice %147 {offsets = [0, 0], sizes = [8, 32], strides = [1, 1]} : vector<8x64xf32> to vector<8x32xf32>
    %149 = vector.extract_strided_slice %147 {offsets = [0, 32], sizes = [8, 32], strides = [1, 1]} : vector<8x64xf32> to vector<8x32xf32>
    %cst_60 = arith.constant 0.000000e+00 : f32
    %150 = vector.broadcast %cst_60 : f32 to vector<8x32xf32>
    %151 = vector.extract_strided_slice %141 {offsets = [0, 0], sizes = [8, 8], strides = [1, 1]} : vector<8x32xf32> to vector<8x8xf32>
    %152 = arith.truncf %151 : vector<8x8xf32> to vector<8x8xbf16>
    %153 = vector.extract_strided_slice %148 {offsets = [0, 0], sizes = [8, 8], strides = [1, 1]} : vector<8x32xf32> to vector<8x8xf32>
    %154 = arith.truncf %153 : vector<8x8xf32> to vector<8x8xbf16>
    %155 = vector.extract_strided_slice %149 {offsets = [0, 0], sizes = [8, 8], strides = [1, 1]} : vector<8x32xf32> to vector<8x8xf32>
    %156 = arith.truncf %155 : vector<8x8xf32> to vector<8x8xbf16>
    %cst_61 = arith.constant dense<0.000000e+00> : vector<8x8xf32>
    %157 = tpu.matmul %152, %154, %cst_61 {dimension_numbers = #tpu.dot_dimension_numbers<[1], [1], [0], [0], [0, 0, 1, 0], [], []>} : vector<8x8xbf16>, vector<8x8xbf16>, vector<8x8xf32> -> vector<8x8xf32>
    %cst_62 = arith.constant dense<0xFF800000> : vector<8xf32>
    %158 = vector.multi_reduction <maximumf>, %157, %cst_62 [1] : vector<8x8xf32> to vector<8xf32>
    %159 = vector.shape_cast %158 : vector<8xf32> to vector<8x1xf32>
    %160 = vector.broadcast %159 : vector<8x1xf32> to vector<8x8xf32>
    %161 = arith.subf %157, %160 : vector<8x8xf32>
    %162 = math.exp %161 : vector<8x8xf32>
    %cst_63 = arith.constant dense<0.000000e+00> : vector<8xf32>
    %163 = vector.multi_reduction <add>, %162, %cst_63 [1] : vector<8x8xf32> to vector<8xf32>
    %164 = vector.shape_cast %163 : vector<8xf32> to vector<8x1xf32>
    %165 = tpu.reciprocal %164 {approx = true} : vector<8x1xf32> -> vector<8x1xf32>
    %166 = vector.broadcast %165 : vector<8x1xf32> to vector<8x8xf32>
    %167 = arith.mulf %162, %166 : vector<8x8xf32>
    %168 = arith.truncf %167 : vector<8x8xf32> to vector<8x8xbf16>
    %cst_64 = arith.constant dense<0.000000e+00> : vector<8x8xf32>
    %169 = tpu.matmul %168, %156, %cst_64 {dimension_numbers = #tpu.dot_dimension_numbers<[1], [0], [0], [1], [0, 0, 1, 1], [], []>} : vector<8x8xbf16>, vector<8x8xbf16>, vector<8x8xf32> -> vector<8x8xf32>
    %170 = arith.truncf %169 : vector<8x8xf32> to vector<8x8xbf16>
    %c0_65 = arith.constant 0 : index
    %c0_66 = arith.constant 0 : index
    %c0_67 = arith.constant 0 : index
    %171 = vector.load %arg13[%c0_65, %c0_66, %c0_67] : memref<4x8x32xbf16, #tpu.memory_space<vmem>>, vector<1x8x32xbf16>
    %172 = vector.shape_cast %171 : vector<1x8x32xbf16> to vector<8x32xbf16>
    %cst_68 = arith.constant dense<0.000000e+00> : vector<8x32xf32>
    %173 = tpu.matmul %170, %172, %cst_68 {dimension_numbers = #tpu.dot_dimension_numbers<[1], [0], [0], [1], [0, 0, 1, 1], [], []>} : vector<8x8xbf16>, vector<8x32xbf16>, vector<8x32xf32> -> vector<8x32xf32>
    %174 = arith.addf %150, %173 : vector<8x32xf32>
    %175 = vector.extract_strided_slice %141 {offsets = [0, 8], sizes = [8, 8], strides = [1, 1]} : vector<8x32xf32> to vector<8x8xf32>
    %176 = arith.truncf %175 : vector<8x8xf32> to vector<8x8xbf16>
    %177 = vector.extract_strided_slice %148 {offsets = [0, 8], sizes = [8, 8], strides = [1, 1]} : vector<8x32xf32> to vector<8x8xf32>
    %178 = arith.truncf %177 : vector<8x8xf32> to vector<8x8xbf16>
    %179 = vector.extract_strided_slice %149 {offsets = [0, 8], sizes = [8, 8], strides = [1, 1]} : vector<8x32xf32> to vector<8x8xf32>
    %180 = arith.truncf %179 : vector<8x8xf32> to vector<8x8xbf16>
    %cst_69 = arith.constant dense<0.000000e+00> : vector<8x8xf32>
    %181 = tpu.matmul %176, %178, %cst_69 {dimension_numbers = #tpu.dot_dimension_numbers<[1], [1], [0], [0], [0, 0, 1, 0], [], []>} : vector<8x8xbf16>, vector<8x8xbf16>, vector<8x8xf32> -> vector<8x8xf32>
    %cst_70 = arith.constant dense<0xFF800000> : vector<8xf32>
    %182 = vector.multi_reduction <maximumf>, %181, %cst_70 [1] : vector<8x8xf32> to vector<8xf32>
    %183 = vector.shape_cast %182 : vector<8xf32> to vector<8x1xf32>
    %184 = vector.broadcast %183 : vector<8x1xf32> to vector<8x8xf32>
    %185 = arith.subf %181, %184 : vector<8x8xf32>
    %186 = math.exp %185 : vector<8x8xf32>
    %cst_71 = arith.constant dense<0.000000e+00> : vector<8xf32>
    %187 = vector.multi_reduction <add>, %186, %cst_71 [1] : vector<8x8xf32> to vector<8xf32>
    %188 = vector.shape_cast %187 : vector<8xf32> to vector<8x1xf32>
    %189 = tpu.reciprocal %188 {approx = true} : vector<8x1xf32> -> vector<8x1xf32>
    %190 = vector.broadcast %189 : vector<8x1xf32> to vector<8x8xf32>
    %191 = arith.mulf %186, %190 : vector<8x8xf32>
    %192 = arith.truncf %191 : vector<8x8xf32> to vector<8x8xbf16>
    %cst_72 = arith.constant dense<0.000000e+00> : vector<8x8xf32>
    %193 = tpu.matmul %192, %180, %cst_72 {dimension_numbers = #tpu.dot_dimension_numbers<[1], [0], [0], [1], [0, 0, 1, 1], [], []>} : vector<8x8xbf16>, vector<8x8xbf16>, vector<8x8xf32> -> vector<8x8xf32>
    %194 = arith.truncf %193 : vector<8x8xf32> to vector<8x8xbf16>
    %c1_73 = arith.constant 1 : index
    %c0_74 = arith.constant 0 : index
    %c0_75 = arith.constant 0 : index
    %195 = vector.load %arg13[%c1_73, %c0_74, %c0_75] : memref<4x8x32xbf16, #tpu.memory_space<vmem>>, vector<1x8x32xbf16>
    %196 = vector.shape_cast %195 : vector<1x8x32xbf16> to vector<8x32xbf16>
    %cst_76 = arith.constant dense<0.000000e+00> : vector<8x32xf32>
    %197 = tpu.matmul %194, %196, %cst_76 {dimension_numbers = #tpu.dot_dimension_numbers<[1], [0], [0], [1], [0, 0, 1, 1], [], []>} : vector<8x8xbf16>, vector<8x32xbf16>, vector<8x32xf32> -> vector<8x32xf32>
    %198 = arith.addf %174, %197 : vector<8x32xf32>
    %199 = vector.extract_strided_slice %141 {offsets = [0, 16], sizes = [8, 8], strides = [1, 1]} : vector<8x32xf32> to vector<8x8xf32>
    %200 = arith.truncf %199 : vector<8x8xf32> to vector<8x8xbf16>
    %201 = vector.extract_strided_slice %148 {offsets = [0, 16], sizes = [8, 8], strides = [1, 1]} : vector<8x32xf32> to vector<8x8xf32>
    %202 = arith.truncf %201 : vector<8x8xf32> to vector<8x8xbf16>
    %203 = vector.extract_strided_slice %149 {offsets = [0, 16], sizes = [8, 8], strides = [1, 1]} : vector<8x32xf32> to vector<8x8xf32>
    %204 = arith.truncf %203 : vector<8x8xf32> to vector<8x8xbf16>
    %cst_77 = arith.constant dense<0.000000e+00> : vector<8x8xf32>
    %205 = tpu.matmul %200, %202, %cst_77 {dimension_numbers = #tpu.dot_dimension_numbers<[1], [1], [0], [0], [0, 0, 1, 0], [], []>} : vector<8x8xbf16>, vector<8x8xbf16>, vector<8x8xf32> -> vector<8x8xf32>
    %cst_78 = arith.constant dense<0xFF800000> : vector<8xf32>
    %206 = vector.multi_reduction <maximumf>, %205, %cst_78 [1] : vector<8x8xf32> to vector<8xf32>
    %207 = vector.shape_cast %206 : vector<8xf32> to vector<8x1xf32>
    %208 = vector.broadcast %207 : vector<8x1xf32> to vector<8x8xf32>
    %209 = arith.subf %205, %208 : vector<8x8xf32>
    %210 = math.exp %209 : vector<8x8xf32>
    %cst_79 = arith.constant dense<0.000000e+00> : vector<8xf32>
    %211 = vector.multi_reduction <add>, %210, %cst_79 [1] : vector<8x8xf32> to vector<8xf32>
    %212 = vector.shape_cast %211 : vector<8xf32> to vector<8x1xf32>
    %213 = tpu.reciprocal %212 {approx = true} : vector<8x1xf32> -> vector<8x1xf32>
    %214 = vector.broadcast %213 : vector<8x1xf32> to vector<8x8xf32>
    %215 = arith.mulf %210, %214 : vector<8x8xf32>
    %216 = arith.truncf %215 : vector<8x8xf32> to vector<8x8xbf16>
    %cst_80 = arith.constant dense<0.000000e+00> : vector<8x8xf32>
    %217 = tpu.matmul %216, %204, %cst_80 {dimension_numbers = #tpu.dot_dimension_numbers<[1], [0], [0], [1], [0, 0, 1, 1], [], []>} : vector<8x8xbf16>, vector<8x8xbf16>, vector<8x8xf32> -> vector<8x8xf32>
    %218 = arith.truncf %217 : vector<8x8xf32> to vector<8x8xbf16>
    %c2_81 = arith.constant 2 : index
    %c0_82 = arith.constant 0 : index
    %c0_83 = arith.constant 0 : index
    %219 = vector.load %arg13[%c2_81, %c0_82, %c0_83] : memref<4x8x32xbf16, #tpu.memory_space<vmem>>, vector<1x8x32xbf16>
    %220 = vector.shape_cast %219 : vector<1x8x32xbf16> to vector<8x32xbf16>
    %cst_84 = arith.constant dense<0.000000e+00> : vector<8x32xf32>
    %221 = tpu.matmul %218, %220, %cst_84 {dimension_numbers = #tpu.dot_dimension_numbers<[1], [0], [0], [1], [0, 0, 1, 1], [], []>} : vector<8x8xbf16>, vector<8x32xbf16>, vector<8x32xf32> -> vector<8x32xf32>
    %222 = arith.addf %198, %221 : vector<8x32xf32>
    %223 = vector.extract_strided_slice %141 {offsets = [0, 24], sizes = [8, 8], strides = [1, 1]} : vector<8x32xf32> to vector<8x8xf32>
    %224 = arith.truncf %223 : vector<8x8xf32> to vector<8x8xbf16>
    %225 = vector.extract_strided_slice %148 {offsets = [0, 24], sizes = [8, 8], strides = [1, 1]} : vector<8x32xf32> to vector<8x8xf32>
    %226 = arith.truncf %225 : vector<8x8xf32> to vector<8x8xbf16>
    %227 = vector.extract_strided_slice %149 {offsets = [0, 24], sizes = [8, 8], strides = [1, 1]} : vector<8x32xf32> to vector<8x8xf32>
    %228 = arith.truncf %227 : vector<8x8xf32> to vector<8x8xbf16>
    %cst_85 = arith.constant dense<0.000000e+00> : vector<8x8xf32>
    %229 = tpu.matmul %224, %226, %cst_85 {dimension_numbers = #tpu.dot_dimension_numbers<[1], [1], [0], [0], [0, 0, 1, 0], [], []>} : vector<8x8xbf16>, vector<8x8xbf16>, vector<8x8xf32> -> vector<8x8xf32>
    %cst_86 = arith.constant dense<0xFF800000> : vector<8xf32>
    %230 = vector.multi_reduction <maximumf>, %229, %cst_86 [1] : vector<8x8xf32> to vector<8xf32>
    %231 = vector.shape_cast %230 : vector<8xf32> to vector<8x1xf32>
    %232 = vector.broadcast %231 : vector<8x1xf32> to vector<8x8xf32>
    %233 = arith.subf %229, %232 : vector<8x8xf32>
    %234 = math.exp %233 : vector<8x8xf32>
    %cst_87 = arith.constant dense<0.000000e+00> : vector<8xf32>
    %235 = vector.multi_reduction <add>, %234, %cst_87 [1] : vector<8x8xf32> to vector<8xf32>
    %236 = vector.shape_cast %235 : vector<8xf32> to vector<8x1xf32>
    %237 = tpu.reciprocal %236 {approx = true} : vector<8x1xf32> -> vector<8x1xf32>
    %238 = vector.broadcast %237 : vector<8x1xf32> to vector<8x8xf32>
    %239 = arith.mulf %234, %238 : vector<8x8xf32>
    %240 = arith.truncf %239 : vector<8x8xf32> to vector<8x8xbf16>
    %cst_88 = arith.constant dense<0.000000e+00> : vector<8x8xf32>
    %241 = tpu.matmul %240, %228, %cst_88 {dimension_numbers = #tpu.dot_dimension_numbers<[1], [0], [0], [1], [0, 0, 1, 1], [], []>} : vector<8x8xbf16>, vector<8x8xbf16>, vector<8x8xf32> -> vector<8x8xf32>
    %242 = arith.truncf %241 : vector<8x8xf32> to vector<8x8xbf16>
    %c3_89 = arith.constant 3 : index
    %c0_90 = arith.constant 0 : index
    %c0_91 = arith.constant 0 : index
    %243 = vector.load %arg13[%c3_89, %c0_90, %c0_91] : memref<4x8x32xbf16, #tpu.memory_space<vmem>>, vector<1x8x32xbf16>
    %244 = vector.shape_cast %243 : vector<1x8x32xbf16> to vector<8x32xbf16>
    %cst_92 = arith.constant dense<0.000000e+00> : vector<8x32xf32>
    %245 = tpu.matmul %242, %244, %cst_92 {dimension_numbers = #tpu.dot_dimension_numbers<[1], [0], [0], [1], [0, 0, 1, 1], [], []>} : vector<8x8xbf16>, vector<8x32xbf16>, vector<8x32xf32> -> vector<8x32xf32>
    %246 = arith.addf %222, %245 : vector<8x32xf32>
    %c0_93 = arith.constant 0 : index
    %c0_94 = arith.constant 0 : index
    %247 = vector.load %arg14[%c0_93, %c0_94] : memref<1x32xf32, #tpu.memory_space<vmem>>, vector<1x32xf32>
    %248 = vector.broadcast %247 : vector<1x32xf32> to vector<8x32xf32>
    %249 = arith.addf %246, %248 : vector<8x32xf32>
    %250 = arith.addf %135, %249 : vector<8x32xf32>
    %c0_95 = arith.constant 0 : index
    %c0_96 = arith.constant 0 : index
    %251 = vector.load %arg15[%c0_95, %c0_96] : memref<1x32xf32, #tpu.memory_space<vmem>>, vector<1x32xf32>
    %c0_97 = arith.constant 0 : index
    %c0_98 = arith.constant 0 : index
    %252 = vector.load %arg16[%c0_97, %c0_98] : memref<1x32xf32, #tpu.memory_space<vmem>>, vector<1x32xf32>
    %cst_99 = arith.constant dense<0.000000e+00> : vector<8xf32>
    %253 = vector.multi_reduction <add>, %250, %cst_99 [1] : vector<8x32xf32> to vector<8xf32>
    %254 = vector.shape_cast %253 : vector<8xf32> to vector<8x1xf32>
    %cst_100 = arith.constant 3.200000e+01 : f32
    %255 = vector.broadcast %cst_100 : f32 to vector<8x1xf32>
    %256 = arith.divf %254, %255 : vector<8x1xf32>
    %257 = vector.broadcast %256 : vector<8x1xf32> to vector<8x32xf32>
    %258 = arith.subf %250, %257 : vector<8x32xf32>
    %259 = arith.mulf %258, %258 : vector<8x32xf32>
    %cst_101 = arith.constant dense<0.000000e+00> : vector<8xf32>
    %260 = vector.multi_reduction <add>, %259, %cst_101 [1] : vector<8x32xf32> to vector<8xf32>
    %261 = vector.shape_cast %260 : vector<8xf32> to vector<8x1xf32>
    %cst_102 = arith.constant 3.200000e+01 : f32
    %262 = vector.broadcast %cst_102 : f32 to vector<8x1xf32>
    %263 = arith.divf %261, %262 : vector<8x1xf32>
    %cst_103 = arith.constant 9.99999974E-6 : f32
    %264 = vector.broadcast %cst_103 : f32 to vector<8x1xf32>
    %265 = arith.addf %263, %264 : vector<8x1xf32>
    %266 = math.rsqrt %265 : vector<8x1xf32>
    %267 = vector.broadcast %266 : vector<8x1xf32> to vector<8x32xf32>
    %268 = arith.mulf %258, %267 : vector<8x32xf32>
    %269 = vector.broadcast %251 : vector<1x32xf32> to vector<8x32xf32>
    %270 = arith.mulf %268, %269 : vector<8x32xf32>
    %271 = vector.broadcast %252 : vector<1x32xf32> to vector<8x32xf32>
    %272 = arith.addf %270, %271 : vector<8x32xf32>
    %273 = arith.truncf %272 : vector<8x32xf32> to vector<8x32xbf16>
    %c0_104 = arith.constant 0 : index
    %c0_105 = arith.constant 0 : index
    %274 = vector.load %arg17[%c0_104, %c0_105] : memref<32x64xbf16, #tpu.memory_space<vmem>>, vector<32x64xbf16>
    %cst_106 = arith.constant dense<0.000000e+00> : vector<8x64xf32>
    %275 = tpu.matmul %273, %274, %cst_106 {dimension_numbers = #tpu.dot_dimension_numbers<[1], [0], [0], [1], [0, 0, 1, 1], [], []>} : vector<8x32xbf16>, vector<32x64xbf16>, vector<8x64xf32> -> vector<8x64xf32>
    %c0_107 = arith.constant 0 : index
    %c0_108 = arith.constant 0 : index
    %276 = vector.load %arg18[%c0_107, %c0_108] : memref<1x64xf32, #tpu.memory_space<vmem>>, vector<1x64xf32>
    %277 = vector.broadcast %276 : vector<1x64xf32> to vector<8x64xf32>
    %278 = arith.addf %275, %277 : vector<8x64xf32>
    %cst_109 = arith.constant 0.000000e+00 : f32
    %279 = vector.broadcast %cst_109 : f32 to vector<8x64xf32>
    %280 = arith.maximumf %278, %279 : vector<8x64xf32>
    %281 = arith.truncf %280 : vector<8x64xf32> to vector<8x64xbf16>
    %c0_110 = arith.constant 0 : index
    %c0_111 = arith.constant 0 : index
    %282 = vector.load %arg19[%c0_110, %c0_111] : memref<64x32xbf16, #tpu.memory_space<vmem>>, vector<64x32xbf16>
    %cst_112 = arith.constant dense<0.000000e+00> : vector<8x32xf32>
    %283 = tpu.matmul %281, %282, %cst_112 {dimension_numbers = #tpu.dot_dimension_numbers<[1], [0], [0], [1], [0, 0, 1, 1], [], []>} : vector<8x64xbf16>, vector<64x32xbf16>, vector<8x32xf32> -> vector<8x32xf32>
    %c0_113 = arith.constant 0 : index
    %c0_114 = arith.constant 0 : index
    %284 = vector.load %arg20[%c0_113, %c0_114] : memref<1x32xf32, #tpu.memory_space<vmem>>, vector<1x32xf32>
    %285 = vector.broadcast %284 : vector<1x32xf32> to vector<8x32xf32>
    %286 = arith.addf %283, %285 : vector<8x32xf32>
    %287 = arith.addf %272, %286 : vector<8x32xf32>
    %c0_115 = arith.constant 0 : index
    %c0_116 = arith.constant 0 : index
    %288 = vector.load %arg21[%c0_115, %c0_116] : memref<1x32xf32, #tpu.memory_space<vmem>>, vector<1x32xf32>
    %c0_117 = arith.constant 0 : index
    %c0_118 = arith.constant 0 : index
    %289 = vector.load %arg22[%c0_117, %c0_118] : memref<1x32xf32, #tpu.memory_space<vmem>>, vector<1x32xf32>
    %cst_119 = arith.constant dense<0.000000e+00> : vector<8xf32>
    %290 = vector.multi_reduction <add>, %287, %cst_119 [1] : vector<8x32xf32> to vector<8xf32>
    %291 = vector.shape_cast %290 : vector<8xf32> to vector<8x1xf32>
    %cst_120 = arith.constant 3.200000e+01 : f32
    %292 = vector.broadcast %cst_120 : f32 to vector<8x1xf32>
    %293 = arith.divf %291, %292 : vector<8x1xf32>
    %294 = vector.broadcast %293 : vector<8x1xf32> to vector<8x32xf32>
    %295 = arith.subf %287, %294 : vector<8x32xf32>
    %296 = arith.mulf %295, %295 : vector<8x32xf32>
    %cst_121 = arith.constant dense<0.000000e+00> : vector<8xf32>
    %297 = vector.multi_reduction <add>, %296, %cst_121 [1] : vector<8x32xf32> to vector<8xf32>
    %298 = vector.shape_cast %297 : vector<8xf32> to vector<8x1xf32>
    %cst_122 = arith.constant 3.200000e+01 : f32
    %299 = vector.broadcast %cst_122 : f32 to vector<8x1xf32>
    %300 = arith.divf %298, %299 : vector<8x1xf32>
    %cst_123 = arith.constant 9.99999974E-6 : f32
    %301 = vector.broadcast %cst_123 : f32 to vector<8x1xf32>
    %302 = arith.addf %300, %301 : vector<8x1xf32>
    %303 = math.rsqrt %302 : vector<8x1xf32>
    %304 = vector.broadcast %303 : vector<8x1xf32> to vector<8x32xf32>
    %305 = arith.mulf %295, %304 : vector<8x32xf32>
    %306 = vector.broadcast %288 : vector<1x32xf32> to vector<8x32xf32>
    %307 = arith.mulf %305, %306 : vector<8x32xf32>
    %308 = vector.broadcast %289 : vector<1x32xf32> to vector<8x32xf32>
    %309 = arith.addf %307, %308 : vector<8x32xf32>
    %c0_124 = arith.constant 0 : index
    %c0_125 = arith.constant 0 : index
    %c0_126 = arith.constant 0 : index
    %310 = vector.load %arg23[%c0_124, %c0_125, %c0_126] : memref<1x8x32xf32, #tpu.memory_space<vmem>>, vector<1x8x32xf32>
    %311 = vector.shape_cast %310 : vector<1x8x32xf32> to vector<8x32xf32>
    %312 = vector.shape_cast %309 : vector<8x32xf32> to vector<1x8x32xf32>
    tpu.vector_store %arg23[%c0_124, %c0_125, %c0_126], %312 {strides = array<i32>} : memref<1x8x32xf32, #tpu.memory_space<vmem>>, vector<1x8x32xf32>,
    return
  }
  func.func @transform_0(%arg0: i32) -> (i32, i32, i32) {
    %c0_i32 = arith.constant 0 : i32
    %c0_i32_0 = arith.constant 0 : i32
    %c0_i32_1 = arith.constant 0 : i32
    return %arg0, %c0_i32, %c0_i32_0 : i32, i32, i32
  }
  func.func @transform_1(%arg0: i32) -> (i32, i32, i32) {
    %c0_i32 = arith.constant 0 : i32
    %c0_i32_0 = arith.constant 0 : i32
    %c0_i32_1 = arith.constant 0 : i32
    return %arg0, %c0_i32, %c0_i32_0 : i32, i32, i32
  }
  func.func @transform_2(%arg0: i32) -> (i32, i32) {
    %c0_i32 = arith.constant 0 : i32
    %c0_i32_0 = arith.constant 0 : i32
    %c0_i32_1 = arith.constant 0 : i32
    return %c0_i32, %c0_i32_0 : i32, i32
  }
  func.func @transform_3(%arg0: i32) -> (i32, i32) {
    %c0_i32 = arith.constant 0 : i32
    %c0_i32_0 = arith.constant 0 : i32
    %c0_i32_1 = arith.constant 0 : i32
    return %c0_i32, %c0_i32_0 : i32, i32
  }
  func.func @transform_4(%arg0: i32) -> (i32, i32, i32) {
    %c0_i32 = arith.constant 0 : i32
    %c0_i32_0 = arith.constant 0 : i32
    %c0_i32_1 = arith.constant 0 : i32
    %c0_i32_2 = arith.constant 0 : i32
    return %c0_i32, %c0_i32_0, %c0_i32_1 : i32, i32, i32
  }
  func.func @transform_5(%arg0: i32) -> (i32, i32) {
    %c0_i32 = arith.constant 0 : i32
    %c0_i32_0 = arith.constant 0 : i32
    %c0_i32_1 = arith.constant 0 : i32
    return %c0_i32, %c0_i32_0 : i32, i32
  }
  func.func @transform_6(%arg0: i32) -> (i32, i32) {
    %c0_i32 = arith.constant 0 : i32
    %c0_i32_0 = arith.constant 0 : i32
    %c0_i32_1 = arith.constant 0 : i32
    return %c0_i32, %c0_i32_0 : i32, i32
  }
  func.func @transform_7(%arg0: i32) -> (i32, i32) {
    %c0_i32 = arith.constant 0 : i32
    %c0_i32_0 = arith.constant 0 : i32
    %c0_i32_1 = arith.constant 0 : i32
    return %c0_i32, %c0_i32_0 : i32, i32
  }
  func.func @transform_8(%arg0: i32) -> (i32, i32) {
    %c0_i32 = arith.constant 0 : i32
    %c0_i32_0 = arith.constant 0 : i32
    %c0_i32_1 = arith.constant 0 : i32
    return %c0_i32, %c0_i32_0 : i32, i32
  }
  func.func @transform_9(%arg0: i32) -> (i32, i32) {
    %c0_i32 = arith.constant 0 : i32
    %c0_i32_0 = arith.constant 0 : i32
    %c0_i32_1 = arith.constant 0 : i32
    return %c0_i32, %c0_i32_0 : i32, i32
  }
  func.func @transform_10(%arg0: i32) -> (i32, i32) {
    %c0_i32 = arith.constant 0 : i32
    %c0_i32_0 = arith.constant 0 : i32
    %c0_i32_1 = arith.constant 0 : i32
    return %c0_i32, %c0_i32_0 : i32, i32
  }
  func.func @transform_11(%arg0: i32) -> (i32, i32) {
    %c0_i32 = arith.constant 0 : i32
    %c0_i32_0 = arith.constant 0 : i32
    %c0_i32_1 = arith.constant 0 : i32
    return %c0_i32, %c0_i32_0 : i32, i32
  }
  func.func @transform_12(%arg0: i32) -> (i32, i32, i32) {
    %c0_i32 = arith.constant 0 : i32
    %c0_i32_0 = arith.constant 0 : i32
    %c0_i32_1 = arith.constant 0 : i32
    %c0_i32_2 = arith.constant 0 : i32
    return %c0_i32, %c0_i32_0, %c0_i32_1 : i32, i32, i32
  }
  func.func @transform_13(%arg0: i32) -> (i32, i32) {
    %c0_i32 = arith.constant 0 : i32
    %c0_i32_0 = arith.constant 0 : i32
    %c0_i32_1 = arith.constant 0 : i32
    return %c0_i32, %c0_i32_0 : i32, i32
  }
  func.func @transform_14(%arg0: i32) -> (i32, i32) {
    %c0_i32 = arith.constant 0 : i32
    %c0_i32_0 = arith.constant 0 : i32
    %c0_i32_1 = arith.constant 0 : i32
    return %c0_i32, %c0_i32_0 : i32, i32
  }
  func.func @transform_15(%arg0: i32) -> (i32, i32) {
    %c0_i32 = arith.constant 0 : i32
    %c0_i32_0 = arith.constant 0 : i32
    %c0_i32_1 = arith.constant 0 : i32
    return %c0_i32, %c0_i32_0 : i32, i32
  }
  func.func @transform_16(%arg0: i32) -> (i32, i32) {
    %c0_i32 = arith.constant 0 : i32
    %c0_i32_0 = arith.constant 0 : i32
    %c0_i32_1 = arith.constant 0 : i32
    return %c0_i32, %c0_i32_0 : i32, i32
  }
  func.func @transform_17(%arg0: i32) -> (i32, i32) {
    %c0_i32 = arith.constant 0 : i32
    %c0_i32_0 = arith.constant 0 : i32
    %c0_i32_1 = arith.constant 0 : i32
    return %c0_i32, %c0_i32_0 : i32, i32
  }
  func.func @transform_18(%arg0: i32) -> (i32, i32) {
    %c0_i32 = arith.constant 0 : i32
    %c0_i32_0 = arith.constant 0 : i32
    %c0_i32_1 = arith.constant 0 : i32
    return %c0_i32, %c0_i32_0 : i32, i32
  }
  func.func @transform_19(%arg0: i32) -> (i32, i32) {
    %c0_i32 = arith.constant 0 : i32
    %c0_i32_0 = arith.constant 0 : i32
    %c0_i32_1 = arith.constant 0 : i32
    return %c0_i32, %c0_i32_0 : i32, i32
  }
  func.func @transform_20(%arg0: i32) -> (i32, i32) {
    %c0_i32 = arith.constant 0 : i32
    %c0_i32_0 = arith.constant 0 : i32
    %c0_i32_1 = arith.constant 0 : i32
    return %c0_i32, %c0_i32_0 : i32, i32
  }
  func.func @transform_21(%arg0: i32) -> (i32, i32) {
    %c0_i32 = arith.constant 0 : i32
    %c0_i32_0 = arith.constant 0 : i32
    %c0_i32_1 = arith.constant 0 : i32
    return %c0_i32, %c0_i32_0 : i32, i32
  }
  func.func @transform_22(%arg0: i32) -> (i32, i32, i32) {
    %c0_i32 = arith.constant 0 : i32
    %c0_i32_0 = arith.constant 0 : i32
    %c0_i32_1 = arith.constant 0 : i32
    return %arg0, %c0_i32, %c0_i32_0 : i32, i32, i32
  }
}

</mosaic_0001>

<llo_original>
// kernel: encoder_layer_forward.1
$region0: #{encoder_layer_forward.1}
  #allocation0 [shape = 'u32[]', space=smem, size = 0x4, offset = 0x4, fixed_abs, tag = 'smem constant byte address 0x4 - core index']
  #allocation1 [shape = 'u32[144,128]{1,0:T(1,128)}', space=vmem, size = 0x12000, scoped, tag = 'internal scratch']
  %s0 = inlined_call_operand.vmem [shape: f32[2,8,32], index: 0, kind: input, shape index: {}]
  %s1 = inlined_call_operand.vmem [shape: f32[2,8,32], index: 1, kind: input, shape index: {}]
  %s2 = inlined_call_operand.vmem [shape: bf16[32,96], index: 2, kind: input, shape index: {}]
  %s3 = inlined_call_operand.vmem [shape: f32[1,96], index: 3, kind: input, shape index: {}]
  %s4 = inlined_call_operand.vmem [shape: bf16[4,8,32], index: 4, kind: input, shape index: {}]
  %s5 = inlined_call_operand.vmem [shape: f32[1,32], index: 5, kind: input, shape index: {}]
  %s6 = inlined_call_operand.vmem [shape: f32[1,32], index: 6, kind: input, shape index: {}]
  %s7 = inlined_call_operand.vmem [shape: f32[1,32], index: 7, kind: input, shape index: {}]
  %s8 = inlined_call_operand.vmem [shape: bf16[32,32], index: 8, kind: input, shape index: {}]
  %s9 = inlined_call_operand.vmem [shape: f32[1,32], index: 9, kind: input, shape index: {}]
  %s10 = inlined_call_operand.vmem [shape: bf16[32,64], index: 10, kind: input, shape index: {}]
  %s11 = inlined_call_operand.vmem [shape: f32[1,64], index: 11, kind: input, shape index: {}]
  %s12 = inlined_call_operand.vmem [shape: bf16[4,8,32], index: 12, kind: input, shape index: {}]
  %s13 = inlined_call_operand.vmem [shape: f32[1,32], index: 13, kind: input, shape index: {}]
  %s14 = inlined_call_operand.vmem [shape: f32[1,32], index: 14, kind: input, shape index: {}]
  %s15 = inlined_call_operand.vmem [shape: f32[1,32], index: 15, kind: input, shape index: {}]
  %s16 = inlined_call_operand.vmem [shape: bf16[32,64], index: 16, kind: input, shape index: {}]
  %s17 = inlined_call_operand.vmem [shape: f32[1,64], index: 17, kind: input, shape index: {}]
  %s18 = inlined_call_operand.vmem [shape: bf16[64,32], index: 18, kind: input, shape index: {}]
  %s19 = inlined_call_operand.vmem [shape: f32[1,32], index: 19, kind: input, shape index: {}]
  %s20 = inlined_call_operand.vmem [shape: f32[1,32], index: 20, kind: input, shape index: {}]
  %s21 = inlined_call_operand.vmem [shape: f32[1,32], index: 21, kind: input, shape index: {}]
  %s22 = inlined_call_operand.vmem [shape: f32[2,8,32], index: 22, kind: output, shape index: {}]
  %s23 = sld [smem:[#allocation0]]
  $region121: #{encoder_layer_forward.1} parent=0
    _
  %s25 = ssub.s32 1, %s23
  %s26 = scalar_select 0, %s25, %s23
  loop: start=0, step=1, limit=4
  $region2: #{encoder_layer_forward.1} parent=0 // loop_pre_header
    _
  $region3: #{encoder_layer_forward.1} parent=0 // loop_header
    %s28 = sphi 0, %s32
    %p29 = scmp.ge.s32.totalorder %s28, 4
    %s38 = sphi 0, %s40
    %s41 = sphi 0, %s38
    %s42 = sphi 0, %s41
    %s58 = sphi 0, %s42
    %s64 = sphi 0, %s66
    %s67 = sphi 0, %s64
    %s68 = sphi 0, %s67
    %s84 = sphi 0, %s68
    %s88 = sphi 0, %s88
    %s90 = sphi 0, %s88
    %s91 = sphi 0, %s90
    %s105 = sphi 0, %s91
    %s109 = sphi 0, %s109
    %s111 = sphi 0, %s109
    %s112 = sphi 0, %s111
    %s126 = sphi 0, %s112
    %s130 = sphi 0, %s130
    %s132 = sphi 0, %s130
    %s133 = sphi 0, %s132
    %s147 = sphi 0, %s133
    %s151 = sphi 0, %s151
    %s153 = sphi 0, %s151
    %s154 = sphi 0, %s153
    %s168 = sphi 0, %s154
    %s172 = sphi 0, %s172
    %s174 = sphi 0, %s172
    %s175 = sphi 0, %s174
    %s189 = sphi 0, %s175
    %s193 = sphi 0, %s193
    %s195 = sphi 0, %s193
    %s196 = sphi 0, %s195
    %s210 = sphi 0, %s196
    %s214 = sphi 0, %s214
    %s216 = sphi 0, %s214
    %s217 = sphi 0, %s216
    %s231 = sphi 0, %s217
    %s235 = sphi 0, %s235
    %s237 = sphi 0, %s235
    %s238 = sphi 0, %s237
    %s252 = sphi 0, %s238
    %s256 = sphi 0, %s256
    %s258 = sphi 0, %s256
    %s259 = sphi 0, %s258
    %s273 = sphi 0, %s259
    %s277 = sphi 0, %s277
    %s279 = sphi 0, %s277
    %s280 = sphi 0, %s279
    %s294 = sphi 0, %s280
    %s298 = sphi 0, %s298
    %s300 = sphi 0, %s298
    %s301 = sphi 0, %s300
    %s315 = sphi 0, %s301
    %s319 = sphi 0, %s319
    %s321 = sphi 0, %s319
    %s322 = sphi 0, %s321
    %s336 = sphi 0, %s322
    %s340 = sphi 0, %s340
    %s342 = sphi 0, %s340
    %s343 = sphi 0, %s342
    %s357 = sphi 0, %s343
    %s361 = sphi 0, %s361
    %s363 = sphi 0, %s361
    %s364 = sphi 0, %s363
    %s378 = sphi 0, %s364
    %s382 = sphi 0, %s382
    %s384 = sphi 0, %s382
    %s385 = sphi 0, %s384
    %s399 = sphi 0, %s385
    %s403 = sphi 0, %s403
    %s405 = sphi 0, %s403
    %s406 = sphi 0, %s405
    %s420 = sphi 0, %s406
    %s424 = sphi 0, %s424
    %s426 = sphi 0, %s424
    %s427 = sphi 0, %s426
    %s441 = sphi 0, %s427
    %s445 = sphi 0, %s445
    %s447 = sphi 0, %s445
    %s448 = sphi 0, %s447
    %s462 = sphi 0, %s448
    %s466 = sphi 0, %s466
    %s468 = sphi 0, %s466
    %s469 = sphi 0, %s468
    %s483 = sphi 0, %s469
    %s487 = sphi 0, %s487
    %s489 = sphi 0, %s487
    %s490 = sphi 0, %s489
    %s504 = sphi 0, %s490
    %s510 = sphi 0, %s512
    %s513 = sphi 0, %s510
    %s514 = sphi 0, %s513
    %s530 = sphi 0, %s514
  $region4: #{encoder_layer_forward.1} parent=0 // loop_header_branch
    %31 = sbr.rel (%p29) target = $region8
  $region5: #{encoder_layer_forward.1} parent=0 // loop_body
    %s33 = ssub.s32 %s28, 1
    %s34 = ssub.s32 %s28, 2
    %s35 = sadd.s32 %s28, 1
    %s36 = ssub.s32 %s28, %s35
    %p37 = scmp.eq.s32.totalorder %s36, 0
    %s39 = sadd.s32 %s38, 1
    %s40 = scalar_select %p37, %s38, %s39
    %p43 = pneg %p37
    %p44 = scmp.eq.s32.totalorder %s28, 1
    %p45 = por %p43, %p44
    %p46 = scmp.ne.s32.totalorder %s38, %s41
    %p47 = scmp.eq.s32.totalorder %s28, 0
    %p48 = por %p46, %p47
    %p49 = scmp.ne.s32.totalorder %s38, %s41
    %p50 = scmp.eq.s32.totalorder %s33, 1
    %p51 = por %p49, %p50
    %p52 = scmp.ne.s32.totalorder %s41, %s42
    %p53 = scmp.eq.s32.totalorder %s33, 0
    %p54 = por %p52, %p53
    %p55 = scmp.ne.s32.totalorder %s41, %s42
    %p56 = scmp.eq.s32.totalorder %s34, 1
    %p57 = por %p55, %p56
    %p59 = scmp.ne.s32.totalorder %s42, %s58
    %p60 = scmp.eq.s32.totalorder %s34, 0
    %p61 = por %p59, %p60
    %s62 = ssub.s32 %s28, %s35
    %p63 = scmp.eq.s32.totalorder %s62, 0
    %s65 = sadd.s32 %s64, 1
    %s66 = scalar_select %p63, %s64, %s65
    %p69 = pneg %p63
    %p70 = scmp.eq.s32.totalorder %s28, 1
    %p71 = por %p69, %p70
    %p72 = scmp.ne.s32.totalorder %s64, %s67
    %p73 = scmp.eq.s32.totalorder %s28, 0
    %p74 = por %p72, %p73
    %p75 = scmp.ne.s32.totalorder %s64, %s67
    %p76 = scmp.eq.s32.totalorder %s33, 1
    %p77 = por %p75, %p76
    %p78 = scmp.ne.s32.totalorder %s67, %s68
    %p79 = scmp.eq.s32.totalorder %s33, 0
    %p80 = por %p78, %p79
    %p81 = scmp.ne.s32.totalorder %s67, %s68
    %p82 = scmp.eq.s32.totalorder %s34, 1
    %p83 = por %p81, %p82
    %p85 = scmp.ne.s32.totalorder %s68, %s84
    %p86 = scmp.eq.s32.totalorder %s34, 0
    %p87 = por %p85, %p86
    %s89 = sadd.s32 %s88, 1
    %p92 = scmp.eq.s32.totalorder %s28, 1
    %p93 = scmp.ne.s32.totalorder %s88, %s90
    %p94 = scmp.eq.s32.totalorder %s28, 0
    %p95 = por %p93, %p94
    %p96 = scmp.ne.s32.totalorder %s88, %s90
    %p97 = scmp.eq.s32.totalorder %s33, 1
    %p98 = por %p96, %p97
    %p99 = scmp.ne.s32.totalorder %s90, %s91
    %p100 = scmp.eq.s32.totalorder %s33, 0
    %p101 = por %p99, %p100
    %p102 = scmp.ne.s32.totalorder %s90, %s91
    %p103 = scmp.eq.s32.totalorder %s34, 1
    %p104 = por %p102, %p103
    %p106 = scmp.ne.s32.totalorder %s91, %s105
    %p107 = scmp.eq.s32.totalorder %s34, 0
    %p108 = por %p106, %p107
    %s110 = sadd.s32 %s109, 1
    %p113 = scmp.eq.s32.totalorder %s28, 1
    %p114 = scmp.ne.s32.totalorder %s109, %s111
    %p115 = scmp.eq.s32.totalorder %s28, 0
    %p116 = por %p114, %p115
    %p117 = scmp.ne.s32.totalorder %s109, %s111
    %p118 = scmp.eq.s32.totalorder %s33, 1
    %p119 = por %p117, %p118
    %p120 = scmp.ne.s32.totalorder %s111, %s112
    %p121 = scmp.eq.s32.totalorder %s33, 0
    %p122 = por %p120, %p121
    %p123 = scmp.ne.s32.totalorder %s111, %s112
    %p124 = scmp.eq.s32.totalorder %s34, 1
    %p125 = por %p123, %p124
    %p127 = scmp.ne.s32.totalorder %s112, %s126
    %p128 = scmp.eq.s32.totalorder %s34, 0
    %p129 = por %p127, %p128
    %s131 = sadd.s32 %s130, 1
    %p134 = scmp.eq.s32.totalorder %s28, 1
    %p135 = scmp.ne.s32.totalorder %s130, %s132
    %p136 = scmp.eq.s32.totalorder %s28, 0
    %p137 = por %p135, %p136
    %p138 = scmp.ne.s32.totalorder %s130, %s132
    %p139 = scmp.eq.s32.totalorder %s33, 1
    %p140 = por %p138, %p139
    %p141 = scmp.ne.s32.totalorder %s132, %s133
    %p142 = scmp.eq.s32.totalorder %s33, 0
    %p143 = por %p141, %p142
    %p144 = scmp.ne.s32.totalorder %s132, %s133
    %p145 = scmp.eq.s32.totalorder %s34, 1
    %p146 = por %p144, %p145
    %p148 = scmp.ne.s32.totalorder %s133, %s147
    %p149 = scmp.eq.s32.totalorder %s34, 0
    %p150 = por %p148, %p149
    %s152 = sadd.s32 %s151, 1
    %p155 = scmp.eq.s32.totalorder %s28, 1
    %p156 = scmp.ne.s32.totalorder %s151, %s153
    %p157 = scmp.eq.s32.totalorder %s28, 0
    %p158 = por %p156, %p157
    %p159 = scmp.ne.s32.totalorder %s151, %s153
    %p160 = scmp.eq.s32.totalorder %s33, 1
    %p161 = por %p159, %p160
    %p162 = scmp.ne.s32.totalorder %s153, %s154
    %p163 = scmp.eq.s32.totalorder %s33, 0
    %p164 = por %p162, %p163
    %p165 = scmp.ne.s32.totalorder %s153, %s154
    %p166 = scmp.eq.s32.totalorder %s34, 1
    %p167 = por %p165, %p166
    %p169 = scmp.ne.s32.totalorder %s154, %s168
    %p170 = scmp.eq.s32.totalorder %s34, 0
    %p171 = por %p169, %p170
    %s173 = sadd.s32 %s172, 1
    %p176 = scmp.eq.s32.totalorder %s28, 1
    %p177 = scmp.ne.s32.totalorder %s172, %s174
    %p178 = scmp.eq.s32.totalorder %s28, 0
    %p179 = por %p177, %p178
    %p180 = scmp.ne.s32.totalorder %s172, %s174
    %p181 = scmp.eq.s32.totalorder %s33, 1
    %p182 = por %p180, %p181
    %p183 = scmp.ne.s32.totalorder %s174, %s175
    %p184 = scmp.eq.s32.totalorder %s33, 0
    %p185 = por %p183, %p184
    %p186 = scmp.ne.s32.totalorder %s174, %s175
    %p187 = scmp.eq.s32.totalorder %s34, 1
    %p188 = por %p186, %p187
    %p190 = scmp.ne.s32.totalorder %s175, %s189
    %p191 = scmp.eq.s32.totalorder %s34, 0
    %p192 = por %p190, %p191
    %s194 = sadd.s32 %s193, 1
    %p197 = scmp.eq.s32.totalorder %s28, 1
    %p198 = scmp.ne.s32.totalorder %s193, %s195
    %p199 = scmp.eq.s32.totalorder %s28, 0
    %p200 = por %p198, %p199
    %p201 = scmp.ne.s32.totalorder %s193, %s195
    %p202 = scmp.eq.s32.totalorder %s33, 1
    %p203 = por %p201, %p202
    %p204 = scmp.ne.s32.totalorder %s195, %s196
    %p205 = scmp.eq.s32.totalorder %s33, 0
    %p206 = por %p204, %p205
    %p207 = scmp.ne.s32.totalorder %s195, %s196
    %p208 = scmp.eq.s32.totalorder %s34, 1
    %p209 = por %p207, %p208
    %p211 = scmp.ne.s32.totalorder %s196, %s210
    %p212 = scmp.eq.s32.totalorder %s34, 0
    %p213 = por %p211, %p212
    %s215 = sadd.s32 %s214, 1
    %p218 = scmp.eq.s32.totalorder %s28, 1
    %p219 = scmp.ne.s32.totalorder %s214, %s216
    %p220 = scmp.eq.s32.totalorder %s28, 0
    %p221 = por %p219, %p220
    %p222 = scmp.ne.s32.totalorder %s214, %s216
    %p223 = scmp.eq.s32.totalorder %s33, 1
    %p224 = por %p222, %p223
    %p225 = scmp.ne.s32.totalorder %s216, %s217
    %p226 = scmp.eq.s32.totalorder %s33, 0
    %p227 = por %p225, %p226
    %p228 = scmp.ne.s32.totalorder %s216, %s217
    %p229 = scmp.eq.s32.totalorder %s34, 1
    %p230 = por %p228, %p229
    %p232 = scmp.ne.s32.totalorder %s217, %s231
    %p233 = scmp.eq.s32.totalorder %s34, 0
    %p234 = por %p232, %p233
    %s236 = sadd.s32 %s235, 1
    %p239 = scmp.eq.s32.totalorder %s28, 1
    %p240 = scmp.ne.s32.totalorder %s235, %s237
    %p241 = scmp.eq.s32.totalorder %s28, 0
    %p242 = por %p240, %p241
    %p243 = scmp.ne.s32.totalorder %s235, %s237
    %p244 = scmp.eq.s32.totalorder %s33, 1
    %p245 = por %p243, %p244
    %p246 = scmp.ne.s32.totalorder %s237, %s238
    %p247 = scmp.eq.s32.totalorder %s33, 0
    %p248 = por %p246, %p247
    %p249 = scmp.ne.s32.totalorder %s237, %s238
    %p250 = scmp.eq.s32.totalorder %s34, 1
    %p251 = por %p249, %p250
    %p253 = scmp.ne.s32.totalorder %s238, %s252
    %p254 = scmp.eq.s32.totalorder %s34, 0
    %p255 = por %p253, %p254
    %s257 = sadd.s32 %s256, 1
    %p260 = scmp.eq.s32.totalorder %s28, 1
    %p261 = scmp.ne.s32.totalorder %s256, %s258
    %p262 = scmp.eq.s32.totalorder %s28, 0
    %p263 = por %p261, %p262
    %p264 = scmp.ne.s32.totalorder %s256, %s258
    %p265 = scmp.eq.s32.totalorder %s33, 1
    %p266 = por %p264, %p265
    %p267 = scmp.ne.s32.totalorder %s258, %s259
    %p268 = scmp.eq.s32.totalorder %s33, 0
    %p269 = por %p267, %p268
    %p270 = scmp.ne.s32.totalorder %s258, %s259
    %p271 = scmp.eq.s32.totalorder %s34, 1
    %p272 = por %p270, %p271
    %p274 = scmp.ne.s32.totalorder %s259, %s273
    %p275 = scmp.eq.s32.totalorder %s34, 0
    %p276 = por %p274, %p275
    %s278 = sadd.s32 %s277, 1
    %p281 = scmp.eq.s32.totalorder %s28, 1
    %p282 = scmp.ne.s32.totalorder %s277, %s279
    %p283 = scmp.eq.s32.totalorder %s28, 0
    %p284 = por %p282, %p283
    %p285 = scmp.ne.s32.totalorder %s277, %s279
    %p286 = scmp.eq.s32.totalorder %s33, 1
    %p287 = por %p285, %p286
    %p288 = scmp.ne.s32.totalorder %s279, %s280
    %p289 = scmp.eq.s32.totalorder %s33, 0
    %p290 = por %p288, %p289
    %p291 = scmp.ne.s32.totalorder %s279, %s280
    %p292 = scmp.eq.s32.totalorder %s34, 1
    %p293 = por %p291, %p292
    %p295 = scmp.ne.s32.totalorder %s280, %s294
    %p296 = scmp.eq.s32.totalorder %s34, 0
    %p297 = por %p295, %p296
    %s299 = sadd.s32 %s298, 1
    %p302 = scmp.eq.s32.totalorder %s28, 1
    %p303 = scmp.ne.s32.totalorder %s298, %s300
    %p304 = scmp.eq.s32.totalorder %s28, 0
    %p305 = por %p303, %p304
    %p306 = scmp.ne.s32.totalorder %s298, %s300
    %p307 = scmp.eq.s32.totalorder %s33, 1
    %p308 = por %p306, %p307
    %p309 = scmp.ne.s32.totalorder %s300, %s301
    %p310 = scmp.eq.s32.totalorder %s33, 0
    %p311 = por %p309, %p310
    %p312 = scmp.ne.s32.totalorder %s300, %s301
    %p313 = scmp.eq.s32.totalorder %s34, 1
    %p314 = por %p312, %p313
    %p316 = scmp.ne.s32.totalorder %s301, %s315
    %p317 = scmp.eq.s32.totalorder %s34, 0
    %p318 = por %p316, %p317
    %s320 = sadd.s32 %s319, 1
    %p323 = scmp.eq.s32.totalorder %s28, 1
    %p324 = scmp.ne.s32.totalorder %s319, %s321
    %p325 = scmp.eq.s32.totalorder %s28, 0
    %p326 = por %p324, %p325
    %p327 = scmp.ne.s32.totalorder %s319, %s321
    %p328 = scmp.eq.s32.totalorder %s33, 1
    %p329 = por %p327, %p328
    %p330 = scmp.ne.s32.totalorder %s321, %s322
    %p331 = scmp.eq.s32.totalorder %s33, 0
    %p332 = por %p330, %p331
    %p333 = scmp.ne.s32.totalorder %s321, %s322
    %p334 = scmp.eq.s32.totalorder %s34, 1
    %p335 = por %p333, %p334
    %p337 = scmp.ne.s32.totalorder %s322, %s336
    %p338 = scmp.eq.s32.totalorder %s34, 0
    %p339 = por %p337, %p338
    %s341 = sadd.s32 %s340, 1
    %p344 = scmp.eq.s32.totalorder %s28, 1
    %p345 = scmp.ne.s32.totalorder %s340, %s342
    %p346 = scmp.eq.s32.totalorder %s28, 0
    %p347 = por %p345, %p346
    %p348 = scmp.ne.s32.totalorder %s340, %s342
    %p349 = scmp.eq.s32.totalorder %s33, 1
    %p350 = por %p348, %p349
    %p351 = scmp.ne.s32.totalorder %s342, %s343
    %p352 = scmp.eq.s32.totalorder %s33, 0
    %p353 = por %p351, %p352
    %p354 = scmp.ne.s32.totalorder %s342, %s343
    %p355 = scmp.eq.s32.totalorder %s34, 1
    %p356 = por %p354, %p355
    %p358 = scmp.ne.s32.totalorder %s343, %s357
    %p359 = scmp.eq.s32.totalorder %s34, 0
    %p360 = por %p358, %p359
    %s362 = sadd.s32 %s361, 1
    %p365 = scmp.eq.s32.totalorder %s28, 1
    %p366 = scmp.ne.s32.totalorder %s361, %s363
    %p367 = scmp.eq.s32.totalorder %s28, 0
    %p368 = por %p366, %p367
    %p369 = scmp.ne.s32.totalorder %s361, %s363
    %p370 = scmp.eq.s32.totalorder %s33, 1
    %p371 = por %p369, %p370
    %p372 = scmp.ne.s32.totalorder %s363, %s364
    %p373 = scmp.eq.s32.totalorder %s33, 0
    %p374 = por %p372, %p373
    %p375 = scmp.ne.s32.totalorder %s363, %s364
    %p376 = scmp.eq.s32.totalorder %s34, 1
    %p377 = por %p375, %p376
    %p379 = scmp.ne.s32.totalorder %s364, %s378
    %p380 = scmp.eq.s32.totalorder %s34, 0
    %p381 = por %p379, %p380
    %s383 = sadd.s32 %s382, 1
    %p386 = scmp.eq.s32.totalorder %s28, 1
    %p387 = scmp.ne.s32.totalorder %s382, %s384
    %p388 = scmp.eq.s32.totalorder %s28, 0
    %p389 = por %p387, %p388
    %p390 = scmp.ne.s32.totalorder %s382, %s384
    %p391 = scmp.eq.s32.totalorder %s33, 1
    %p392 = por %p390, %p391
    %p393 = scmp.ne.s32.totalorder %s384, %s385
    %p394 = scmp.eq.s32.totalorder %s33, 0
    %p395 = por %p393, %p394
    %p396 = scmp.ne.s32.totalorder %s384, %s385
    %p397 = scmp.eq.s32.totalorder %s34, 1
    %p398 = por %p396, %p397
    %p400 = scmp.ne.s32.totalorder %s385, %s399
    %p401 = scmp.eq.s32.totalorder %s34, 0
    %p402 = por %p400, %p401
    %s404 = sadd.s32 %s403, 1
    %p407 = scmp.eq.s32.totalorder %s28, 1
    %p408 = scmp.ne.s32.totalorder %s403, %s405
    %p409 = scmp.eq.s32.totalorder %s28, 0
    %p410 = por %p408, %p409
    %p411 = scmp.ne.s32.totalorder %s403, %s405
    %p412 = scmp.eq.s32.totalorder %s33, 1
    %p413 = por %p411, %p412
    %p414 = scmp.ne.s32.totalorder %s405, %s406
    %p415 = scmp.eq.s32.totalorder %s33, 0
    %p416 = por %p414, %p415
    %p417 = scmp.ne.s32.totalorder %s405, %s406
    %p418 = scmp.eq.s32.totalorder %s34, 1
    %p419 = por %p417, %p418
    %p421 = scmp.ne.s32.totalorder %s406, %s420
    %p422 = scmp.eq.s32.totalorder %s34, 0
    %p423 = por %p421, %p422
    %s425 = sadd.s32 %s424, 1
    %p428 = scmp.eq.s32.totalorder %s28, 1
    %p429 = scmp.ne.s32.totalorder %s424, %s426
    %p430 = scmp.eq.s32.totalorder %s28, 0
    %p431 = por %p429, %p430
    %p432 = scmp.ne.s32.totalorder %s424, %s426
    %p433 = scmp.eq.s32.totalorder %s33, 1
    %p434 = por %p432, %p433
    %p435 = scmp.ne.s32.totalorder %s426, %s427
    %p436 = scmp.eq.s32.totalorder %s33, 0
    %p437 = por %p435, %p436
    %p438 = scmp.ne.s32.totalorder %s426, %s427
    %p439 = scmp.eq.s32.totalorder %s34, 1
    %p440 = por %p438, %p439
    %p442 = scmp.ne.s32.totalorder %s427, %s441
    %p443 = scmp.eq.s32.totalorder %s34, 0
    %p444 = por %p442, %p443
    %s446 = sadd.s32 %s445, 1
    %p449 = scmp.eq.s32.totalorder %s28, 1
    %p450 = scmp.ne.s32.totalorder %s445, %s447
    %p451 = scmp.eq.s32.totalorder %s28, 0
    %p452 = por %p450, %p451
    %p453 = scmp.ne.s32.totalorder %s445, %s447
    %p454 = scmp.eq.s32.totalorder %s33, 1
    %p455 = por %p453, %p454
    %p456 = scmp.ne.s32.totalorder %s447, %s448
    %p457 = scmp.eq.s32.totalorder %s33, 0
    %p458 = por %p456, %p457
    %p459 = scmp.ne.s32.totalorder %s447, %s448
    %p460 = scmp.eq.s32.totalorder %s34, 1
    %p461 = por %p459, %p460
    %p463 = scmp.ne.s32.totalorder %s448, %s462
    %p464 = scmp.eq.s32.totalorder %s34, 0
    %p465 = por %p463, %p464
    %s467 = sadd.s32 %s466, 1
    %p470 = scmp.eq.s32.totalorder %s28, 1
    %p471 = scmp.ne.s32.totalorder %s466, %s468
    %p472 = scmp.eq.s32.totalorder %s28, 0
    %p473 = por %p471, %p472
    %p474 = scmp.ne.s32.totalorder %s466, %s468
    %p475 = scmp.eq.s32.totalorder %s33, 1
    %p476 = por %p474, %p475
    %p477 = scmp.ne.s32.totalorder %s468, %s469
    %p478 = scmp.eq.s32.totalorder %s33, 0
    %p479 = por %p477, %p478
    %p480 = scmp.ne.s32.totalorder %s468, %s469
    %p481 = scmp.eq.s32.totalorder %s34, 1
    %p482 = por %p480, %p481
    %p484 = scmp.ne.s32.totalorder %s469, %s483
    %p485 = scmp.eq.s32.totalorder %s34, 0
    %p486 = por %p484, %p485
    %s488 = sadd.s32 %s487, 1
    %p491 = scmp.eq.s32.totalorder %s28, 1
    %p492 = scmp.ne.s32.totalorder %s487, %s489
    %p493 = scmp.eq.s32.totalorder %s28, 0
    %p494 = por %p492, %p493
    %p495 = scmp.ne.s32.totalorder %s487, %s489
    %p496 = scmp.eq.s32.totalorder %s33, 1
    %p497 = por %p495, %p496
    %p498 = scmp.ne.s32.totalorder %s489, %s490
    %p499 = scmp.eq.s32.totalorder %s33, 0
    %p500 = por %p498, %p499
    %p501 = scmp.ne.s32.totalorder %s489, %s490
    %p502 = scmp.eq.s32.totalorder %s34, 1
    %p503 = por %p501, %p502
    %p505 = scmp.ne.s32.totalorder %s490, %s504
    %p506 = scmp.eq.s32.totalorder %s34, 0
    %p507 = por %p505, %p506
    %s508 = ssub.s32 %s28, %s35
    %p509 = scmp.eq.s32.totalorder %s508, 0
    %s511 = sadd.s32 %s510, 1
    %s512 = scalar_select %p509, %s510, %s511
    %p515 = pneg %p509
    %p516 = scmp.eq.s32.totalorder %s28, 1
    %p517 = por %p515, %p516
    %p518 = scmp.ne.s32.totalorder %s510, %s513
    %p519 = scmp.eq.s32.totalorder %s28, 0
    %p520 = por %p518, %p519
    %p521 = scmp.ne.s32.totalorder %s510, %s513
    %p522 = scmp.eq.s32.totalorder %s33, 1
    %p523 = por %p521, %p522
    %p524 = scmp.ne.s32.totalorder %s513, %s514
    %p525 = scmp.eq.s32.totalorder %s33, 0
    %p526 = por %p524, %p525
    %p527 = scmp.ne.s32.totalorder %s513, %s514
    %p528 = scmp.eq.s32.totalorder %s34, 1
    %p529 = por %p527, %p528
    %p531 = scmp.ne.s32.totalorder %s514, %s530
    %p532 = scmp.eq.s32.totalorder %s34, 0
    %p533 = por %p531, %p532
    %p534 = scmp.le.s32.totalorder 1, %s28
    %p535 = scmp.lt.s32.totalorder %s28, 3
    %p536 = pnand %p534, %p535
    %p537 = pneg %p536
    // Predicated region
    $region9: #{encoder_layer_forward.1} parent=5 // pred_check
      _
    $region10: #{encoder_layer_forward.1} parent=5 // pred_check_branch
      %539 = sbr.rel (%p536) target = $region12
    $region11: #{encoder_layer_forward.1} parent=5 // pred_region
      %s540 = ssub.s32 %s28, 1
      // Predicated region
      $region13: #{encoder_layer_forward.1} parent=11 // pred_check
        %p541 = pneg %p101
      $region14: #{encoder_layer_forward.1} parent=11 // pred_check_branch
        %543 = sbr.rel (%p541) target = $region16
      $region15: #{encoder_layer_forward.1} parent=11 // pred_region
        _
      $region16: #{encoder_layer_forward.1} parent=11 // pred_fallthru
        _
      // Predicated region
      $region17: #{encoder_layer_forward.1} parent=11 // pred_check
        %p544 = pneg %p122
      $region18: #{encoder_layer_forward.1} parent=11 // pred_check_branch
        %546 = sbr.rel (%p544) target = $region20
      $region19: #{encoder_layer_forward.1} parent=11 // pred_region
        _
      $region20: #{encoder_layer_forward.1} parent=11 // pred_fallthru
        _
      // Predicated region
      $region21: #{encoder_layer_forward.1} parent=11 // pred_check
        %p547 = pneg %p143
      $region22: #{encoder_layer_forward.1} parent=11 // pred_check_branch
        %549 = sbr.rel (%p547) target = $region24
      $region23: #{encoder_layer_forward.1} parent=11 // pred_region
        _
      $region24: #{encoder_layer_forward.1} parent=11 // pred_fallthru
        _
      // Predicated region
      $region25: #{encoder_layer_forward.1} parent=11 // pred_check
        %p550 = pneg %p164
      $region26: #{encoder_layer_forward.1} parent=11 // pred_check_branch
        %552 = sbr.rel (%p550) target = $region28
      $region27: #{encoder_layer_forward.1} parent=11 // pred_region
        _
      $region28: #{encoder_layer_forward.1} parent=11 // pred_fallthru
        _
      // Predicated region
      $region29: #{encoder_layer_forward.1} parent=11 // pred_check
        %p553 = pneg %p185
      $region30: #{encoder_layer_forward.1} parent=11 // pred_check_branch
        %555 = sbr.rel (%p553) target = $region32
      $region31: #{encoder_layer_forward.1} parent=11 // pred_region
        _
      $region32: #{encoder_layer_forward.1} parent=11 // pred_fallthru
        _
      // Predicated region
      $region33: #{encoder_layer_forward.1} parent=11 // pred_check
        %p556 = pneg %p206
      $region34: #{encoder_layer_forward.1} parent=11 // pred_check_branch
        %558 = sbr.rel (%p556) target = $region36
      $region35: #{encoder_layer_forward.1} parent=11 // pred_region
        _
      $region36: #{encoder_layer_forward.1} parent=11 // pred_fallthru
        _
      // Predicated region
      $region37: #{encoder_layer_forward.1} parent=11 // pred_check
        %p559 = pneg %p227
      $region38: #{encoder_layer_forward.1} parent=11 // pred_check_branch
        %561 = sbr.rel (%p559) target = $region40
      $region39: #{encoder_layer_forward.1} parent=11 // pred_region
        _
      $region40: #{encoder_layer_forward.1} parent=11 // pred_fallthru
        _
      // Predicated region
      $region41: #{encoder_layer_forward.1} parent=11 // pred_check
        %p562 = pneg %p248
      $region42: #{encoder_layer_forward.1} parent=11 // pred_check_branch
        %564 = sbr.rel (%p562) target = $region44
      $region43: #{encoder_layer_forward.1} parent=11 // pred_region
        _
      $region44: #{encoder_layer_forward.1} parent=11 // pred_fallthru
        _
      // Predicated region
      $region45: #{encoder_layer_forward.1} parent=11 // pred_check
        %p565 = pneg %p269
      $region46: #{encoder_layer_forward.1} parent=11 // pred_check_branch
        %567 = sbr.rel (%p565) target = $region48
      $region47: #{encoder_layer_forward.1} parent=11 // pred_region
        _
      $region48: #{encoder_layer_forward.1} parent=11 // pred_fallthru
        _
      // Predicated region
      $region49: #{encoder_layer_forward.1} parent=11 // pred_check
        %p568 = pneg %p290
      $region50: #{encoder_layer_forward.1} parent=11 // pred_check_branch
        %570 = sbr.rel (%p568) target = $region52
      $region51: #{encoder_layer_forward.1} parent=11 // pred_region
        _
      $region52: #{encoder_layer_forward.1} parent=11 // pred_fallthru
        _
      // Predicated region
      $region53: #{encoder_layer_forward.1} parent=11 // pred_check
        %p571 = pneg %p311
      $region54: #{encoder_layer_forward.1} parent=11 // pred_check_branch
        %573 = sbr.rel (%p571) target = $region56
      $region55: #{encoder_layer_forward.1} parent=11 // pred_region
        _
      $region56: #{encoder_layer_forward.1} parent=11 // pred_fallthru
        _
      // Predicated region
      $region57: #{encoder_layer_forward.1} parent=11 // pred_check
        %p574 = pneg %p332
      $region58: #{encoder_layer_forward.1} parent=11 // pred_check_branch
        %576 = sbr.rel (%p574) target = $region60
      $region59: #{encoder_layer_forward.1} parent=11 // pred_region
        _
      $region60: #{encoder_layer_forward.1} parent=11 // pred_fallthru
        _
      // Predicated region
      $region61: #{encoder_layer_forward.1} parent=11 // pred_check
        %p577 = pneg %p353
      $region62: #{encoder_layer_forward.1} parent=11 // pred_check_branch
        %579 = sbr.rel (%p577) target = $region64
      $region63: #{encoder_layer_forward.1} parent=11 // pred_region
        _
      $region64: #{encoder_layer_forward.1} parent=11 // pred_fallthru
        _
      // Predicated region
      $region65: #{encoder_layer_forward.1} parent=11 // pred_check
        %p580 = pneg %p374
      $region66: #{encoder_layer_forward.1} parent=11 // pred_check_branch
        %582 = sbr.rel (%p580) target = $region68
      $region67: #{encoder_layer_forward.1} parent=11 // pred_region
        _
      $region68: #{encoder_layer_forward.1} parent=11 // pred_fallthru
        _
      // Predicated region
      $region69: #{encoder_layer_forward.1} parent=11 // pred_check
        %p583 = pneg %p395
      $region70: #{encoder_layer_forward.1} parent=11 // pred_check_branch
        %585 = sbr.rel (%p583) target = $region72
      $region71: #{encoder_layer_forward.1} parent=11 // pred_region
        _
      $region72: #{encoder_layer_forward.1} parent=11 // pred_fallthru
        _
      // Predicated region
      $region73: #{encoder_layer_forward.1} parent=11 // pred_check
        %p586 = pneg %p416
      $region74: #{encoder_layer_forward.1} parent=11 // pred_check_branch
        %588 = sbr.rel (%p586) target = $region76
      $region75: #{encoder_layer_forward.1} parent=11 // pred_region
        _
      $region76: #{encoder_layer_forward.1} parent=11 // pred_fallthru
        _
      // Predicated region
      $region77: #{encoder_layer_forward.1} parent=11 // pred_check
        %p589 = pneg %p437
      $region78: #{encoder_layer_forward.1} parent=11 // pred_check_branch
        %591 = sbr.rel (%p589) target = $region80
      $region79: #{encoder_layer_forward.1} parent=11 // pred_region
        _
      $region80: #{encoder_layer_forward.1} parent=11 // pred_fallthru
        _
      // Predicated region
      $region81: #{encoder_layer_forward.1} parent=11 // pred_check
        %p592 = pneg %p458
      $region82: #{encoder_layer_forward.1} parent=11 // pred_check_branch
        %594 = sbr.rel (%p592) target = $region84
      $region83: #{encoder_layer_forward.1} parent=11 // pred_region
        _
      $region84: #{encoder_layer_forward.1} parent=11 // pred_fallthru
        _
      // Predicated region
      $region85: #{encoder_layer_forward.1} parent=11 // pred_check
        %p595 = pneg %p479
      $region86: #{encoder_layer_forward.1} parent=11 // pred_check_branch
        %597 = sbr.rel (%p595) target = $region88
      $region87: #{encoder_layer_forward.1} parent=11 // pred_region
        _
      $region88: #{encoder_layer_forward.1} parent=11 // pred_fallthru
        _
      // Predicated region
      $region89: #{encoder_layer_forward.1} parent=11 // pred_check
        %p598 = pneg %p500
      $region90: #{encoder_layer_forward.1} parent=11 // pred_check_branch
        %600 = sbr.rel (%p598) target = $region92
      $region91: #{encoder_layer_forward.1} parent=11 // pred_region
        _
      $region92: #{encoder_layer_forward.1} parent=11 // pred_fallthru
        _
    $region12: #{encoder_layer_forward.1} parent=5 // pred_fallthru
      _
    %p601 = scmp.lt.s32.totalorder %s28, 2
    // Predicated region
    $region93: #{encoder_layer_forward.1} parent=5 // pred_check
      %p602 = pneg %p601
    $region94: #{encoder_layer_forward.1} parent=5 // pred_check_branch
      %604 = sbr.rel (%p602) target = $region96
    $region95: #{encoder_layer_forward.1} parent=5 // pred_region
      // Predicated region
      $region97: #{encoder_layer_forward.1} parent=95 // pred_check
        %p605 = pneg %p48
      $region98: #{encoder_layer_forward.1} parent=95 // pred_check_branch
        %607 = sbr.rel (%p605) target = $region100
      $region99: #{encoder_layer_forward.1} parent=95 // pred_region
        %p608 = scmp.lt.s32.totalorder %s28, 1
        %s609 = scalar_select %p608, %s28, 1
        %s610 = smul.addr %s609, 8
        %s611 = scalar_lea.vmem %s0, %s610
      $region100: #{encoder_layer_forward.1} parent=95 // pred_fallthru
        _
      // Predicated region
      $region101: #{encoder_layer_forward.1} parent=95 // pred_check
        %p612 = pneg %p74
      $region102: #{encoder_layer_forward.1} parent=95 // pred_check_branch
        %614 = sbr.rel (%p612) target = $region104
      $region103: #{encoder_layer_forward.1} parent=95 // pred_region
        %p615 = scmp.lt.s32.totalorder %s28, 1
        %s616 = scalar_select %p615, %s28, 1
        %s617 = smul.addr %s616, 8
        %s618 = scalar_lea.vmem %s1, %s617
      $region104: #{encoder_layer_forward.1} parent=95 // pred_fallthru
        _
    $region96: #{encoder_layer_forward.1} parent=5 // pred_fallthru
      _
    %p619 = scmp.le.s32.totalorder 1, %s28
    %p620 = scmp.lt.s32.totalorder %s28, 3
    %p621 = pnand %p619, %p620
    %p622 = pneg %p621
    // Predicated region
    $region105: #{encoder_layer_forward.1} parent=5 // pred_check
      _
    $region106: #{encoder_layer_forward.1} parent=5 // pred_check_branch
      %624 = sbr.rel (%p621) target = $region108
    $region107: #{encoder_layer_forward.1} parent=5 // pred_region
      %s625 = ssub.s32 %s28, 1
      %p626 = scmp.lt.s32.totalorder %s33, 1
      %s627 = scalar_select %p626, %s33, 1
      %s628 = smul.addr %s627, 8
      %s629 = scalar_lea.vmem %s0, %s628
      %p630 = pneg %p54
      %p631 = pneg %p51
      %p632 = scmp.lt.s32.totalorder %s33, 1
      %s633 = scalar_select %p632, %s33, 1
      %s634 = smul.addr %s633, 8
      %s635 = scalar_lea.vmem %s1, %s634
      %p636 = pneg %p80
      %p637 = pneg %p77
      %p638 = pneg %p101
      %p639 = pneg %p98
      %p640 = pneg %p122
      %p641 = pneg %p119
      %p642 = pneg %p143
      %p643 = pneg %p140
      %p644 = pneg %p164
      %p645 = pneg %p161
      %p646 = pneg %p185
      %p647 = pneg %p182
      %p648 = pneg %p206
      %p649 = pneg %p203
      %p650 = pneg %p227
      %p651 = pneg %p224
      %p652 = pneg %p248
      %p653 = pneg %p245
      %p654 = pneg %p269
      %p655 = pneg %p266
      %p656 = pneg %p290
      %p657 = pneg %p287
      %p658 = pneg %p311
      %p659 = pneg %p308
      %p660 = pneg %p332
      %p661 = pneg %p329
      %p662 = pneg %p353
      %p663 = pneg %p350
      %p664 = pneg %p374
      %p665 = pneg %p371
      %p666 = pneg %p395
      %p667 = pneg %p392
      %p668 = pneg %p416
      %p669 = pneg %p413
      %p670 = pneg %p437
      %p671 = pneg %p434
      %p672 = pneg %p458
      %p673 = pneg %p455
      %p674 = pneg %p479
      %p675 = pneg %p476
      %p676 = pneg %p500
      %p677 = pneg %p497
      %p678 = pneg %p526
      %p679 = pneg %p523
      %p680 = scmp.lt.s32.totalorder %s33, 1
      %s681 = scalar_select %p680, %s33, 1
      %s682 = smul.addr %s681, 8
      %s683 = scalar_lea.vmem %s22, %s682
      %p684 = scmp.lt.s32.totalorder %s33, 1
      %s685 = scalar_select %p684, %s33, 1
      %s686 = smul.addr %s685, 8
      %s687 = scalar_lea.vmem %s0, %s686
      %p688 = scmp.lt.s32.totalorder %s33, 1
      %s689 = scalar_select %p688, %s33, 1
      %s690 = smul.addr %s689, 8
      %s691 = scalar_lea.vmem %s1, %s690
      %p692 = scmp.lt.s32.totalorder %s33, 1
      %s693 = scalar_select %p692, %s33, 1
      %s694 = smul.addr %s693, 8
      %s695 = scalar_lea.vmem %s22, %s694
      %v697 = vld [vmem:[%s691] sm:$0xff]
      %v698 = vld [vmem:[%s687] sm:$0xff]
      %v699 = vpack.c.bf16 %v697, %v697
      %v700 = vld [vmem:[%s2] sm:$0xf]
      %v701 = vld [vmem:[%s2 + $0x4] sm:$0xf]
      %v702 = vld [vmem:[%s2 + $0x8] sm:$0xf]
      %v703 = vld [vmem:[%s2 + $0xc] sm:$0xf]
      %v704 = vld [vmem:[%s3] sm:$0x1]
      %v706 = vlaneseq
      %v707 = vshrl.u32 %v706, 7
      %v708 = vsub.s32 0, %v707
      %v709 = vrot.slane %v704, %v708
      %v715 = vunpack.c.l.b16 %v700
      %v716 = vunpack.c.l.b16 %v701
      %v717 = vunpack.c.l.b16 %v702
      %v718 = vunpack.c.l.b16 %v703
      %v719 = vpack.c.b16 %v716, %v715
      %v720 = vpack.c.b16 %v718, %v717
      %vm723 = vcmask 261120
      %v725 = vsel %vm723, %v699, 0
      %727 = vmatprep.subr.bf16.mxu0 0
      %728 = vmatpush1.bf16.msra.mxu0 %v719
      %729 = vmatprep.subr.bf16.mxu0 0
      %730 = vmatpush1.bf16.msra.mxu0 %v720
      %731 = vmatprep.subr.bf16.mxu0 0
      %732 = vmatpush1.bf16.msra.mxu0 0
      %733 = vmatprep.subr.bf16.mxu0 0
      %734 = vmatpush1.bf16.msra.mxu0 0
      %735 = vmatprep.subr.bf16.mxu0 0
      %736 = vmatpush1.bf16.msra.mxu0 0
      %737 = vmatprep.subr.bf16.mxu0 0
      %738 = vmatpush1.bf16.msra.mxu0 0
      %739 = vmatprep.subr.bf16.mxu0 0
      %740 = vmatpush1.bf16.msra.mxu0 0
      %741 = vmatprep.subr.bf16.mxu0 0
      %742 = vmatpush1.bf16.msra.mxu0 0
      %743 = vmatprep.subr.bf16.mxu0 0
      %744 = vmatpush1.bf16.msra.mxu0 0
      %745 = vmatprep.subr.bf16.mxu0 0
      %746 = vmatpush1.bf16.msra.mxu0 0
      %747 = vmatprep.subr.bf16.mxu0 0
      %748 = vmatpush1.bf16.msra.mxu0 0
      %749 = vmatprep.subr.bf16.mxu0 0
      %750 = vmatpush1.bf16.msra.mxu0 0
      %751 = vmatprep.subr.bf16.mxu0 0
      %752 = vmatpush1.bf16.msra.mxu0 0
      %753 = vmatprep.subr.bf16.mxu0 0
      %754 = vmatpush1.bf16.msra.mxu0 0
      %755 = vmatprep.subr.bf16.mxu0 0
      %756 = vmatpush1.bf16.msra.mxu0 0
      %757 = vmatprep.subr.bf16.mxu0 0
      %758 = vmatpush1.bf16.msra.mxu0 0
      %759 = vmatprep.mubr.bf16.mxu0 0
      %760 = vmatmul.mubr.bf16.gmra.mrb[0].mxu0 %v725
      %v761 = vpop.f32.mrb[0].mxu0
      %v762 = vadd.f32 %v709, %v761
      %v763 = vpop.f32.mrb[0].mxu0
      %v764 = vpop.f32.mrb[0].mxu0
      %v765 = vpop.f32.mrb[0].mxu0
      %766 = vdwg.mxu0
      %v767 = vpack.c.bf16 %v762, %v762
      %769 = vrot.lane.b32.xlu0 %v767, 96
      %v770 = vpop.permute.xlu0 %769
      %vm771 = vcmask 64512
      %v773 = vsel %vm771, %v767, 0
      %v776 = vsel %vm771, %v770, 0
      %778 = vmatprep.subr.bf16.mxu0 0
      %779 = vmatpush1.bf16.xpose.msra.mxu0 %v776
      %780 = vmatprep.subr.bf16.mxu0 0
      %781 = vmatpush1.bf16.xpose.msra.mxu0 0
      %782 = vmatprep.subr.bf16.mxu0 0
      %783 = vmatpush1.bf16.xpose.msra.mxu0 0
      %784 = vmatprep.subr.bf16.mxu0 0
      %785 = vmatpush1.bf16.xpose.msra.mxu0 0
      %786 = vmatprep.subr.bf16.mxu0 0
      %787 = vmatpush1.bf16.xpose.msra.mxu0 0
      %788 = vmatprep.subr.bf16.mxu0 0
      %789 = vmatpush1.bf16.xpose.msra.mxu0 0
      %790 = vmatprep.subr.bf16.mxu0 0
      %791 = vmatpush1.bf16.xpose.msra.mxu0 0
      %792 = vmatprep.subr.bf16.mxu0 0
      %793 = vmatpush1.bf16.xpose.msra.mxu0 0
      %794 = vmatprep.subr.bf16.mxu0 0
      %795 = vmatpush1.bf16.xpose.msra.mxu0 0
      %796 = vmatprep.subr.bf16.mxu0 0
      %797 = vmatpush1.bf16.xpose.msra.mxu0 0
      %798 = vmatprep.subr.bf16.mxu0 0
      %799 = vmatpush1.bf16.xpose.msra.mxu0 0
      %800 = vmatprep.subr.bf16.mxu0 0
      %801 = vmatpush1.bf16.xpose.msra.mxu0 0
      %802 = vmatprep.subr.bf16.mxu0 0
      %803 = vmatpush1.bf16.xpose.msra.mxu0 0
      %804 = vmatprep.subr.bf16.mxu0 0
      %805 = vmatpush1.bf16.xpose.msra.mxu0 0
      %806 = vmatprep.subr.bf16.mxu0 0
      %807 = vmatpush1.bf16.xpose.msra.mxu0 0
      %808 = vmatprep.subr.bf16.mxu0 0
      %809 = vmatpush1.bf16.xpose.msra.mxu0 0
      %810 = vmatprep.mubr.bf16.mxu0 0
      %811 = vmatmul.mubr.bf16.gmra.mrb[0].mxu0 %v773
      %v812 = vpop.f32.mrb[0].mxu0
      %v813 = vadd.f32 0.0, %v812
      %v814 = vpop.f32.mrb[0].mxu0
      %v815 = vpop.f32.mrb[0].mxu0
      %v816 = vpop.f32.mrb[0].mxu0
      %817 = vdwg.mxu0
      %v818 = vsel %vm771, %v813, -inf
      %819 = vmax.xlane.f32.xlu0 %v818
      %v820 = vpop.xlane.xlu0 %819
      %v821 = vsub.f32 %v813, %v820
      %v822 = vmul.f32 %v821, 1.442695
      %v823 = vpow.pop %v822
      %v824 = vsel %vm771, %v823, 0.0
      %825 = vadd.xlane.f32.xlu0 %v824
      %v826 = vpop.xlane.xlu0 %825
      %v827 = vrcp.pop %v826
      %v828 = vmul.f32 %v823, %v827
      %v829 = vpack.c.bf16 %v828, %v828
      %830 = vrot.lane.b32.xlu0 %v767, 64
      %v831 = vpop.permute.xlu0 %830
      %v833 = vsel %vm771, %v829, 0
      %vm835 = vcmask 1043456
      %v837 = vsel %vm835, %v831, 0
      %839 = vmatprep.subr.bf16.mxu0 0
      %840 = vmatpush1.bf16.msra.mxu0 %v837
      %841 = vmatprep.subr.bf16.mxu0 0
      %842 = vmatpush1.bf16.msra.mxu0 0
      %843 = vmatprep.subr.bf16.mxu0 0
      %844 = vmatpush1.bf16.msra.mxu0 0
      %845 = vmatprep.subr.bf16.mxu0 0
      %846 = vmatpush1.bf16.msra.mxu0 0
      %847 = vmatprep.subr.bf16.mxu0 0
      %848 = vmatpush1.bf16.msra.mxu0 0
      %849 = vmatprep.subr.bf16.mxu0 0
      %850 = vmatpush1.bf16.msra.mxu0 0
      %851 = vmatprep.subr.bf16.mxu0 0
      %852 = vmatpush1.bf16.msra.mxu0 0
      %853 = vmatprep.subr.bf16.mxu0 0
      %854 = vmatpush1.bf16.msra.mxu0 0
      %855 = vmatprep.subr.bf16.mxu0 0
      %856 = vmatpush1.bf16.msra.mxu0 0
      %857 = vmatprep.subr.bf16.mxu0 0
      %858 = vmatpush1.bf16.msra.mxu0 0
      %859 = vmatprep.subr.bf16.mxu0 0
      %860 = vmatpush1.bf16.msra.mxu0 0
      %861 = vmatprep.subr.bf16.mxu0 0
      %862 = vmatpush1.bf16.msra.mxu0 0
      %863 = vmatprep.subr.bf16.mxu0 0
      %864 = vmatpush1.bf16.msra.mxu0 0
      %865 = vmatprep.subr.bf16.mxu0 0
      %866 = vmatpush1.bf16.msra.mxu0 0
      %867 = vmatprep.subr.bf16.mxu0 0
      %868 = vmatpush1.bf16.msra.mxu0 0
      %869 = vmatprep.subr.bf16.mxu0 0
      %870 = vmatpush1.bf16.msra.mxu0 0
      %871 = vmatprep.mubr.bf16.mxu0 0
      %872 = vmatmul.mubr.bf16.gmra.mrb[0].mxu0 %v833
      %v873 = vpop.f32.mrb[0].mxu0
      %v874 = vadd.f32 0.0, %v873
      %v875 = vpop.f32.mrb[0].mxu0
      %v876 = vpop.f32.mrb[0].mxu0
      %v877 = vpop.f32.mrb[0].mxu0
      %878 = vdwg.mxu0
      %v879 = vpack.c.bf16 %v874, %v874
      %v880 = vld [vmem:[%s4] sm:$0xf]
      %881 = vrot.lane.b32.xlu0 %v767, 120
      %v882 = vpop.permute.xlu0 %881
      %883 = vrot.lane.b32.xlu0 %v767, 88
      %v884 = vpop.permute.xlu0 %883
      %v886 = vsel %vm771, %v882, 0
      %v889 = vsel %vm771, %v884, 0
      %891 = vmatprep.subr.bf16.mxu0 0
      %892 = vmatpush1.bf16.xpose.msra.mxu0 %v889
      %893 = vmatprep.subr.bf16.mxu0 0
      %894 = vmatpush1.bf16.xpose.msra.mxu0 0
      %895 = vmatprep.subr.bf16.mxu0 0
      %896 = vmatpush1.bf16.xpose.msra.mxu0 0
      %897 = vmatprep.subr.bf16.mxu0 0
      %898 = vmatpush1.bf16.xpose.msra.mxu0 0
      %899 = vmatprep.subr.bf16.mxu0 0
      %900 = vmatpush1.bf16.xpose.msra.mxu0 0
      %901 = vmatprep.subr.bf16.mxu0 0
      %902 = vmatpush1.bf16.xpose.msra.mxu0 0
      %903 = vmatprep.subr.bf16.mxu0 0
      %904 = vmatpush1.bf16.xpose.msra.mxu0 0
      %905 = vmatprep.subr.bf16.mxu0 0
      %906 = vmatpush1.bf16.xpose.msra.mxu0 0
      %907 = vmatprep.subr.bf16.mxu0 0
      %908 = vmatpush1.bf16.xpose.msra.mxu0 0
      %909 = vmatprep.subr.bf16.mxu0 0
      %910 = vmatpush1.bf16.xpose.msra.mxu0 0
      %911 = vmatprep.subr.bf16.mxu0 0
      %912 = vmatpush1.bf16.xpose.msra.mxu0 0
      %913 = vmatprep.subr.bf16.mxu0 0
      %914 = vmatpush1.bf16.xpose.msra.mxu0 0
      %915 = vmatprep.subr.bf16.mxu0 0
      %916 = vmatpush1.bf16.xpose.msra.mxu0 0
      %917 = vmatprep.subr.bf16.mxu0 0
      %918 = vmatpush1.bf16.xpose.msra.mxu0 0
      %919 = vmatprep.subr.bf16.mxu0 0
      %920 = vmatpush1.bf16.xpose.msra.mxu0 0
      %921 = vmatprep.subr.bf16.mxu0 0
      %922 = vmatpush1.bf16.xpose.msra.mxu0 0
      %923 = vmatprep.mubr.bf16.mxu0 0
      %924 = vmatmul.mubr.bf16.gmra.mrb[0].mxu0 %v886
      %v925 = vpop.f32.mrb[0].mxu0
      %v926 = vadd.f32 0.0, %v925
      %v927 = vpop.f32.mrb[0].mxu0
      %v928 = vpop.f32.mrb[0].mxu0
      %v929 = vpop.f32.mrb[0].mxu0
      %930 = vdwg.mxu0
      %v931 = vsel %vm771, %v926, -inf
      %932 = vmax.xlane.f32.xlu0 %v931
      %v933 = vpop.xlane.xlu0 %932
      %v934 = vsub.f32 %v926, %v933
      %v935 = vmul.f32 %v934, 1.442695
      %v936 = vpow.pop %v935
      %v937 = vsel %vm771, %v936, 0.0
      %938 = vadd.xlane.f32.xlu0 %v937
      %v939 = vpop.xlane.xlu0 %938
      %v940 = vrcp.pop %v939
      %v941 = vmul.f32 %v936, %v940
      %v942 = vpack.c.bf16 %v941, %v941
      %943 = vrot.lane.b32.xlu0 %v767, 56
      %v944 = vpop.permute.xlu0 %943
      %v946 = vsel %vm771, %v942, 0
      %v949 = vsel %vm835, %v944, 0
      %951 = vmatprep.subr.bf16.mxu0 0
      %952 = vmatpush1.bf16.msra.mxu0 %v949
      %953 = vmatprep.subr.bf16.mxu0 0
      %954 = vmatpush1.bf16.msra.mxu0 0
      %955 = vmatprep.subr.bf16.mxu0 0
      %956 = vmatpush1.bf16.msra.mxu0 0
      %957 = vmatprep.subr.bf16.mxu0 0
      %958 = vmatpush1.bf16.msra.mxu0 0
      %959 = vmatprep.subr.bf16.mxu0 0
      %960 = vmatpush1.bf16.msra.mxu0 0
      %961 = vmatprep.subr.bf16.mxu0 0
      %962 = vmatpush1.bf16.msra.mxu0 0
      %963 = vmatprep.subr.bf16.mxu0 0
      %964 = vmatpush1.bf16.msra.mxu0 0
      %965 = vmatprep.subr.bf16.mxu0 0
      %966 = vmatpush1.bf16.msra.mxu0 0
      %967 = vmatprep.subr.bf16.mxu0 0
      %968 = vmatpush1.bf16.msra.mxu0 0
      %969 = vmatprep.subr.bf16.mxu0 0
      %970 = vmatpush1.bf16.msra.mxu0 0
      %971 = vmatprep.subr.bf16.mxu0 0
      %972 = vmatpush1.bf16.msra.mxu0 0
      %973 = vmatprep.subr.bf16.mxu0 0
      %974 = vmatpush1.bf16.msra.mxu0 0
      %975 = vmatprep.subr.bf16.mxu0 0
      %976 = vmatpush1.bf16.msra.mxu0 0
      %977 = vmatprep.subr.bf16.mxu0 0
      %978 = vmatpush1.bf16.msra.mxu0 0
      %979 = vmatprep.subr.bf16.mxu0 0
      %980 = vmatpush1.bf16.msra.mxu0 0
      %981 = vmatprep.subr.bf16.mxu0 0
      %982 = vmatpush1.bf16.msra.mxu0 0
      %983 = vmatprep.mubr.bf16.mxu0 0
      %984 = vmatmul.mubr.bf16.gmra.mrb[0].mxu0 %v946
      %v985 = vpop.f32.mrb[0].mxu0
      %v986 = vadd.f32 0.0, %v985
      %v987 = vpop.f32.mrb[0].mxu0
      %v988 = vpop.f32.mrb[0].mxu0
      %v989 = vpop.f32.mrb[0].mxu0
      %990 = vdwg.mxu0
      %v991 = vpack.c.bf16 %v986, %v986
      %s992 = scalar_lea.vmem %s4, 4
      %v993 = vld [vmem:[%s992] sm:$0xf]
      %v995 = vsel %vm771, %v991, 0
      %v998 = vsel %vm835, %v993, 0
      %1000 = vmatprep.subr.bf16.mxu0 0
      %1001 = vmatpush1.bf16.msra.mxu0 %v998
      %1002 = vmatprep.subr.bf16.mxu0 0
      %1003 = vmatpush1.bf16.msra.mxu0 0
      %1004 = vmatprep.subr.bf16.mxu0 0
      %1005 = vmatpush1.bf16.msra.mxu0 0
      %1006 = vmatprep.subr.bf16.mxu0 0
      %1007 = vmatpush1.bf16.msra.mxu0 0
      %1008 = vmatprep.subr.bf16.mxu0 0
      %1009 = vmatpush1.bf16.msra.mxu0 0
      %1010 = vmatprep.subr.bf16.mxu0 0
      %1011 = vmatpush1.bf16.msra.mxu0 0
      %1012 = vmatprep.subr.bf16.mxu0 0
      %1013 = vmatpush1.bf16.msra.mxu0 0
      %1014 = vmatprep.subr.bf16.mxu0 0
      %1015 = vmatpush1.bf16.msra.mxu0 0
      %1016 = vmatprep.subr.bf16.mxu0 0
      %1017 = vmatpush1.bf16.msra.mxu0 0
      %1018 = vmatprep.subr.bf16.mxu0 0
      %1019 = vmatpush1.bf16.msra.mxu0 0
      %1020 = vmatprep.subr.bf16.mxu0 0
      %1021 = vmatpush1.bf16.msra.mxu0 0
      %1022 = vmatprep.subr.bf16.mxu0 0
      %1023 = vmatpush1.bf16.msra.mxu0 0
      %1024 = vmatprep.subr.bf16.mxu0 0
      %1025 = vmatpush1.bf16.msra.mxu0 0
      %1026 = vmatprep.subr.bf16.mxu0 0
      %1027 = vmatpush1.bf16.msra.mxu0 0
      %1028 = vmatprep.subr.bf16.mxu0 0
      %1029 = vmatpush1.bf16.msra.mxu0 0
      %1030 = vmatprep.subr.bf16.mxu0 0
      %1031 = vmatpush1.bf16.msra.mxu0 0
      %1032 = vmatprep.mubr.bf16.mxu0 0
      %1033 = vmatmul.mubr.bf16.gmra.mrb[0].mxu0 %v995
      %v1034 = vpop.f32.mrb[0].mxu0
      %v1035 = vadd.f32 0.0, %v1034
      %v1036 = vpop.f32.mrb[0].mxu0
      %v1037 = vpop.f32.mrb[0].mxu0
      %v1038 = vpop.f32.mrb[0].mxu0
      %1039 = vdwg.mxu0
      %v1041 = vsel %vm771, %v879, 0
      %v1044 = vsel %vm835, %v880, 0
      %1046 = vmatprep.subr.bf16.mxu0 0
      %1047 = vmatpush1.bf16.msra.mxu0 %v1044
      %1048 = vmatprep.subr.bf16.mxu0 0
      %1049 = vmatpush1.bf16.msra.mxu0 0
      %1050 = vmatprep.subr.bf16.mxu0 0
      %1051 = vmatpush1.bf16.msra.mxu0 0
      %1052 = vmatprep.subr.bf16.mxu0 0
      %1053 = vmatpush1.bf16.msra.mxu0 0
      %1054 = vmatprep.subr.bf16.mxu0 0
      %1055 = vmatpush1.bf16.msra.mxu0 0
      %1056 = vmatprep.subr.bf16.mxu0 0
      %1057 = vmatpush1.bf16.msra.mxu0 0
      %1058 = vmatprep.subr.bf16.mxu0 0
      %1059 = vmatpush1.bf16.msra.mxu0 0
      %1060 = vmatprep.subr.bf16.mxu0 0
      %1061 = vmatpush1.bf16.msra.mxu0 0
      %1062 = vmatprep.subr.bf16.mxu0 0
      %1063 = vmatpush1.bf16.msra.mxu0 0
      %1064 = vmatprep.subr.bf16.mxu0 0
      %1065 = vmatpush1.bf16.msra.mxu0 0
      %1066 = vmatprep.subr.bf16.mxu0 0
      %1067 = vmatpush1.bf16.msra.mxu0 0
      %1068 = vmatprep.subr.bf16.mxu0 0
      %1069 = vmatpush1.bf16.msra.mxu0 0
      %1070 = vmatprep.subr.bf16.mxu0 0
      %1071 = vmatpush1.bf16.msra.mxu0 0
      %1072 = vmatprep.subr.bf16.mxu0 0
      %1073 = vmatpush1.bf16.msra.mxu0 0
      %1074 = vmatprep.subr.bf16.mxu0 0
      %1075 = vmatpush1.bf16.msra.mxu0 0
      %1076 = vmatprep.subr.bf16.mxu0 0
      %1077 = vmatpush1.bf16.msra.mxu0 0
      %1078 = vmatprep.mubr.bf16.mxu0 0
      %1079 = vmatmul.mubr.bf16.gmra.mrb[0].mxu0 %v1041
      %v1080 = vpop.f32.mrb[0].mxu0
      %v1081 = vadd.f32 %v1035, %v1080
      %v1082 = vpop.f32.mrb[0].mxu0
      %v1083 = vpop.f32.mrb[0].mxu0
      %v1084 = vpop.f32.mrb[0].mxu0
      %1085 = vdwg.mxu0
      %1086 = vrot.lane.b32.xlu0 %v767, 112
      %v1087 = vpop.permute.xlu0 %1086
      %1088 = vrot.lane.b32.xlu0 %v767, 80
      %v1089 = vpop.permute.xlu0 %1088
      %v1091 = vsel %vm771, %v1087, 0
      %v1094 = vsel %vm771, %v1089, 0
      %1096 = vmatprep.subr.bf16.mxu0 0
      %1097 = vmatpush1.bf16.xpose.msra.mxu0 %v1094
      %1098 = vmatprep.subr.bf16.mxu0 0
      %1099 = vmatpush1.bf16.xpose.msra.mxu0 0
      %1100 = vmatprep.subr.bf16.mxu0 0
      %1101 = vmatpush1.bf16.xpose.msra.mxu0 0
      %1102 = vmatprep.subr.bf16.mxu0 0
      %1103 = vmatpush1.bf16.xpose.msra.mxu0 0
      %1104 = vmatprep.subr.bf16.mxu0 0
      %1105 = vmatpush1.bf16.xpose.msra.mxu0 0
      %1106 = vmatprep.subr.bf16.mxu0 0
      %1107 = vmatpush1.bf16.xpose.msra.mxu0 0
      %1108 = vmatprep.subr.bf16.mxu0 0
      %1109 = vmatpush1.bf16.xpose.msra.mxu0 0
      %1110 = vmatprep.subr.bf16.mxu0 0
      %1111 = vmatpush1.bf16.xpose.msra.mxu0 0
      %1112 = vmatprep.subr.bf16.mxu0 0
      %1113 = vmatpush1.bf16.xpose.msra.mxu0 0
      %1114 = vmatprep.subr.bf16.mxu0 0
      %1115 = vmatpush1.bf16.xpose.msra.mxu0 0
      %1116 = vmatprep.subr.bf16.mxu0 0
      %1117 = vmatpush1.bf16.xpose.msra.mxu0 0
      %1118 = vmatprep.subr.bf16.mxu0 0
      %1119 = vmatpush1.bf16.xpose.msra.mxu0 0
      %1120 = vmatprep.subr.bf16.mxu0 0
      %1121 = vmatpush1.bf16.xpose.msra.mxu0 0
      %1122 = vmatprep.subr.bf16.mxu0 0
      %1123 = vmatpush1.bf16.xpose.msra.mxu0 0
      %1124 = vmatprep.subr.bf16.mxu0 0
      %1125 = vmatpush1.bf16.xpose.msra.mxu0 0
      %1126 = vmatprep.subr.bf16.mxu0 0
      %1127 = vmatpush1.bf16.xpose.msra.mxu0 0
      %1128 = vmatprep.mubr.bf16.mxu0 0
      %1129 = vmatmul.mubr.bf16.gmra.mrb[0].mxu0 %v1091
      %v1130 = vpop.f32.mrb[0].mxu0
      %v1131 = vadd.f32 0.0, %v1130
      %v1132 = vpop.f32.mrb[0].mxu0
      %v1133 = vpop.f32.mrb[0].mxu0
      %v1134 = vpop.f32.mrb[0].mxu0
      %1135 = vdwg.mxu0
      %v1136 = vsel %vm771, %v1131, -inf
      %1137 = vmax.xlane.f32.xlu0 %v1136
      %v1138 = vpop.xlane.xlu0 %1137
      %v1139 = vsub.f32 %v1131, %v1138
      %v1140 = vmul.f32 %v1139, 1.442695
      %v1141 = vpow.pop %v1140
      %v1142 = vsel %vm771, %v1141, 0.0
      %1143 = vadd.xlane.f32.xlu0 %v1142
      %v1144 = vpop.xlane.xlu0 %1143
      %v1145 = vrcp.pop %v1144
      %v1146 = vmul.f32 %v1141, %v1145
      %v1147 = vpack.c.bf16 %v1146, %v1146
      %1148 = vrot.lane.b32.xlu0 %v767, 48
      %v1149 = vpop.permute.xlu0 %1148
      %v1151 = vsel %vm771, %v1147, 0
      %v1154 = vsel %vm835, %v1149, 0
      %1156 = vmatprep.subr.bf16.mxu0 0
      %1157 = vmatpush1.bf16.msra.mxu0 %v1154
      %1158 = vmatprep.subr.bf16.mxu0 0
      %1159 = vmatpush1.bf16.msra.mxu0 0
      %1160 = vmatprep.subr.bf16.mxu0 0
      %1161 = vmatpush1.bf16.msra.mxu0 0
      %1162 = vmatprep.subr.bf16.mxu0 0
      %1163 = vmatpush1.bf16.msra.mxu0 0
      %1164 = vmatprep.subr.bf16.mxu0 0
      %1165 = vmatpush1.bf16.msra.mxu0 0
      %1166 = vmatprep.subr.bf16.mxu0 0
      %1167 = vmatpush1.bf16.msra.mxu0 0
      %1168 = vmatprep.subr.bf16.mxu0 0
      %1169 = vmatpush1.bf16.msra.mxu0 0
      %1170 = vmatprep.subr.bf16.mxu0 0
      %1171 = vmatpush1.bf16.msra.mxu0 0
      %1172 = vmatprep.subr.bf16.mxu0 0
      %1173 = vmatpush1.bf16.msra.mxu0 0
      %1174 = vmatprep.subr.bf16.mxu0 0
      %1175 = vmatpush1.bf16.msra.mxu0 0
      %1176 = vmatprep.subr.bf16.mxu0 0
      %1177 = vmatpush1.bf16.msra.mxu0 0
      %1178 = vmatprep.subr.bf16.mxu0 0
      %1179 = vmatpush1.bf16.msra.mxu0 0
      %1180 = vmatprep.subr.bf16.mxu0 0
      %1181 = vmatpush1.bf16.msra.mxu0 0
      %1182 = vmatprep.subr.bf16.mxu0 0
      %1183 = vmatpush1.bf16.msra.mxu0 0
      %1184 = vmatprep.subr.bf16.mxu0 0
      %1185 = vmatpush1.bf16.msra.mxu0 0
      %1186 = vmatprep.subr.bf16.mxu0 0
      %1187 = vmatpush1.bf16.msra.mxu0 0
      %1188 = vmatprep.mubr.bf16.mxu0 0
      %1189 = vmatmul.mubr.bf16.gmra.mrb[0].mxu0 %v1151
      %v1190 = vpop.f32.mrb[0].mxu0
      %v1191 = vadd.f32 0.0, %v1190
      %v1192 = vpop.f32.mrb[0].mxu0
      %v1193 = vpop.f32.mrb[0].mxu0
      %v1194 = vpop.f32.mrb[0].mxu0
      %1195 = vdwg.mxu0
      %v1196 = vpack.c.bf16 %v1191, %v1191
      %s1197 = scalar_lea.vmem %s4, 8
      %v1198 = vld [vmem:[%s1197] sm:$0xf]
      %v1200 = vsel %vm771, %v1196, 0
      %v1203 = vsel %vm835, %v1198, 0
      %1205 = vmatprep.subr.bf16.mxu0 0
      %1206 = vmatpush1.bf16.msra.mxu0 %v1203
      %1207 = vmatprep.subr.bf16.mxu0 0
      %1208 = vmatpush1.bf16.msra.mxu0 0
      %1209 = vmatprep.subr.bf16.mxu0 0
      %1210 = vmatpush1.bf16.msra.mxu0 0
      %1211 = vmatprep.subr.bf16.mxu0 0
      %1212 = vmatpush1.bf16.msra.mxu0 0
      %1213 = vmatprep.subr.bf16.mxu0 0
      %1214 = vmatpush1.bf16.msra.mxu0 0
      %1215 = vmatprep.subr.bf16.mxu0 0
      %1216 = vmatpush1.bf16.msra.mxu0 0
      %1217 = vmatprep.subr.bf16.mxu0 0
      %1218 = vmatpush1.bf16.msra.mxu0 0
      %1219 = vmatprep.subr.bf16.mxu0 0
      %1220 = vmatpush1.bf16.msra.mxu0 0
      %1221 = vmatprep.subr.bf16.mxu0 0
      %1222 = vmatpush1.bf16.msra.mxu0 0
      %1223 = vmatprep.subr.bf16.mxu0 0
      %1224 = vmatpush1.bf16.msra.mxu0 0
      %1225 = vmatprep.subr.bf16.mxu0 0
      %1226 = vmatpush1.bf16.msra.mxu0 0
      %1227 = vmatprep.subr.bf16.mxu0 0
      %1228 = vmatpush1.bf16.msra.mxu0 0
      %1229 = vmatprep.subr.bf16.mxu0 0
      %1230 = vmatpush1.bf16.msra.mxu0 0
      %1231 = vmatprep.subr.bf16.mxu0 0
      %1232 = vmatpush1.bf16.msra.mxu0 0
      %1233 = vmatprep.subr.bf16.mxu0 0
      %1234 = vmatpush1.bf16.msra.mxu0 0
      %1235 = vmatprep.subr.bf16.mxu0 0
      %1236 = vmatpush1.bf16.msra.mxu0 0
      %1237 = vmatprep.mubr.bf16.mxu0 0
      %1238 = vmatmul.mubr.bf16.gmra.mrb[0].mxu0 %v1200
      %v1239 = vpop.f32.mrb[0].mxu0
      %v1240 = vadd.f32 0.0, %v1239
      %v1241 = vpop.f32.mrb[0].mxu0
      %v1242 = vpop.f32.mrb[0].mxu0
      %v1243 = vpop.f32.mrb[0].mxu0
      %1244 = vdwg.mxu0
      %v1245 = vadd.f32 %v1081, %v1240
      %1246 = vrot.lane.b32.xlu0 %v767, 104
      %v1247 = vpop.permute.xlu0 %1246
      %1248 = vrot.lane.b32.xlu0 %v767, 72
      %v1249 = vpop.permute.xlu0 %1248
      %v1251 = vsel %vm771, %v1247, 0
      %v1254 = vsel %vm771, %v1249, 0
      %1256 = vmatprep.subr.bf16.mxu0 0
      %1257 = vmatpush1.bf16.xpose.msra.mxu0 %v1254
      %1258 = vmatprep.subr.bf16.mxu0 0
      %1259 = vmatpush1.bf16.xpose.msra.mxu0 0
      %1260 = vmatprep.subr.bf16.mxu0 0
      %1261 = vmatpush1.bf16.xpose.msra.mxu0 0
      %1262 = vmatprep.subr.bf16.mxu0 0
      %1263 = vmatpush1.bf16.xpose.msra.mxu0 0
      %1264 = vmatprep.subr.bf16.mxu0 0
      %1265 = vmatpush1.bf16.xpose.msra.mxu0 0
      %1266 = vmatprep.subr.bf16.mxu0 0
      %1267 = vmatpush1.bf16.xpose.msra.mxu0 0
      %1268 = vmatprep.subr.bf16.mxu0 0
      %1269 = vmatpush1.bf16.xpose.msra.mxu0 0
      %1270 = vmatprep.subr.bf16.mxu0 0
      %1271 = vmatpush1.bf16.xpose.msra.mxu0 0
      %1272 = vmatprep.subr.bf16.mxu0 0
      %1273 = vmatpush1.bf16.xpose.msra.mxu0 0
      %1274 = vmatprep.subr.bf16.mxu0 0
      %1275 = vmatpush1.bf16.xpose.msra.mxu0 0
      %1276 = vmatprep.subr.bf16.mxu0 0
      %1277 = vmatpush1.bf16.xpose.msra.mxu0 0
      %1278 = vmatprep.subr.bf16.mxu0 0
      %1279 = vmatpush1.bf16.xpose.msra.mxu0 0
      %1280 = vmatprep.subr.bf16.mxu0 0
      %1281 = vmatpush1.bf16.xpose.msra.mxu0 0
      %1282 = vmatprep.subr.bf16.mxu0 0
      %1283 = vmatpush1.bf16.xpose.msra.mxu0 0
      %1284 = vmatprep.subr.bf16.mxu0 0
      %1285 = vmatpush1.bf16.xpose.msra.mxu0 0
      %1286 = vmatprep.subr.bf16.mxu0 0
      %1287 = vmatpush1.bf16.xpose.msra.mxu0 0
      %1288 = vmatprep.mubr.bf16.mxu0 0
      %1289 = vmatmul.mubr.bf16.gmra.mrb[0].mxu0 %v1251
      %v1290 = vpop.f32.mrb[0].mxu0
      %v1291 = vadd.f32 0.0, %v1290
      %v1292 = vpop.f32.mrb[0].mxu0
      %v1293 = vpop.f32.mrb[0].mxu0
      %v1294 = vpop.f32.mrb[0].mxu0
      %1295 = vdwg.mxu0
      %v1296 = vsel %vm771, %v1291, -inf
      %1297 = vmax.xlane.f32.xlu0 %v1296
      %v1298 = vpop.xlane.xlu0 %1297
      %v1299 = vsub.f32 %v1291, %v1298
      %v1300 = vmul.f32 %v1299, 1.442695
      %v1301 = vpow.pop %v1300
      %v1302 = vsel %vm771, %v1301, 0.0
      %1303 = vadd.xlane.f32.xlu0 %v1302
      %v1304 = vpop.xlane.xlu0 %1303
      %v1305 = vrcp.pop %v1304
      %v1306 = vmul.f32 %v1301, %v1305
      %v1307 = vpack.c.bf16 %v1306, %v1306
      %1308 = vrot.lane.b32.xlu0 %v767, 40
      %v1309 = vpop.permute.xlu0 %1308
      %v1311 = vsel %vm771, %v1307, 0
      %v1314 = vsel %vm835, %v1309, 0
      %1316 = vmatprep.subr.bf16.mxu0 0
      %1317 = vmatpush1.bf16.msra.mxu0 %v1314
      %1318 = vmatprep.subr.bf16.mxu0 0
      %1319 = vmatpush1.bf16.msra.mxu0 0
      %1320 = vmatprep.subr.bf16.mxu0 0
      %1321 = vmatpush1.bf16.msra.mxu0 0
      %1322 = vmatprep.subr.bf16.mxu0 0
      %1323 = vmatpush1.bf16.msra.mxu0 0
      %1324 = vmatprep.subr.bf16.mxu0 0
      %1325 = vmatpush1.bf16.msra.mxu0 0
      %1326 = vmatprep.subr.bf16.mxu0 0
      %1327 = vmatpush1.bf16.msra.mxu0 0
      %1328 = vmatprep.subr.bf16.mxu0 0
      %1329 = vmatpush1.bf16.msra.mxu0 0
      %1330 = vmatprep.subr.bf16.mxu0 0
      %1331 = vmatpush1.bf16.msra.mxu0 0
      %1332 = vmatprep.subr.bf16.mxu0 0
      %1333 = vmatpush1.bf16.msra.mxu0 0
      %1334 = vmatprep.subr.bf16.mxu0 0
      %1335 = vmatpush1.bf16.msra.mxu0 0
      %1336 = vmatprep.subr.bf16.mxu0 0
      %1337 = vmatpush1.bf16.msra.mxu0 0
      %1338 = vmatprep.subr.bf16.mxu0 0
      %1339 = vmatpush1.bf16.msra.mxu0 0
      %1340 = vmatprep.subr.bf16.mxu0 0
      %1341 = vmatpush1.bf16.msra.mxu0 0
      %1342 = vmatprep.subr.bf16.mxu0 0
      %1343 = vmatpush1.bf16.msra.mxu0 0
      %1344 = vmatprep.subr.bf16.mxu0 0
      %1345 = vmatpush1.bf16.msra.mxu0 0
      %1346 = vmatprep.subr.bf16.mxu0 0
      %1347 = vmatpush1.bf16.msra.mxu0 0
      %1348 = vmatprep.mubr.bf16.mxu0 0
      %1349 = vmatmul.mubr.bf16.gmra.mrb[0].mxu0 %v1311
      %v1350 = vpop.f32.mrb[0].mxu0
      %v1351 = vadd.f32 0.0, %v1350
      %v1352 = vpop.f32.mrb[0].mxu0
      %v1353 = vpop.f32.mrb[0].mxu0
      %v1354 = vpop.f32.mrb[0].mxu0
      %1355 = vdwg.mxu0
      %v1356 = vpack.c.bf16 %v1351, %v1351
      %s1357 = scalar_lea.vmem %s4, 12
      %v1358 = vld [vmem:[%s1357] sm:$0xf]
      %v1360 = vsel %vm771, %v1356, 0
      %v1363 = vsel %vm835, %v1358, 0
      %1365 = vmatprep.subr.bf16.mxu0 0
      %1366 = vmatpush1.bf16.msra.mxu0 %v1363
      %1367 = vmatprep.subr.bf16.mxu0 0
      %1368 = vmatpush1.bf16.msra.mxu0 0
      %1369 = vmatprep.subr.bf16.mxu0 0
      %1370 = vmatpush1.bf16.msra.mxu0 0
      %1371 = vmatprep.subr.bf16.mxu0 0
      %1372 = vmatpush1.bf16.msra.mxu0 0
      %1373 = vmatprep.subr.bf16.mxu0 0
      %1374 = vmatpush1.bf16.msra.mxu0 0
      %1375 = vmatprep.subr.bf16.mxu0 0
      %1376 = vmatpush1.bf16.msra.mxu0 0
      %1377 = vmatprep.subr.bf16.mxu0 0
      %1378 = vmatpush1.bf16.msra.mxu0 0
      %1379 = vmatprep.subr.bf16.mxu0 0
      %1380 = vmatpush1.bf16.msra.mxu0 0
      %1381 = vmatprep.subr.bf16.mxu0 0
      %1382 = vmatpush1.bf16.msra.mxu0 0
      %1383 = vmatprep.subr.bf16.mxu0 0
      %1384 = vmatpush1.bf16.msra.mxu0 0
      %1385 = vmatprep.subr.bf16.mxu0 0
      %1386 = vmatpush1.bf16.msra.mxu0 0
      %1387 = vmatprep.subr.bf16.mxu0 0
      %1388 = vmatpush1.bf16.msra.mxu0 0
      %1389 = vmatprep.subr.bf16.mxu0 0
      %1390 = vmatpush1.bf16.msra.mxu0 0
      %1391 = vmatprep.subr.bf16.mxu0 0
      %1392 = vmatpush1.bf16.msra.mxu0 0
      %1393 = vmatprep.subr.bf16.mxu0 0
      %1394 = vmatpush1.bf16.msra.mxu0 0
      %1395 = vmatprep.subr.bf16.mxu0 0
      %1396 = vmatpush1.bf16.msra.mxu0 0
      %1397 = vmatprep.mubr.bf16.mxu0 0
      %1398 = vmatmul.mubr.bf16.gmra.mrb[0].mxu0 %v1360
      %v1399 = vpop.f32.mrb[0].mxu0
      %v1400 = vadd.f32 0.0, %v1399
      %v1401 = vpop.f32.mrb[0].mxu0
      %v1402 = vpop.f32.mrb[0].mxu0
      %v1403 = vpop.f32.mrb[0].mxu0
      %1404 = vdwg.mxu0
      %v1405 = vadd.f32 %v1245, %v1400
      %v1406 = vld [vmem:[%s5] sm:$0x1]
      %v1408 = vlaneseq
      %v1409 = vshrl.u32 %v1408, 7
      %v1410 = vsub.s32 0, %v1409
      %v1411 = vrot.slane %v1406, %v1410
      %v1413 = vadd.f32 %v1405, %v1411
      %v1414 = vadd.f32 %v697, %v1413
      %v1415 = vld [vmem:[%s6] sm:$0x1]
      %v1416 = vld [vmem:[%s7] sm:$0x1]
      %v1417 = vsel %vm723, %v1414, 0.0
      %1418 = vadd.xlane.f32.xlu0 %v1417
      %v1419 = vpop.xlane.xlu0 %1418
      %v1420 = vrcp.pop 32.0
      %v1421 = vmul.f32 %v1419, %v1420
      %v1422 = vsub.f32 %v1414, %v1421
      %v1423 = vmul.f32 %v1422, %v1422
      %v1424 = vsel %vm723, %v1423, 0.0
      %1425 = vadd.xlane.f32.xlu0 %v1424
      %v1426 = vpop.xlane.xlu0 %1425
      %v1427 = vmul.f32 %v1426, %v1420
      %v1428 = vadd.f32 %v1427, 1e-05
      %v1429 = vrsqrt.pop %v1428
      %v1430 = vmul.f32 %v1422, %v1429
      %v1432 = vlaneseq
      %v1433 = vshrl.u32 %v1432, 7
      %v1434 = vsub.s32 0, %v1433
      %v1435 = vrot.slane %v1415, %v1434
      %v1437 = vmul.f32 %v1430, %v1435
      %v1439 = vlaneseq
      %v1440 = vshrl.u32 %v1439, 7
      %v1441 = vsub.s32 0, %v1440
      %v1442 = vrot.slane %v1416, %v1441
      %v1444 = vadd.f32 %v1437, %v1442
      %v1445 = vpack.c.bf16 %v698, %v698
      %v1446 = vld [vmem:[%s8] sm:$0xf]
      %v1447 = vld [vmem:[%s8 + $0x4] sm:$0xf]
      %v1448 = vld [vmem:[%s8 + $0x8] sm:$0xf]
      %v1449 = vld [vmem:[%s8 + $0xc] sm:$0xf]
      %v1450 = vld [vmem:[%s9] sm:$0x1]
      %v1452 = vlaneseq
      %v1453 = vshrl.u32 %v1452, 7
      %v1454 = vsub.s32 0, %v1453
      %v1455 = vrot.slane %v1450, %v1454
      %v1461 = vunpack.c.l.b16 %v1446
      %v1462 = vunpack.c.l.b16 %v1447
      %v1463 = vunpack.c.l.b16 %v1448
      %v1464 = vunpack.c.l.b16 %v1449
      %v1465 = vpack.c.b16 %v1462, %v1461
      %v1466 = vpack.c.b16 %v1464, %v1463
      %v1470 = vsel %vm723, %v1445, 0
      %1472 = vmatprep.subr.bf16.mxu0 0
      %1473 = vmatpush1.bf16.msra.mxu0 %v1465
      %1474 = vmatprep.subr.bf16.mxu0 0
      %1475 = vmatpush1.bf16.msra.mxu0 %v1466
      %1476 = vmatprep.subr.bf16.mxu0 0
      %1477 = vmatpush1.bf16.msra.mxu0 0
      %1478 = vmatprep.subr.bf16.mxu0 0
      %1479 = vmatpush1.bf16.msra.mxu0 0
      %1480 = vmatprep.subr.bf16.mxu0 0
      %1481 = vmatpush1.bf16.msra.mxu0 0
      %1482 = vmatprep.subr.bf16.mxu0 0
      %1483 = vmatpush1.bf16.msra.mxu0 0
      %1484 = vmatprep.subr.bf16.mxu0 0
      %1485 = vmatpush1.bf16.msra.mxu0 0
      %1486 = vmatprep.subr.bf16.mxu0 0
      %1487 = vmatpush1.bf16.msra.mxu0 0
      %1488 = vmatprep.subr.bf16.mxu0 0
      %1489 = vmatpush1.bf16.msra.mxu0 0
      %1490 = vmatprep.subr.bf16.mxu0 0
      %1491 = vmatpush1.bf16.msra.mxu0 0
      %1492 = vmatprep.subr.bf16.mxu0 0
      %1493 = vmatpush1.bf16.msra.mxu0 0
      %1494 = vmatprep.subr.bf16.mxu0 0
      %1495 = vmatpush1.bf16.msra.mxu0 0
      %1496 = vmatprep.subr.bf16.mxu0 0
      %1497 = vmatpush1.bf16.msra.mxu0 0
      %1498 = vmatprep.subr.bf16.mxu0 0
      %1499 = vmatpush1.bf16.msra.mxu0 0
      %1500 = vmatprep.subr.bf16.mxu0 0
      %1501 = vmatpush1.bf16.msra.mxu0 0
      %1502 = vmatprep.subr.bf16.mxu0 0
      %1503 = vmatpush1.bf16.msra.mxu0 0
      %1504 = vmatprep.mubr.bf16.mxu0 0
      %1505 = vmatmul.mubr.bf16.gmra.mrb[0].mxu0 %v1470
      %v1506 = vpop.f32.mrb[0].mxu0
      %v1507 = vadd.f32 %v1455, %v1506
      %v1508 = vpop.f32.mrb[0].mxu0
      %v1509 = vpop.f32.mrb[0].mxu0
      %v1510 = vpop.f32.mrb[0].mxu0
      %1511 = vdwg.mxu0
      %v1512 = vpack.c.bf16 %v1444, %v1444
      %v1513 = vld [vmem:[%s10] sm:$0xf]
      %v1514 = vld [vmem:[%s10 + $0x4] sm:$0xf]
      %v1515 = vld [vmem:[%s10 + $0x8] sm:$0xf]
      %v1516 = vld [vmem:[%s10 + $0xc] sm:$0xf]
      %v1517 = vld [vmem:[%s11] sm:$0x1]
      %v1519 = vlaneseq
      %v1520 = vshrl.u32 %v1519, 7
      %v1521 = vsub.s32 0, %v1520
      %v1522 = vrot.slane %v1517, %v1521
      %v1528 = vunpack.c.l.b16 %v1513
      %v1529 = vunpack.c.l.b16 %v1514
      %v1530 = vunpack.c.l.b16 %v1515
      %v1531 = vunpack.c.l.b16 %v1516
      %v1532 = vpack.c.b16 %v1529, %v1528
      %v1533 = vpack.c.b16 %v1531, %v1530
      %v1537 = vsel %vm723, %v1512, 0
      %1539 = vmatprep.subr.bf16.mxu0 0
      %1540 = vmatpush1.bf16.msra.mxu0 %v1532
      %1541 = vmatprep.subr.bf16.mxu0 0
      %1542 = vmatpush1.bf16.msra.mxu0 %v1533
      %1543 = vmatprep.subr.bf16.mxu0 0
      %1544 = vmatpush1.bf16.msra.mxu0 0
      %1545 = vmatprep.subr.bf16.mxu0 0
      %1546 = vmatpush1.bf16.msra.mxu0 0
      %1547 = vmatprep.subr.bf16.mxu0 0
      %1548 = vmatpush1.bf16.msra.mxu0 0
      %1549 = vmatprep.subr.bf16.mxu0 0
      %1550 = vmatpush1.bf16.msra.mxu0 0
      %1551 = vmatprep.subr.bf16.mxu0 0
      %1552 = vmatpush1.bf16.msra.mxu0 0
      %1553 = vmatprep.subr.bf16.mxu0 0
      %1554 = vmatpush1.bf16.msra.mxu0 0
      %1555 = vmatprep.subr.bf16.mxu0 0
      %1556 = vmatpush1.bf16.msra.mxu0 0
      %1557 = vmatprep.subr.bf16.mxu0 0
      %1558 = vmatpush1.bf16.msra.mxu0 0
      %1559 = vmatprep.subr.bf16.mxu0 0
      %1560 = vmatpush1.bf16.msra.mxu0 0
      %1561 = vmatprep.subr.bf16.mxu0 0
      %1562 = vmatpush1.bf16.msra.mxu0 0
      %1563 = vmatprep.subr.bf16.mxu0 0
      %1564 = vmatpush1.bf16.msra.mxu0 0
      %1565 = vmatprep.subr.bf16.mxu0 0
      %1566 = vmatpush1.bf16.msra.mxu0 0
      %1567 = vmatprep.subr.bf16.mxu0 0
      %1568 = vmatpush1.bf16.msra.mxu0 0
      %1569 = vmatprep.subr.bf16.mxu0 0
      %1570 = vmatpush1.bf16.msra.mxu0 0
      %1571 = vmatprep.mubr.bf16.mxu0 0
      %1572 = vmatmul.mubr.bf16.gmra.mrb[0].mxu0 %v1537
      %v1573 = vpop.f32.mrb[0].mxu0
      %v1574 = vadd.f32 %v1522, %v1573
      %v1575 = vpop.f32.mrb[0].mxu0
      %v1576 = vpop.f32.mrb[0].mxu0
      %v1577 = vpop.f32.mrb[0].mxu0
      %1578 = vdwg.mxu0
      %v1579 = vpack.c.bf16 %v1507, %v1507
      %v1580 = vpack.c.bf16 %v1574, %v1574
      %v1582 = vsel %vm771, %v1579, 0
      %v1585 = vsel %vm771, %v1580, 0
      %1587 = vmatprep.subr.bf16.mxu0 0
      %1588 = vmatpush1.bf16.xpose.msra.mxu0 %v1585
      %1589 = vmatprep.subr.bf16.mxu0 0
      %1590 = vmatpush1.bf16.xpose.msra.mxu0 0
      %1591 = vmatprep.subr.bf16.mxu0 0
      %1592 = vmatpush1.bf16.xpose.msra.mxu0 0
      %1593 = vmatprep.subr.bf16.mxu0 0
      %1594 = vmatpush1.bf16.xpose.msra.mxu0 0
      %1595 = vmatprep.subr.bf16.mxu0 0
      %1596 = vmatpush1.bf16.xpose.msra.mxu0 0
      %1597 = vmatprep.subr.bf16.mxu0 0
      %1598 = vmatpush1.bf16.xpose.msra.mxu0 0
      %1599 = vmatprep.subr.bf16.mxu0 0
      %1600 = vmatpush1.bf16.xpose.msra.mxu0 0
      %1601 = vmatprep.subr.bf16.mxu0 0
      %1602 = vmatpush1.bf16.xpose.msra.mxu0 0
      %1603 = vmatprep.subr.bf16.mxu0 0
      %1604 = vmatpush1.bf16.xpose.msra.mxu0 0
      %1605 = vmatprep.subr.bf16.mxu0 0
      %1606 = vmatpush1.bf16.xpose.msra.mxu0 0
      %1607 = vmatprep.subr.bf16.mxu0 0
      %1608 = vmatpush1.bf16.xpose.msra.mxu0 0
      %1609 = vmatprep.subr.bf16.mxu0 0
      %1610 = vmatpush1.bf16.xpose.msra.mxu0 0
      %1611 = vmatprep.subr.bf16.mxu0 0
      %1612 = vmatpush1.bf16.xpose.msra.mxu0 0
      %1613 = vmatprep.subr.bf16.mxu0 0
      %1614 = vmatpush1.bf16.xpose.msra.mxu0 0
      %1615 = vmatprep.subr.bf16.mxu0 0
      %1616 = vmatpush1.bf16.xpose.msra.mxu0 0
      %1617 = vmatprep.subr.bf16.mxu0 0
      %1618 = vmatpush1.bf16.xpose.msra.mxu0 0
      %1619 = vmatprep.mubr.bf16.mxu0 0
      %1620 = vmatmul.mubr.bf16.gmra.mrb[0].mxu0 %v1582
      %v1621 = vpop.f32.mrb[0].mxu0
      %v1622 = vadd.f32 0.0, %v1621
      %v1623 = vpop.f32.mrb[0].mxu0
      %v1624 = vpop.f32.mrb[0].mxu0
      %v1625 = vpop.f32.mrb[0].mxu0
      %1626 = vdwg.mxu0
      %v1627 = vsel %vm771, %v1622, -inf
      %1628 = vmax.xlane.f32.xlu0 %v1627
      %v1629 = vpop.xlane.xlu0 %1628
      %v1630 = vsub.f32 %v1622, %v1629
      %v1631 = vmul.f32 %v1630, 1.442695
      %v1632 = vpow.pop %v1631
      %v1633 = vsel %vm771, %v1632, 0.0
      %1634 = vadd.xlane.f32.xlu0 %v1633
      %v1635 = vpop.xlane.xlu0 %1634
      %v1636 = vrcp.pop %v1635
      %v1637 = vmul.f32 %v1632, %v1636
      %v1638 = vpack.c.bf16 %v1637, %v1637
      %1640 = vrot.lane.b32.xlu0 %v1580, 96
      %v1641 = vpop.permute.xlu0 %1640
      %v1643 = vsel %vm771, %v1638, 0
      %v1646 = vsel %vm835, %v1641, 0
      %1648 = vmatprep.subr.bf16.mxu0 0
      %1649 = vmatpush1.bf16.msra.mxu0 %v1646
      %1650 = vmatprep.subr.bf16.mxu0 0
      %1651 = vmatpush1.bf16.msra.mxu0 0
      %1652 = vmatprep.subr.bf16.mxu0 0
      %1653 = vmatpush1.bf16.msra.mxu0 0
      %1654 = vmatprep.subr.bf16.mxu0 0
      %1655 = vmatpush1.bf16.msra.mxu0 0
      %1656 = vmatprep.subr.bf16.mxu0 0
      %1657 = vmatpush1.bf16.msra.mxu0 0
      %1658 = vmatprep.subr.bf16.mxu0 0
      %1659 = vmatpush1.bf16.msra.mxu0 0
      %1660 = vmatprep.subr.bf16.mxu0 0
      %1661 = vmatpush1.bf16.msra.mxu0 0
      %1662 = vmatprep.subr.bf16.mxu0 0
      %1663 = vmatpush1.bf16.msra.mxu0 0
      %1664 = vmatprep.subr.bf16.mxu0 0
      %1665 = vmatpush1.bf16.msra.mxu0 0
      %1666 = vmatprep.subr.bf16.mxu0 0
      %1667 = vmatpush1.bf16.msra.mxu0 0
      %1668 = vmatprep.subr.bf16.mxu0 0
      %1669 = vmatpush1.bf16.msra.mxu0 0
      %1670 = vmatprep.subr.bf16.mxu0 0
      %1671 = vmatpush1.bf16.msra.mxu0 0
      %1672 = vmatprep.subr.bf16.mxu0 0
      %1673 = vmatpush1.bf16.msra.mxu0 0
      %1674 = vmatprep.subr.bf16.mxu0 0
      %1675 = vmatpush1.bf16.msra.mxu0 0
      %1676 = vmatprep.subr.bf16.mxu0 0
      %1677 = vmatpush1.bf16.msra.mxu0 0
      %1678 = vmatprep.subr.bf16.mxu0 0
      %1679 = vmatpush1.bf16.msra.mxu0 0
      %1680 = vmatprep.mubr.bf16.mxu0 0
      %1681 = vmatmul.mubr.bf16.gmra.mrb[0].mxu0 %v1643
      %v1682 = vpop.f32.mrb[0].mxu0
      %v1683 = vadd.f32 0.0, %v1682
      %v1684 = vpop.f32.mrb[0].mxu0
      %v1685 = vpop.f32.mrb[0].mxu0
      %v1686 = vpop.f32.mrb[0].mxu0
      %1687 = vdwg.mxu0
      %v1688 = vpack.c.bf16 %v1683, %v1683
      %v1689 = vld [vmem:[%s12] sm:$0xf]
      %1691 = vrot.lane.b32.xlu0 %v1579, 120
      %v1692 = vpop.permute.xlu0 %1691
      %1693 = vrot.lane.b32.xlu0 %v1580, 120
      %v1694 = vpop.permute.xlu0 %1693
      %v1696 = vsel %vm771, %v1692, 0
      %v1699 = vsel %vm771, %v1694, 0
      %1701 = vmatprep.subr.bf16.mxu0 0
      %1702 = vmatpush1.bf16.xpose.msra.mxu0 %v1699
      %1703 = vmatprep.subr.bf16.mxu0 0
      %1704 = vmatpush1.bf16.xpose.msra.mxu0 0
      %1705 = vmatprep.subr.bf16.mxu0 0
      %1706 = vmatpush1.bf16.xpose.msra.mxu0 0
      %1707 = vmatprep.subr.bf16.mxu0 0
      %1708 = vmatpush1.bf16.xpose.msra.mxu0 0
      %1709 = vmatprep.subr.bf16.mxu0 0
      %1710 = vmatpush1.bf16.xpose.msra.mxu0 0
      %1711 = vmatprep.subr.bf16.mxu0 0
      %1712 = vmatpush1.bf16.xpose.msra.mxu0 0
      %1713 = vmatprep.subr.bf16.mxu0 0
      %1714 = vmatpush1.bf16.xpose.msra.mxu0 0
      %1715 = vmatprep.subr.bf16.mxu0 0
      %1716 = vmatpush1.bf16.xpose.msra.mxu0 0
      %1717 = vmatprep.subr.bf16.mxu0 0
      %1718 = vmatpush1.bf16.xpose.msra.mxu0 0
      %1719 = vmatprep.subr.bf16.mxu0 0
      %1720 = vmatpush1.bf16.xpose.msra.mxu0 0
      %1721 = vmatprep.subr.bf16.mxu0 0
      %1722 = vmatpush1.bf16.xpose.msra.mxu0 0
      %1723 = vmatprep.subr.bf16.mxu0 0
      %1724 = vmatpush1.bf16.xpose.msra.mxu0 0
      %1725 = vmatprep.subr.bf16.mxu0 0
      %1726 = vmatpush1.bf16.xpose.msra.mxu0 0
      %1727 = vmatprep.subr.bf16.mxu0 0
      %1728 = vmatpush1.bf16.xpose.msra.mxu0 0
      %1729 = vmatprep.subr.bf16.mxu0 0
      %1730 = vmatpush1.bf16.xpose.msra.mxu0 0
      %1731 = vmatprep.subr.bf16.mxu0 0
      %1732 = vmatpush1.bf16.xpose.msra.mxu0 0
      %1733 = vmatprep.mubr.bf16.mxu0 0
      %1734 = vmatmul.mubr.bf16.gmra.mrb[0].mxu0 %v1696
      %v1735 = vpop.f32.mrb[0].mxu0
      %v1736 = vadd.f32 0.0, %v1735
      %v1737 = vpop.f32.mrb[0].mxu0
      %v1738 = vpop.f32.mrb[0].mxu0
      %v1739 = vpop.f32.mrb[0].mxu0
      %1740 = vdwg.mxu0
      %v1741 = vsel %vm771, %v1736, -inf
      %1742 = vmax.xlane.f32.xlu0 %v1741
      %v1743 = vpop.xlane.xlu0 %1742
      %v1744 = vsub.f32 %v1736, %v1743
      %v1745 = vmul.f32 %v1744, 1.442695
      %v1746 = vpow.pop %v1745
      %v1747 = vsel %vm771, %v1746, 0.0
      %1748 = vadd.xlane.f32.xlu0 %v1747
      %v1749 = vpop.xlane.xlu0 %1748
      %v1750 = vrcp.pop %v1749
      %v1751 = vmul.f32 %v1746, %v1750
      %v1752 = vpack.c.bf16 %v1751, %v1751
      %1753 = vrot.lane.b32.xlu0 %v1580, 88
      %v1754 = vpop.permute.xlu0 %1753
      %v1756 = vsel %vm771, %v1752, 0
      %v1759 = vsel %vm835, %v1754, 0
      %1761 = vmatprep.subr.bf16.mxu0 0
      %1762 = vmatpush1.bf16.msra.mxu0 %v1759
      %1763 = vmatprep.subr.bf16.mxu0 0
      %1764 = vmatpush1.bf16.msra.mxu0 0
      %1765 = vmatprep.subr.bf16.mxu0 0
      %1766 = vmatpush1.bf16.msra.mxu0 0
      %1767 = vmatprep.subr.bf16.mxu0 0
      %1768 = vmatpush1.bf16.msra.mxu0 0
      %1769 = vmatprep.subr.bf16.mxu0 0
      %1770 = vmatpush1.bf16.msra.mxu0 0
      %1771 = vmatprep.subr.bf16.mxu0 0
      %1772 = vmatpush1.bf16.msra.mxu0 0
      %1773 = vmatprep.subr.bf16.mxu0 0
      %1774 = vmatpush1.bf16.msra.mxu0 0
      %1775 = vmatprep.subr.bf16.mxu0 0
      %1776 = vmatpush1.bf16.msra.mxu0 0
      %1777 = vmatprep.subr.bf16.mxu0 0
      %1778 = vmatpush1.bf16.msra.mxu0 0
      %1779 = vmatprep.subr.bf16.mxu0 0
      %1780 = vmatpush1.bf16.msra.mxu0 0
      %1781 = vmatprep.subr.bf16.mxu0 0
      %1782 = vmatpush1.bf16.msra.mxu0 0
      %1783 = vmatprep.subr.bf16.mxu0 0
      %1784 = vmatpush1.bf16.msra.mxu0 0
      %1785 = vmatprep.subr.bf16.mxu0 0
      %1786 = vmatpush1.bf16.msra.mxu0 0
      %1787 = vmatprep.subr.bf16.mxu0 0
      %1788 = vmatpush1.bf16.msra.mxu0 0
      %1789 = vmatprep.subr.bf16.mxu0 0
      %1790 = vmatpush1.bf16.msra.mxu0 0
      %1791 = vmatprep.subr.bf16.mxu0 0
      %1792 = vmatpush1.bf16.msra.mxu0 0
      %1793 = vmatprep.mubr.bf16.mxu0 0
      %1794 = vmatmul.mubr.bf16.gmra.mrb[0].mxu0 %v1756
      %v1795 = vpop.f32.mrb[0].mxu0
      %v1796 = vadd.f32 0.0, %v1795
      %v1797 = vpop.f32.mrb[0].mxu0
      %v1798 = vpop.f32.mrb[0].mxu0
      %v1799 = vpop.f32.mrb[0].mxu0
      %1800 = vdwg.mxu0
      %v1801 = vpack.c.bf16 %v1796, %v1796
      %s1802 = scalar_lea.vmem %s12, 4
      %v1803 = vld [vmem:[%s1802] sm:$0xf]
      %v1805 = vsel %vm771, %v1801, 0
      %v1808 = vsel %vm835, %v1803, 0
      %1810 = vmatprep.subr.bf16.mxu0 0
      %1811 = vmatpush1.bf16.msra.mxu0 %v1808
      %1812 = vmatprep.subr.bf16.mxu0 0
      %1813 = vmatpush1.bf16.msra.mxu0 0
      %1814 = vmatprep.subr.bf16.mxu0 0
      %1815 = vmatpush1.bf16.msra.mxu0 0
      %1816 = vmatprep.subr.bf16.mxu0 0
      %1817 = vmatpush1.bf16.msra.mxu0 0
      %1818 = vmatprep.subr.bf16.mxu0 0
      %1819 = vmatpush1.bf16.msra.mxu0 0
      %1820 = vmatprep.subr.bf16.mxu0 0
      %1821 = vmatpush1.bf16.msra.mxu0 0
      %1822 = vmatprep.subr.bf16.mxu0 0
      %1823 = vmatpush1.bf16.msra.mxu0 0
      %1824 = vmatprep.subr.bf16.mxu0 0
      %1825 = vmatpush1.bf16.msra.mxu0 0
      %1826 = vmatprep.subr.bf16.mxu0 0
      %1827 = vmatpush1.bf16.msra.mxu0 0
      %1828 = vmatprep.subr.bf16.mxu0 0
      %1829 = vmatpush1.bf16.msra.mxu0 0
      %1830 = vmatprep.subr.bf16.mxu0 0
      %1831 = vmatpush1.bf16.msra.mxu0 0
      %1832 = vmatprep.subr.bf16.mxu0 0
      %1833 = vmatpush1.bf16.msra.mxu0 0
      %1834 = vmatprep.subr.bf16.mxu0 0
      %1835 = vmatpush1.bf16.msra.mxu0 0
      %1836 = vmatprep.subr.bf16.mxu0 0
      %1837 = vmatpush1.bf16.msra.mxu0 0
      %1838 = vmatprep.subr.bf16.mxu0 0
      %1839 = vmatpush1.bf16.msra.mxu0 0
      %1840 = vmatprep.subr.bf16.mxu0 0
      %1841 = vmatpush1.bf16.msra.mxu0 0
      %1842 = vmatprep.mubr.bf16.mxu0 0
      %1843 = vmatmul.mubr.bf16.gmra.mrb[0].mxu0 %v1805
      %v1844 = vpop.f32.mrb[0].mxu0
      %v1845 = vadd.f32 0.0, %v1844
      %v1846 = vpop.f32.mrb[0].mxu0
      %v1847 = vpop.f32.mrb[0].mxu0
      %v1848 = vpop.f32.mrb[0].mxu0
      %1849 = vdwg.mxu0
      %v1851 = vsel %vm771, %v1688, 0
      %v1854 = vsel %vm835, %v1689, 0
      %1856 = vmatprep.subr.bf16.mxu0 0
      %1857 = vmatpush1.bf16.msra.mxu0 %v1854
      %1858 = vmatprep.subr.bf16.mxu0 0
      %1859 = vmatpush1.bf16.msra.mxu0 0
      %1860 = vmatprep.subr.bf16.mxu0 0
      %1861 = vmatpush1.bf16.msra.mxu0 0
      %1862 = vmatprep.subr.bf16.mxu0 0
      %1863 = vmatpush1.bf16.msra.mxu0 0
      %1864 = vmatprep.subr.bf16.mxu0 0
      %1865 = vmatpush1.bf16.msra.mxu0 0
      %1866 = vmatprep.subr.bf16.mxu0 0
      %1867 = vmatpush1.bf16.msra.mxu0 0
      %1868 = vmatprep.subr.bf16.mxu0 0
      %1869 = vmatpush1.bf16.msra.mxu0 0
      %1870 = vmatprep.subr.bf16.mxu0 0
      %1871 = vmatpush1.bf16.msra.mxu0 0
      %1872 = vmatprep.subr.bf16.mxu0 0
      %1873 = vmatpush1.bf16.msra.mxu0 0
      %1874 = vmatprep.subr.bf16.mxu0 0
      %1875 = vmatpush1.bf16.msra.mxu0 0
      %1876 = vmatprep.subr.bf16.mxu0 0
      %1877 = vmatpush1.bf16.msra.mxu0 0
      %1878 = vmatprep.subr.bf16.mxu0 0
      %1879 = vmatpush1.bf16.msra.mxu0 0
      %1880 = vmatprep.subr.bf16.mxu0 0
      %1881 = vmatpush1.bf16.msra.mxu0 0
      %1882 = vmatprep.subr.bf16.mxu0 0
      %1883 = vmatpush1.bf16.msra.mxu0 0
      %1884 = vmatprep.subr.bf16.mxu0 0
      %1885 = vmatpush1.bf16.msra.mxu0 0
      %1886 = vmatprep.subr.bf16.mxu0 0
      %1887 = vmatpush1.bf16.msra.mxu0 0
      %1888 = vmatprep.mubr.bf16.mxu0 0
      %1889 = vmatmul.mubr.bf16.gmra.mrb[0].mxu0 %v1851
      %v1890 = vpop.f32.mrb[0].mxu0
      %v1891 = vadd.f32 %v1845, %v1890
      %v1892 = vpop.f32.mrb[0].mxu0
      %v1893 = vpop.f32.mrb[0].mxu0
      %v1894 = vpop.f32.mrb[0].mxu0
      %1895 = vdwg.mxu0
      %1896 = vrot.lane.b32.xlu0 %v1579, 112
      %v1897 = vpop.permute.xlu0 %1896
      %1898 = vrot.lane.b32.xlu0 %v1580, 112
      %v1899 = vpop.permute.xlu0 %1898
      %v1901 = vsel %vm771, %v1897, 0
      %v1904 = vsel %vm771, %v1899, 0
      %1906 = vmatprep.subr.bf16.mxu0 0
      %1907 = vmatpush1.bf16.xpose.msra.mxu0 %v1904
      %1908 = vmatprep.subr.bf16.mxu0 0
      %1909 = vmatpush1.bf16.xpose.msra.mxu0 0
      %1910 = vmatprep.subr.bf16.mxu0 0
      %1911 = vmatpush1.bf16.xpose.msra.mxu0 0
      %1912 = vmatprep.subr.bf16.mxu0 0
      %1913 = vmatpush1.bf16.xpose.msra.mxu0 0
      %1914 = vmatprep.subr.bf16.mxu0 0
      %1915 = vmatpush1.bf16.xpose.msra.mxu0 0
      %1916 = vmatprep.subr.bf16.mxu0 0
      %1917 = vmatpush1.bf16.xpose.msra.mxu0 0
      %1918 = vmatprep.subr.bf16.mxu0 0
      %1919 = vmatpush1.bf16.xpose.msra.mxu0 0
      %1920 = vmatprep.subr.bf16.mxu0 0
      %1921 = vmatpush1.bf16.xpose.msra.mxu0 0
      %1922 = vmatprep.subr.bf16.mxu0 0
      %1923 = vmatpush1.bf16.xpose.msra.mxu0 0
      %1924 = vmatprep.subr.bf16.mxu0 0
      %1925 = vmatpush1.bf16.xpose.msra.mxu0 0
      %1926 = vmatprep.subr.bf16.mxu0 0
      %1927 = vmatpush1.bf16.xpose.msra.mxu0 0
      %1928 = vmatprep.subr.bf16.mxu0 0
      %1929 = vmatpush1.bf16.xpose.msra.mxu0 0
      %1930 = vmatprep.subr.bf16.mxu0 0
      %1931 = vmatpush1.bf16.xpose.msra.mxu0 0
      %1932 = vmatprep.subr.bf16.mxu0 0
      %1933 = vmatpush1.bf16.xpose.msra.mxu0 0
      %1934 = vmatprep.subr.bf16.mxu0 0
      %1935 = vmatpush1.bf16.xpose.msra.mxu0 0
      %1936 = vmatprep.subr.bf16.mxu0 0
      %1937 = vmatpush1.bf16.xpose.msra.mxu0 0
      %1938 = vmatprep.mubr.bf16.mxu0 0
      %1939 = vmatmul.mubr.bf16.gmra.mrb[0].mxu0 %v1901
      %v1940 = vpop.f32.mrb[0].mxu0
      %v1941 = vadd.f32 0.0, %v1940
      %v1942 = vpop.f32.mrb[0].mxu0
      %v1943 = vpop.f32.mrb[0].mxu0
      %v1944 = vpop.f32.mrb[0].mxu0
      %1945 = vdwg.mxu0
      %v1946 = vsel %vm771, %v1941, -inf
      %1947 = vmax.xlane.f32.xlu0 %v1946
      %v1948 = vpop.xlane.xlu0 %1947
      %v1949 = vsub.f32 %v1941, %v1948
      %v1950 = vmul.f32 %v1949, 1.442695
      %v1951 = vpow.pop %v1950
      %v1952 = vsel %vm771, %v1951, 0.0
      %1953 = vadd.xlane.f32.xlu0 %v1952
      %v1954 = vpop.xlane.xlu0 %1953
      %v1955 = vrcp.pop %v1954
      %v1956 = vmul.f32 %v1951, %v1955
      %v1957 = vpack.c.bf16 %v1956, %v1956
      %1958 = vrot.lane.b32.xlu0 %v1580, 80
      %v1959 = vpop.permute.xlu0 %1958
      %v1961 = vsel %vm771, %v1957, 0
      %v1964 = vsel %vm835, %v1959, 0
      %1966 = vmatprep.subr.bf16.mxu0 0
      %1967 = vmatpush1.bf16.msra.mxu0 %v1964
      %1968 = vmatprep.subr.bf16.mxu0 0
      %1969 = vmatpush1.bf16.msra.mxu0 0
      %1970 = vmatprep.subr.bf16.mxu0 0
      %1971 = vmatpush1.bf16.msra.mxu0 0
      %1972 = vmatprep.subr.bf16.mxu0 0
      %1973 = vmatpush1.bf16.msra.mxu0 0
      %1974 = vmatprep.subr.bf16.mxu0 0
      %1975 = vmatpush1.bf16.msra.mxu0 0
      %1976 = vmatprep.subr.bf16.mxu0 0
      %1977 = vmatpush1.bf16.msra.mxu0 0
      %1978 = vmatprep.subr.bf16.mxu0 0
      %1979 = vmatpush1.bf16.msra.mxu0 0
      %1980 = vmatprep.subr.bf16.mxu0 0
      %1981 = vmatpush1.bf16.msra.mxu0 0
      %1982 = vmatprep.subr.bf16.mxu0 0
      %1983 = vmatpush1.bf16.msra.mxu0 0
      %1984 = vmatprep.subr.bf16.mxu0 0
      %1985 = vmatpush1.bf16.msra.mxu0 0
      %1986 = vmatprep.subr.bf16.mxu0 0
      %1987 = vmatpush1.bf16.msra.mxu0 0
      %1988 = vmatprep.subr.bf16.mxu0 0
      %1989 = vmatpush1.bf16.msra.mxu0 0
      %1990 = vmatprep.subr.bf16.mxu0 0
      %1991 = vmatpush1.bf16.msra.mxu0 0
      %1992 = vmatprep.subr.bf16.mxu0 0
      %1993 = vmatpush1.bf16.msra.mxu0 0
      %1994 = vmatprep.subr.bf16.mxu0 0
      %1995 = vmatpush1.bf16.msra.mxu0 0
      %1996 = vmatprep.subr.bf16.mxu0 0
      %1997 = vmatpush1.bf16.msra.mxu0 0
      %1998 = vmatprep.mubr.bf16.mxu0 0
      %1999 = vmatmul.mubr.bf16.gmra.mrb[0].mxu0 %v1961
      %v2000 = vpop.f32.mrb[0].mxu0
      %v2001 = vadd.f32 0.0, %v2000
      %v2002 = vpop.f32.mrb[0].mxu0
      %v2003 = vpop.f32.mrb[0].mxu0
      %v2004 = vpop.f32.mrb[0].mxu0
      %2005 = vdwg.mxu0
      %v2006 = vpack.c.bf16 %v2001, %v2001
      %s2007 = scalar_lea.vmem %s12, 8
      %v2008 = vld [vmem:[%s2007] sm:$0xf]
      %v2010 = vsel %vm771, %v2006, 0
      %v2013 = vsel %vm835, %v2008, 0
      %2015 = vmatprep.subr.bf16.mxu0 0
      %2016 = vmatpush1.bf16.msra.mxu0 %v2013
      %2017 = vmatprep.subr.bf16.mxu0 0
      %2018 = vmatpush1.bf16.msra.mxu0 0
      %2019 = vmatprep.subr.bf16.mxu0 0
      %2020 = vmatpush1.bf16.msra.mxu0 0
      %2021 = vmatprep.subr.bf16.mxu0 0
      %2022 = vmatpush1.bf16.msra.mxu0 0
      %2023 = vmatprep.subr.bf16.mxu0 0
      %2024 = vmatpush1.bf16.msra.mxu0 0
      %2025 = vmatprep.subr.bf16.mxu0 0
      %2026 = vmatpush1.bf16.msra.mxu0 0
      %2027 = vmatprep.subr.bf16.mxu0 0
      %2028 = vmatpush1.bf16.msra.mxu0 0
      %2029 = vmatprep.subr.bf16.mxu0 0
      %2030 = vmatpush1.bf16.msra.mxu0 0
      %2031 = vmatprep.subr.bf16.mxu0 0
      %2032 = vmatpush1.bf16.msra.mxu0 0
      %2033 = vmatprep.subr.bf16.mxu0 0
      %2034 = vmatpush1.bf16.msra.mxu0 0
      %2035 = vmatprep.subr.bf16.mxu0 0
      %2036 = vmatpush1.bf16.msra.mxu0 0
      %2037 = vmatprep.subr.bf16.mxu0 0
      %2038 = vmatpush1.bf16.msra.mxu0 0
      %2039 = vmatprep.subr.bf16.mxu0 0
      %2040 = vmatpush1.bf16.msra.mxu0 0
      %2041 = vmatprep.subr.bf16.mxu0 0
      %2042 = vmatpush1.bf16.msra.mxu0 0
      %2043 = vmatprep.subr.bf16.mxu0 0
      %2044 = vmatpush1.bf16.msra.mxu0 0
      %2045 = vmatprep.subr.bf16.mxu0 0
      %2046 = vmatpush1.bf16.msra.mxu0 0
      %2047 = vmatprep.mubr.bf16.mxu0 0
      %2048 = vmatmul.mubr.bf16.gmra.mrb[0].mxu0 %v2010
      %v2049 = vpop.f32.mrb[0].mxu0
      %v2050 = vadd.f32 0.0, %v2049
      %v2051 = vpop.f32.mrb[0].mxu0
      %v2052 = vpop.f32.mrb[0].mxu0
      %v2053 = vpop.f32.mrb[0].mxu0
      %2054 = vdwg.mxu0
      %v2055 = vadd.f32 %v1891, %v2050
      %2056 = vrot.lane.b32.xlu0 %v1579, 104
      %v2057 = vpop.permute.xlu0 %2056
      %2058 = vrot.lane.b32.xlu0 %v1580, 104
      %v2059 = vpop.permute.xlu0 %2058
      %v2061 = vsel %vm771, %v2057, 0
      %v2064 = vsel %vm771, %v2059, 0
      %2066 = vmatprep.subr.bf16.mxu0 0
      %2067 = vmatpush1.bf16.xpose.msra.mxu0 %v2064
      %2068 = vmatprep.subr.bf16.mxu0 0
      %2069 = vmatpush1.bf16.xpose.msra.mxu0 0
      %2070 = vmatprep.subr.bf16.mxu0 0
      %2071 = vmatpush1.bf16.xpose.msra.mxu0 0
      %2072 = vmatprep.subr.bf16.mxu0 0
      %2073 = vmatpush1.bf16.xpose.msra.mxu0 0
      %2074 = vmatprep.subr.bf16.mxu0 0
      %2075 = vmatpush1.bf16.xpose.msra.mxu0 0
      %2076 = vmatprep.subr.bf16.mxu0 0
      %2077 = vmatpush1.bf16.xpose.msra.mxu0 0
      %2078 = vmatprep.subr.bf16.mxu0 0
      %2079 = vmatpush1.bf16.xpose.msra.mxu0 0
      %2080 = vmatprep.subr.bf16.mxu0 0
      %2081 = vmatpush1.bf16.xpose.msra.mxu0 0
      %2082 = vmatprep.subr.bf16.mxu0 0
      %2083 = vmatpush1.bf16.xpose.msra.mxu0 0
      %2084 = vmatprep.subr.bf16.mxu0 0
      %2085 = vmatpush1.bf16.xpose.msra.mxu0 0
      %2086 = vmatprep.subr.bf16.mxu0 0
      %2087 = vmatpush1.bf16.xpose.msra.mxu0 0
      %2088 = vmatprep.subr.bf16.mxu0 0
      %2089 = vmatpush1.bf16.xpose.msra.mxu0 0
      %2090 = vmatprep.subr.bf16.mxu0 0
      %2091 = vmatpush1.bf16.xpose.msra.mxu0 0
      %2092 = vmatprep.subr.bf16.mxu0 0
      %2093 = vmatpush1.bf16.xpose.msra.mxu0 0
      %2094 = vmatprep.subr.bf16.mxu0 0
      %2095 = vmatpush1.bf16.xpose.msra.mxu0 0
      %2096 = vmatprep.subr.bf16.mxu0 0
      %2097 = vmatpush1.bf16.xpose.msra.mxu0 0
      %2098 = vmatprep.mubr.bf16.mxu0 0
      %2099 = vmatmul.mubr.bf16.gmra.mrb[0].mxu0 %v2061
      %v2100 = vpop.f32.mrb[0].mxu0
      %v2101 = vadd.f32 0.0, %v2100
      %v2102 = vpop.f32.mrb[0].mxu0
      %v2103 = vpop.f32.mrb[0].mxu0
      %v2104 = vpop.f32.mrb[0].mxu0
      %2105 = vdwg.mxu0
      %v2106 = vsel %vm771, %v2101, -inf
      %2107 = vmax.xlane.f32.xlu0 %v2106
      %v2108 = vpop.xlane.xlu0 %2107
      %v2109 = vsub.f32 %v2101, %v2108
      %v2110 = vmul.f32 %v2109, 1.442695
      %v2111 = vpow.pop %v2110
      %v2112 = vsel %vm771, %v2111, 0.0
      %2113 = vadd.xlane.f32.xlu0 %v2112
      %v2114 = vpop.xlane.xlu0 %2113
      %v2115 = vrcp.pop %v2114
      %v2116 = vmul.f32 %v2111, %v2115
      %v2117 = vpack.c.bf16 %v2116, %v2116
      %2118 = vrot.lane.b32.xlu0 %v1580, 72
      %v2119 = vpop.permute.xlu0 %2118
      %v2121 = vsel %vm771, %v2117, 0
      %v2124 = vsel %vm835, %v2119, 0
      %2126 = vmatprep.subr.bf16.mxu0 0
      %2127 = vmatpush1.bf16.msra.mxu0 %v2124
      %2128 = vmatprep.subr.bf16.mxu0 0
      %2129 = vmatpush1.bf16.msra.mxu0 0
      %2130 = vmatprep.subr.bf16.mxu0 0
      %2131 = vmatpush1.bf16.msra.mxu0 0
      %2132 = vmatprep.subr.bf16.mxu0 0
      %2133 = vmatpush1.bf16.msra.mxu0 0
      %2134 = vmatprep.subr.bf16.mxu0 0
      %2135 = vmatpush1.bf16.msra.mxu0 0
      %2136 = vmatprep.subr.bf16.mxu0 0
      %2137 = vmatpush1.bf16.msra.mxu0 0
      %2138 = vmatprep.subr.bf16.mxu0 0
      %2139 = vmatpush1.bf16.msra.mxu0 0
      %2140 = vmatprep.subr.bf16.mxu0 0
      %2141 = vmatpush1.bf16.msra.mxu0 0
      %2142 = vmatprep.subr.bf16.mxu0 0
      %2143 = vmatpush1.bf16.msra.mxu0 0
      %2144 = vmatprep.subr.bf16.mxu0 0
      %2145 = vmatpush1.bf16.msra.mxu0 0
      %2146 = vmatprep.subr.bf16.mxu0 0
      %2147 = vmatpush1.bf16.msra.mxu0 0
      %2148 = vmatprep.subr.bf16.mxu0 0
      %2149 = vmatpush1.bf16.msra.mxu0 0
      %2150 = vmatprep.subr.bf16.mxu0 0
      %2151 = vmatpush1.bf16.msra.mxu0 0
      %2152 = vmatprep.subr.bf16.mxu0 0
      %2153 = vmatpush1.bf16.msra.mxu0 0
      %2154 = vmatprep.subr.bf16.mxu0 0
      %2155 = vmatpush1.bf16.msra.mxu0 0
      %2156 = vmatprep.subr.bf16.mxu0 0
      %2157 = vmatpush1.bf16.msra.mxu0 0
      %2158 = vmatprep.mubr.bf16.mxu0 0
      %2159 = vmatmul.mubr.bf16.gmra.mrb[0].mxu0 %v2121
      %v2160 = vpop.f32.mrb[0].mxu0
      %v2161 = vadd.f32 0.0, %v2160
      %v2162 = vpop.f32.mrb[0].mxu0
      %v2163 = vpop.f32.mrb[0].mxu0
      %v2164 = vpop.f32.mrb[0].mxu0
      %2165 = vdwg.mxu0
      %v2166 = vpack.c.bf16 %v2161, %v2161
      %s2167 = scalar_lea.vmem %s12, 12
      %v2168 = vld [vmem:[%s2167] sm:$0xf]
      %v2170 = vsel %vm771, %v2166, 0
      %v2173 = vsel %vm835, %v2168, 0
      %2175 = vmatprep.subr.bf16.mxu0 0
      %2176 = vmatpush1.bf16.msra.mxu0 %v2173
      %2177 = vmatprep.subr.bf16.mxu0 0
      %2178 = vmatpush1.bf16.msra.mxu0 0
      %2179 = vmatprep.subr.bf16.mxu0 0
      %2180 = vmatpush1.bf16.msra.mxu0 0
      %2181 = vmatprep.subr.bf16.mxu0 0
      %2182 = vmatpush1.bf16.msra.mxu0 0
      %2183 = vmatprep.subr.bf16.mxu0 0
      %2184 = vmatpush1.bf16.msra.mxu0 0
      %2185 = vmatprep.subr.bf16.mxu0 0
      %2186 = vmatpush1.bf16.msra.mxu0 0
      %2187 = vmatprep.subr.bf16.mxu0 0
      %2188 = vmatpush1.bf16.msra.mxu0 0
      %2189 = vmatprep.subr.bf16.mxu0 0
      %2190 = vmatpush1.bf16.msra.mxu0 0
      %2191 = vmatprep.subr.bf16.mxu0 0
      %2192 = vmatpush1.bf16.msra.mxu0 0
      %2193 = vmatprep.subr.bf16.mxu0 0
      %2194 = vmatpush1.bf16.msra.mxu0 0
      %2195 = vmatprep.subr.bf16.mxu0 0
      %2196 = vmatpush1.bf16.msra.mxu0 0
      %2197 = vmatprep.subr.bf16.mxu0 0
      %2198 = vmatpush1.bf16.msra.mxu0 0
      %2199 = vmatprep.subr.bf16.mxu0 0
      %2200 = vmatpush1.bf16.msra.mxu0 0
      %2201 = vmatprep.subr.bf16.mxu0 0
      %2202 = vmatpush1.bf16.msra.mxu0 0
      %2203 = vmatprep.subr.bf16.mxu0 0
      %2204 = vmatpush1.bf16.msra.mxu0 0
      %2205 = vmatprep.subr.bf16.mxu0 0
      %2206 = vmatpush1.bf16.msra.mxu0 0
      %2207 = vmatprep.mubr.bf16.mxu0 0
      %2208 = vmatmul.mubr.bf16.gmra.mrb[0].mxu0 %v2170
      %v2209 = vpop.f32.mrb[0].mxu0
      %v2210 = vadd.f32 0.0, %v2209
      %v2211 = vpop.f32.mrb[0].mxu0
      %v2212 = vpop.f32.mrb[0].mxu0
      %v2213 = vpop.f32.mrb[0].mxu0
      %2214 = vdwg.mxu0
      %v2215 = vadd.f32 %v2055, %v2210
      %v2216 = vld [vmem:[%s13] sm:$0x1]
      %v2218 = vlaneseq
      %v2219 = vshrl.u32 %v2218, 7
      %v2220 = vsub.s32 0, %v2219
      %v2221 = vrot.slane %v2216, %v2220
      %v2223 = vadd.f32 %v2215, %v2221
      %v2224 = vadd.f32 %v1444, %v2223
      %v2225 = vld [vmem:[%s14] sm:$0x1]
      %v2226 = vld [vmem:[%s15] sm:$0x1]
      %v2227 = vsel %vm723, %v2224, 0.0
      %2228 = vadd.xlane.f32.xlu0 %v2227
      %v2229 = vpop.xlane.xlu0 %2228
      %v2230 = vmul.f32 %v2229, %v1420
      %v2231 = vsub.f32 %v2224, %v2230
      %v2232 = vmul.f32 %v2231, %v2231
      %v2233 = vsel %vm723, %v2232, 0.0
      %2234 = vadd.xlane.f32.xlu0 %v2233
      %v2235 = vpop.xlane.xlu0 %2234
      %v2236 = vmul.f32 %v2235, %v1420
      %v2237 = vadd.f32 %v2236, 1e-05
      %v2238 = vrsqrt.pop %v2237
      %v2239 = vmul.f32 %v2231, %v2238
      %v2241 = vlaneseq
      %v2242 = vshrl.u32 %v2241, 7
      %v2243 = vsub.s32 0, %v2242
      %v2244 = vrot.slane %v2225, %v2243
      %v2246 = vmul.f32 %v2239, %v2244
      %v2248 = vlaneseq
      %v2249 = vshrl.u32 %v2248, 7
      %v2250 = vsub.s32 0, %v2249
      %v2251 = vrot.slane %v2226, %v2250
      %v2253 = vadd.f32 %v2246, %v2251
      %v2254 = vpack.c.bf16 %v2253, %v2253
      %v2255 = vld [vmem:[%s16] sm:$0xf]
      %v2256 = vld [vmem:[%s16 + $0x4] sm:$0xf]
      %v2257 = vld [vmem:[%s16 + $0x8] sm:$0xf]
      %v2258 = vld [vmem:[%s16 + $0xc] sm:$0xf]
      %v2259 = vld [vmem:[%s17] sm:$0x1]
      %v2261 = vlaneseq
      %v2262 = vshrl.u32 %v2261, 7
      %v2263 = vsub.s32 0, %v2262
      %v2264 = vrot.slane %v2259, %v2263
      %v2270 = vunpack.c.l.b16 %v2255
      %v2271 = vunpack.c.l.b16 %v2256
      %v2272 = vunpack.c.l.b16 %v2257
      %v2273 = vunpack.c.l.b16 %v2258
      %v2274 = vpack.c.b16 %v2271, %v2270
      %v2275 = vpack.c.b16 %v2273, %v2272
      %v2279 = vsel %vm723, %v2254, 0
      %2281 = vmatprep.subr.bf16.mxu0 0
      %2282 = vmatpush1.bf16.msra.mxu0 %v2274
      %2283 = vmatprep.subr.bf16.mxu0 0
      %2284 = vmatpush1.bf16.msra.mxu0 %v2275
      %2285 = vmatprep.subr.bf16.mxu0 0
      %2286 = vmatpush1.bf16.msra.mxu0 0
      %2287 = vmatprep.subr.bf16.mxu0 0
      %2288 = vmatpush1.bf16.msra.mxu0 0
      %2289 = vmatprep.subr.bf16.mxu0 0
      %2290 = vmatpush1.bf16.msra.mxu0 0
      %2291 = vmatprep.subr.bf16.mxu0 0
      %2292 = vmatpush1.bf16.msra.mxu0 0
      %2293 = vmatprep.subr.bf16.mxu0 0
      %2294 = vmatpush1.bf16.msra.mxu0 0
      %2295 = vmatprep.subr.bf16.mxu0 0
      %2296 = vmatpush1.bf16.msra.mxu0 0
      %2297 = vmatprep.subr.bf16.mxu0 0
      %2298 = vmatpush1.bf16.msra.mxu0 0
      %2299 = vmatprep.subr.bf16.mxu0 0
      %2300 = vmatpush1.bf16.msra.mxu0 0
      %2301 = vmatprep.subr.bf16.mxu0 0
      %2302 = vmatpush1.bf16.msra.mxu0 0
      %2303 = vmatprep.subr.bf16.mxu0 0
      %2304 = vmatpush1.bf16.msra.mxu0 0
      %2305 = vmatprep.subr.bf16.mxu0 0
      %2306 = vmatpush1.bf16.msra.mxu0 0
      %2307 = vmatprep.subr.bf16.mxu0 0
      %2308 = vmatpush1.bf16.msra.mxu0 0
      %2309 = vmatprep.subr.bf16.mxu0 0
      %2310 = vmatpush1.bf16.msra.mxu0 0
      %2311 = vmatprep.subr.bf16.mxu0 0
      %2312 = vmatpush1.bf16.msra.mxu0 0
      %2313 = vmatprep.mubr.bf16.mxu0 0
      %2314 = vmatmul.mubr.bf16.gmra.mrb[0].mxu0 %v2279
      %v2315 = vpop.f32.mrb[0].mxu0
      %v2316 = vadd.f32 %v2264, %v2315
      %v2317 = vpop.f32.mrb[0].mxu0
      %v2318 = vpop.f32.mrb[0].mxu0
      %v2319 = vpop.f32.mrb[0].mxu0
      %2320 = vdwg.mxu0
      %v2321 = vmax.f32 %v2316, 0.0
      %v2322 = vpack.c.bf16 %v2321, %v2321
      %v2323 = vld [vmem:[%s18] sm:$0xf]
      %v2324 = vld [vmem:[%s18 + $0x4] sm:$0xf]
      %v2325 = vld [vmem:[%s18 + $0x8] sm:$0xf]
      %v2326 = vld [vmem:[%s18 + $0xc] sm:$0xf]
      %v2327 = vld [vmem:[%s18 + $0x10] sm:$0xf]
      %v2328 = vld [vmem:[%s18 + $0x14] sm:$0xf]
      %v2329 = vld [vmem:[%s18 + $0x18] sm:$0xf]
      %v2330 = vld [vmem:[%s18 + $0x1c] sm:$0xf]
      %v2331 = vld [vmem:[%s19] sm:$0x1]
      %v2333 = vlaneseq
      %v2334 = vshrl.u32 %v2333, 7
      %v2335 = vsub.s32 0, %v2334
      %v2336 = vrot.slane %v2331, %v2335
      %v2346 = vunpack.c.l.b16 %v2323
      %v2347 = vunpack.c.l.b16 %v2324
      %v2348 = vunpack.c.l.b16 %v2325
      %v2349 = vunpack.c.l.b16 %v2326
      %v2350 = vunpack.c.l.b16 %v2327
      %v2351 = vunpack.c.l.b16 %v2328
      %v2352 = vunpack.c.l.b16 %v2329
      %v2353 = vunpack.c.l.b16 %v2330
      %v2354 = vpack.c.b16 %v2347, %v2346
      %v2355 = vpack.c.b16 %v2349, %v2348
      %v2356 = vpack.c.b16 %v2351, %v2350
      %v2357 = vpack.c.b16 %v2353, %v2352
      %vm2362 = vcmask 523264
      %v2364 = vsel %vm2362, %v2322, 0
      %2366 = vmatprep.subr.bf16.mxu0 0
      %2367 = vmatpush1.bf16.msra.mxu0 %v2354
      %2368 = vmatprep.subr.bf16.mxu0 0
      %2369 = vmatpush1.bf16.msra.mxu0 %v2355
      %2370 = vmatprep.subr.bf16.mxu0 0
      %2371 = vmatpush1.bf16.msra.mxu0 %v2356
      %2372 = vmatprep.subr.bf16.mxu0 0
      %2373 = vmatpush1.bf16.msra.mxu0 %v2357
      %2374 = vmatprep.subr.bf16.mxu0 0
      %2375 = vmatpush1.bf16.msra.mxu0 0
      %2376 = vmatprep.subr.bf16.mxu0 0
      %2377 = vmatpush1.bf16.msra.mxu0 0
      %2378 = vmatprep.subr.bf16.mxu0 0
      %2379 = vmatpush1.bf16.msra.mxu0 0
      %2380 = vmatprep.subr.bf16.mxu0 0
      %2381 = vmatpush1.bf16.msra.mxu0 0
      %2382 = vmatprep.subr.bf16.mxu0 0
      %2383 = vmatpush1.bf16.msra.mxu0 0
      %2384 = vmatprep.subr.bf16.mxu0 0
      %2385 = vmatpush1.bf16.msra.mxu0 0
      %2386 = vmatprep.subr.bf16.mxu0 0
      %2387 = vmatpush1.bf16.msra.mxu0 0
      %2388 = vmatprep.subr.bf16.mxu0 0
      %2389 = vmatpush1.bf16.msra.mxu0 0
      %2390 = vmatprep.subr.bf16.mxu0 0
      %2391 = vmatpush1.bf16.msra.mxu0 0
      %2392 = vmatprep.subr.bf16.mxu0 0
      %2393 = vmatpush1.bf16.msra.mxu0 0
      %2394 = vmatprep.subr.bf16.mxu0 0
      %2395 = vmatpush1.bf16.msra.mxu0 0
      %2396 = vmatprep.subr.bf16.mxu0 0
      %2397 = vmatpush1.bf16.msra.mxu0 0
      %2398 = vmatprep.mubr.bf16.mxu0 0
      %2399 = vmatmul.mubr.bf16.gmra.mrb[0].mxu0 %v2364
      %v2400 = vpop.f32.mrb[0].mxu0
      %v2401 = vadd.f32 %v2336, %v2400
      %v2402 = vpop.f32.mrb[0].mxu0
      %v2403 = vpop.f32.mrb[0].mxu0
      %v2404 = vpop.f32.mrb[0].mxu0
      %2405 = vdwg.mxu0
      %v2406 = vadd.f32 %v2253, %v2401
      %v2407 = vld [vmem:[%s20] sm:$0x1]
      %v2408 = vld [vmem:[%s21] sm:$0x1]
      %v2409 = vsel %vm723, %v2406, 0.0
      %2410 = vadd.xlane.f32.xlu0 %v2409
      %v2411 = vpop.xlane.xlu0 %2410
      %v2412 = vmul.f32 %v2411, %v1420
      %v2413 = vsub.f32 %v2406, %v2412
      %v2414 = vmul.f32 %v2413, %v2413
      %v2415 = vsel %vm723, %v2414, 0.0
      %2416 = vadd.xlane.f32.xlu0 %v2415
      %v2417 = vpop.xlane.xlu0 %2416
      %v2418 = vmul.f32 %v2417, %v1420
      %v2419 = vadd.f32 %v2418, 1e-05
      %v2420 = vrsqrt.pop %v2419
      %v2421 = vmul.f32 %v2413, %v2420
      %v2423 = vlaneseq
      %v2424 = vshrl.u32 %v2423, 7
      %v2425 = vsub.s32 0, %v2424
      %v2426 = vrot.slane %v2407, %v2425
      %v2428 = vmul.f32 %v2421, %v2426
      %v2430 = vlaneseq
      %v2431 = vshrl.u32 %v2430, 7
      %v2432 = vsub.s32 0, %v2431
      %v2433 = vrot.slane %v2408, %v2432
      %v2435 = vadd.f32 %v2428, %v2433
      %2436 = vst.msk [vmem:[%s695] sm:$0xff] %vm723, %v2435
      %p2437 = scmp.lt.s32.totalorder %s33, 1
      %s2438 = scalar_select %p2437, %s33, 1
      %s2439 = smul.addr %s2438, 8
      %s2440 = scalar_lea.vmem %s22, %s2439
      // Predicated region
      $region109: #{encoder_layer_forward.1} parent=107 // pred_check
        %p2441 = pneg %p523
      $region110: #{encoder_layer_forward.1} parent=107 // pred_check_branch
        %2443 = sbr.rel (%p2441) target = $region112
      $region111: #{encoder_layer_forward.1} parent=107 // pred_region
        _
      $region112: #{encoder_layer_forward.1} parent=107 // pred_fallthru
        _
    $region108: #{encoder_layer_forward.1} parent=5 // pred_fallthru
      _
    %p2444 = scmp.le.s32.totalorder 2, %s28
    // Predicated region
    $region113: #{encoder_layer_forward.1} parent=5 // pred_check
      %p2445 = pneg %p2444
    $region114: #{encoder_layer_forward.1} parent=5 // pred_check_branch
      %2447 = sbr.rel (%p2445) target = $region116
    $region115: #{encoder_layer_forward.1} parent=5 // pred_region
      %s2448 = ssub.s32 %s28, 2
      // Predicated region
      $region117: #{encoder_layer_forward.1} parent=115 // pred_check
        %p2449 = pneg %p529
      $region118: #{encoder_layer_forward.1} parent=115 // pred_check_branch
        %2451 = sbr.rel (%p2449) target = $region120
      $region119: #{encoder_layer_forward.1} parent=115 // pred_region
        %p2452 = scmp.lt.s32.totalorder %s34, 1
        %s2453 = scalar_select %p2452, %s34, 1
        %s2454 = smul.addr %s2453, 8
        %s2455 = scalar_lea.vmem %s22, %s2454
      $region120: #{encoder_layer_forward.1} parent=115 // pred_fallthru
        _
    $region116: #{encoder_layer_forward.1} parent=5 // pred_fallthru
      _
  $region6: #{encoder_layer_forward.1} parent=0 // loop_footer
    %s32 = sadd.s32 1, %s28
  $region7: #{encoder_layer_forward.1} parent=0 // loop_footer_branch
    %27 = sbr.rel target = $region3
  $region8: #{encoder_layer_forward.1} parent=0 // loop_exit
    _

</llo_original>
